<compile_context>
chip_gen: v7x
topology: tpu7x:2x2x1
jax: 0.10.0
libtpu: 0.0.40
codegen_flags: <defaults>
</compile_context>

<pallas_src>
import functools

import jax
import jax.numpy as jnp
from jax import lax
from jax.experimental import pallas as pl
from jax.experimental.pallas import tpu as pltpu


_LANES = 128                 # TPU lane width: feature channels padded to this
_MXU_DTYPE = jnp.bfloat16    # matmul operand dtype (f32 accumulation)


# ----------------------------------------------------------------------------
# Helpers
# ----------------------------------------------------------------------------
def _round_up(a, b):
    return ((a + b - 1) // b) * b


def _pick_tile(rows_needed, target, batch):
    """Row tile (multiple of 16 so bf16/f32 blocks stay sublane aligned).

    Guarantees the (batch, row-tile) parallel grid has >= 2 steps so both v7x
    TensorCores get work even for batch-1 tracking inference; costs only one
    extra ~0.35us grid step on 1-core chips.
    """
    r16 = _round_up(rows_needed, 16)
    tile = r16 if r16 <= target else target
    if batch == 1 and tile >= rows_needed and r16 >= 32:
        tile = _round_up((rows_needed + 1) // 2, 16)
    return tile


def _bn_fold(gamma, beta, rmean, rvar, eps=1e-5):
    scale = gamma / jnp.sqrt(rvar + eps)
    bias = beta - rmean * scale
    return scale, bias


def _pad_rows(x, rows):
    return jnp.pad(x, ((0, 0), (0, rows - x.shape[1]), (0, 0)))


def _pad_last(x, n):
    return jnp.pad(x, [(0, 0)] * (x.ndim - 1) + [(0, n - x.shape[-1])])


def _mosaic_params(vmem_bytes_estimate):
    """Both grid axes parallel (megacore) + explicit VMEM budget.

    Budget: 2x (double buffering) the resident + per-tile bytes plus headroom
    for compiler scratch, clamped to the v7x per-core 64 MiB VMEM.
    """
    limit = int(min(max(2 * vmem_bytes_estimate + (8 << 20), 16 << 20), 64 << 20))
    return pltpu.CompilerParams(
        dimension_semantics=("parallel", "parallel"),
        vmem_limit_bytes=limit)


# ----------------------------------------------------------------------------
# Stage 1: Conv3x3 (VALID, no bias) + BN(eval) + ReLU, flat-row layout
# ----------------------------------------------------------------------------
def conv3x3_bn_relu_flat(x_nhwc, w_oihw, bn, out_rows, row_tile, cp,
                         pack_taps=None):
    """Returns (B, out_rows, cp) f32; row m <-> spatial (m // W, m % W).

    Feature channels [hidden:cp] are zero padding (lane-dense stores).  Rows
    with m // W >= H-2 or m % W >= W-2 hold wrap-around garbage that is never
    consumed by valid downstream positions and is stripped at the end.
    """
    B, H, W, Cin = x_nhwc.shape
    hidden = w_oihw.shape[0]
    if pack_taps is None:
        pack_taps = Cin <= 64            # small-Cin: pack the 9 taps along K

    scale, bias = _bn_fold(*bn)
    scale = _pad_last(scale.reshape(1, hidden), cp)
    bias = _pad_last(bias.reshape(1, hidden), cp)
    # (hidden, Cin, 3, 3) -> (tap = dy*3 + dx, Cin, hidden) -> pad hidden -> cp
    w_taps = _pad_last(jnp.transpose(w_oihw, (2, 3, 1, 0)).reshape(9, Cin, hidden), cp)

    in_rows = max(H * W, out_rows + 2 * W + 2)      # all tap slices stay in bounds
    x_flat = _pad_rows(x_nhwc.reshape(B, H * W, Cin), in_rows)
    grid = (B, out_rows // row_tile)

    if pack_taps:
        # Wrapper-side tap packing (layout plumbing; duplicates a tiny small-Cin
        # input 9x in HBM): the nine shifted row slices are concatenated along
        # channels so each tile is a single K=9*Cin MXU matmul instead of nine
        # K=Cin pushes at <4% array utilization.
        offs = [dy * W + dx for dy in range(3) for dx in range(3)]
        x_pack = jnp.concatenate(
            [x_flat[:, o:o + out_rows, :] for o in offs], axis=-1
        ).astype(_MXU_DTYPE)                                   # (B, out_rows, 9*Cin)
        w_mat = w_taps.reshape(9 * Cin, cp).astype(_MXU_DTYPE)
        kp = 9 * Cin

        def kernel(x_ref, w_ref, s_ref, b_ref, o_ref):
            acc = jnp.dot(x_ref[...], w_ref[...],
                          preferred_element_type=jnp.float32)
            o_ref[...] = jnp.maximum(acc * s_ref[...] + b_ref[...], 0.0)

        vmem = (w_mat.size * 2 + 2 * cp * 4
                + row_tile * kp * 2 + row_tile * cp * 4)
        return pl.pallas_call(
            kernel,
            out_shape=jax.ShapeDtypeStruct((B, out_rows, cp), jnp.float32),
            grid=grid,
            in_specs=[
                pl.BlockSpec((None, row_tile, kp), lambda b, t: (b, t, 0)),
                pl.BlockSpec((kp, cp), lambda b, t: (0, 0)),       # weights resident
                pl.BlockSpec((1, cp), lambda b, t: (0, 0)),
                pl.BlockSpec((1, cp), lambda b, t: (0, 0)),
            ],
            out_specs=pl.BlockSpec((None, row_tile, cp), lambda b, t: (b, t, 0)),
            compiler_params=_mosaic_params(vmem),
        )(x_pack, w_mat, scale, bias)

    # Production-size channels (pysot: Cin = hidden = 256): nine shifted
    # K=Cin matmuls over the per-batch resident flat slab -- contiguous row
    # slices inside the kernel, no materialized im2col, no extra HBM traffic.
    w_taps = w_taps.astype(_MXU_DTYPE)

    def kernel(x_ref, w_ref, s_ref, b_ref, o_ref):
        m0 = pl.program_id(1) * row_tile
        acc = jnp.zeros((row_tile, cp), jnp.float32)
        for dy in range(3):
            for dx in range(3):
                patch = x_ref[pl.ds(m0 + dy * W + dx, row_tile), :]
                acc = acc + jnp.dot(patch.astype(_MXU_DTYPE), w_ref[dy * 3 + dx],
                                    preferred_element_type=jnp.float32)
        o_ref[...] = jnp.maximum(acc * s_ref[...] + b_ref[...], 0.0)

    vmem = (in_rows * Cin * 4 + w_taps.size * 2 + 2 * cp * 4 + row_tile * cp * 4)
    return pl.pallas_call(
        kernel,
        out_shape=jax.ShapeDtypeStruct((B, out_rows, cp), jnp.float32),
        grid=grid,
        in_specs=[
            pl.BlockSpec((None, in_rows, Cin), lambda b, t: (b, 0, 0)),  # per-batch resident
            pl.BlockSpec((9, Cin, cp), lambda b, t: (0, 0, 0)),          # weights resident
            pl.BlockSpec((1, cp), lambda b, t: (0, 0)),
            pl.BlockSpec((1, cp), lambda b, t: (0, 0)),
        ],
        out_specs=pl.BlockSpec((None, row_tile, cp), lambda b, t: (b, t, 0)),
        compiler_params=_mosaic_params(vmem),
    )(x_flat, w_taps, scale, bias)


# ----------------------------------------------------------------------------
# Stage 2+3 fused: depthwise xcorr -> 1x1 conv + BN + ReLU -> 1x1 conv + bias
# ----------------------------------------------------------------------------
def xcorr_head_flat(x_f, z_f, w_search, w_kernel, hk, wk, out_rows, row_tile,
                    w1_oihw, bn, w2_oihw, b2):
    """x_f: (B, Mx, Cp) f32 flat search features (storage row length w_search).
       z_f: (B, Mz, Cp) f32 flat template features (row length w_kernel); the
            correlation window is (hk, wk).
       Returns (B, out_rows, cout_p) f32 flat rows (row length w_search).
       The xcorr intermediate never leaves VMEM/vregs."""
    B, Mx, Cp = x_f.shape
    Mz = z_f.shape[1]
    h_mid, h_in = w1_oihw.shape[0], w1_oihw.shape[1]
    cout = w2_oihw.shape[0]
    cout_p = _round_up(cout, _LANES)                 # lane-dense output store

    # 1x1 conv weights as lane-padded bf16 matmul operands.
    w1 = jnp.pad(w1_oihw.reshape(h_mid, h_in).T,
                 ((0, Cp - h_in), (0, Cp - h_mid))).astype(_MXU_DTYPE)
    w2 = jnp.pad(w2_oihw.reshape(cout, h_mid).T,
                 ((0, Cp - h_mid), (0, cout_p - cout))).astype(_MXU_DTYPE)
    b2p = _pad_last(b2.reshape(1, cout), cout_p)
    scale, bias = _bn_fold(*bn)
    scale = _pad_last(scale.reshape(1, h_mid), Cp)
    bias = _pad_last(bias.reshape(1, h_mid), Cp)

    def kernel(x_ref, z_ref, w1_ref, s_ref, b_ref, w2_ref, b2_ref, o_ref):
        m0 = pl.program_id(1) * row_tile
        # Depthwise xcorr: channels on lanes, f32 VPU multiply-accumulate.
        # (On v6e a pl.ds(..., stride=0) broadcast load of the tap row would
        #  keep the sublane broadcast on the vld slot.)
        acc = jnp.zeros((row_tile, Cp), jnp.float32)
        for dy in range(hk):
            for dx in range(wk):
                tap = z_ref[dy * w_kernel + dx, :]                      # (Cp,)
                acc = acc + x_ref[pl.ds(m0 + dy * w_search + dx, row_tile), :] * tap
        # Head, fused in-register: Conv1x1(no bias) -> BN -> ReLU -> Conv1x1+b.
        h = jnp.dot(acc.astype(_MXU_DTYPE), w1_ref[...],
                    preferred_element_type=jnp.float32)
        h = jnp.maximum(h * s_ref[...] + b_ref[...], 0.0)
        o_ref[...] = (jnp.dot(h.astype(_MXU_DTYPE), w2_ref[...],
                              preferred_element_type=jnp.float32) + b2_ref[...])

    vmem = ((Mx + Mz) * Cp * 4 + w1.size * 2 + w2.size * 2
            + (2 * Cp + cout_p) * 4 + row_tile * cout_p * 4)
    return pl.pallas_call(
        kernel,
        out_shape=jax.ShapeDtypeStruct((B, out_rows, cout_p), jnp.float32),
        grid=(B, out_rows // row_tile),
        in_specs=[
            pl.BlockSpec((None, Mx, Cp), lambda b, t: (b, 0, 0)),   # per-batch resident
            pl.BlockSpec((None, Mz, Cp), lambda b, t: (b, 0, 0)),
            pl.BlockSpec((Cp, Cp), lambda b, t: (0, 0)),
            pl.BlockSpec((1, Cp), lambda b, t: (0, 0)),
            pl.BlockSpec((1, Cp), lambda b, t: (0, 0)),
            pl.BlockSpec((Cp, cout_p), lambda b, t: (0, 0)),
            pl.BlockSpec((1, cout_p), lambda b, t: (0, 0)),
        ],
        out_specs=pl.BlockSpec((None, row_tile, cout_p), lambda b, t: (b, t, 0)),
        compiler_params=_mosaic_params(vmem),
    )(x_f, z_f, w1, scale, bias, w2, b2p)


# ----------------------------------------------------------------------------
# Full forward
# ----------------------------------------------------------------------------
def depthwise_xcorr_forward(params, kernel_nchw, search_nchw, row_tile=256,
                            pack_taps=None):
    B, Cin, Hz, Wz = kernel_nchw.shape
    _, _, Hx, Wx = search_nchw.shape
    hidden = params["wk"].shape[0]
    cout = params["wh2"].shape[0]
    Hzo, Wzo = Hz - 2, Wz - 2                  # conv_kernel valid output
    Hxo, Wxo = Hx - 2, Wx - 2                  # conv_search valid output
    Hc, Wc = Hxo - Hzo + 1, Wxo - Wzo + 1      # xcorr output spatial
    cp = _round_up(hidden, _LANES)             # lane-dense feature channels

    # NCHW -> channel-last once at the boundary.
    z = jnp.transpose(kernel_nchw, (0, 2, 3, 1))
    x = jnp.transpose(search_nchw, (0, 2, 3, 1))

    # Row bookkeeping for the flat layout (row length = storage width).
    mc = Hc * Wx                               # xcorr output rows
    tile_c = _pick_tile(mc, row_tile, B)
    mc_pad = _round_up(mc, tile_c)
    # conv_search rows must cover the valid region AND every row the xcorr
    # taps touch for mc_pad output rows.
    mx_need = max(Hxo * Wx, mc_pad + (Hzo - 1) * Wx + (Wzo - 1))
    tile_x = _pick_tile(mx_need, row_tile, B)
    mx_pad = _round_up(mx_need, tile_x)
    mz_need = Hzo * Wz
    tile_z = _pick_tile(mz_need, row_tile, B)
    mz_pad = _round_up(mz_need, tile_z)

    z_f = conv3x3_bn_relu_flat(z, params["wk"], params["bnk"], mz_pad, tile_z,
                               cp, pack_taps)
    x_f = conv3x3_bn_relu_flat(x, params["ws"], params["bns"], mx_pad, tile_x,
                               cp, pack_taps)

    out_flat = xcorr_head_flat(x_f, z_f, Wx, Wz, Hzo, Wzo, mc_pad, tile_c,
                               params["wh1"], params["bnh"],
                               params["wh2"], params["bh2"])
    # TODO(synk): a deeper fusion (conv_search + xcorr + head in one call with a
    # recomputed row halo) would remove one more HBM read of x_f; kept separate
    # since x_f is a returned output and the halo recompute grows with Hz.

    # Strip garbage rows/cols/channels and convert back to NCHW at the boundary.
    def unflatten(flat, rows, row_len, valid_cols, channels):
        t = flat[:, :rows * row_len, :channels].reshape(B, rows, row_len, channels)
        return jnp.transpose(t[:, :, :valid_cols, :], (0, 3, 1, 2))

    return {
        "xcorr": unflatten(out_flat, Hc, Wx, Wc, cout),
        "xf": unflatten(x_f, Hxo, Wx, Wxo, hidden),
        "zf": unflatten(z_f, Hzo, Wz, Wzo, hidden),
    }


# ----------------------------------------------------------------------------
# Pure-JAX references (for verification)
# ----------------------------------------------------------------------------
def _ref_conv_bn_relu(x, w, bn, use_bf16):
    if use_bf16:
        x, w, prec = x.astype(jnp.bfloat16), w.astype(jnp.bfloat16), None
    else:
        prec = lax.Precision.HIGHEST
    y = lax.conv_general_dilated(x, w, (1, 1), "VALID",
                                 dimension_numbers=("NCHW", "OIHW", "NCHW"),
                                 precision=prec,
                                 preferred_element_type=jnp.float32)
    scale, bias = _bn_fold(*bn)
    return jnp.maximum(y * scale[None, :, None, None] + bias[None, :, None, None], 0.0)


def _ref_xcorr_depthwise(x, kern):
    B, C, Hs, Ws = x.shape
    xr = x.reshape(1, B * C, Hs, Ws)
    kr = kern.reshape(B * C, 1, kern.shape[2], kern.shape[3])
    out = lax.conv_general_dilated(xr, kr, (1, 1), "VALID",
                                   dimension_numbers=("NCHW", "OIHW", "NCHW"),
                                   feature_group_count=B * C,
                                   precision=lax.Precision.HIGHEST)
    return out.reshape(B, C, out.shape[2], out.shape[3])


def _ref_forward(params, kernel, search, use_bf16=False):
    """use_bf16=True mirrors the kernel's bf16-operand / f32-accum matmuls."""
    k = _ref_conv_bn_relu(kernel, params["wk"], params["bnk"], use_bf16)
    s = _ref_conv_bn_relu(search, params["ws"], params["bns"], use_bf16)
    f = _ref_xcorr_depthwise(s, k)                       # f32, like the kernel
    scale, bias = _bn_fold(*params["bnh"])
    w1 = params["wh1"].reshape(params["wh1"].shape[0], -1)
    w2 = params["wh2"].reshape(params["wh2"].shape[0], -1)
    if use_bf16:
        cast, prec = (lambda a: a.astype(jnp.bfloat16)), None
    else:
        cast, prec = (lambda a: a), lax.Precision.HIGHEST
    h = jnp.einsum("bchw,oc->bohw", cast(f), cast(w1),
                   preferred_element_type=jnp.float32, precision=prec)
    h = jnp.maximum(h * scale[None, :, None, None] + bias[None, :, None, None], 0.0)
    o = jnp.einsum("bchw,oc->bohw", cast(h), cast(w2),
                   preferred_element_type=jnp.float32, precision=prec)
    return {"xcorr": o + params["bh2"][None, :, None, None], "xf": s, "zf": k}


# ----------------------------------------------------------------------------
# Main
# ----------------------------------------------------------------------------
if __name__ == "__main__":
    B, Cin, hidden, Cout = 2, 4, 16, 8
    Hz = Wz = 7      # template ("kernel") spatial
    Hx = Wx = 15     # search spatial

    root = jax.random.PRNGKey(0)
    keys = jax.random.split(root, 10)

    def bn_params(k, c):
        k1, k2, k3, k4 = jax.random.split(k, 4)
        gamma = 1.0 + 0.1 * jax.random.normal(k1, (c,), jnp.float32)
        beta = 0.1 * jax.random.normal(k2, (c,), jnp.float32)
        rmean = 0.05 * jax.random.normal(k3, (c,), jnp.float32)
        rvar = 1.0 + 0.1 * jnp.abs(jax.random.normal(k4, (c,), jnp.float32))
        return (gamma, beta, rmean, rvar)

    params = {
        "wk": 0.1 * jax.random.normal(keys[0], (hidden, Cin, 3, 3), jnp.float32),
        "bnk": bn_params(keys[1], hidden),
        "ws": 0.1 * jax.random.normal(keys[2], (hidden, Cin, 3, 3), jnp.float32),
        "bns": bn_params(keys[3], hidden),
        "wh1": 0.1 * jax.random.normal(keys[4], (hidden, hidden, 1, 1), jnp.float32),
        "bnh": bn_params(keys[5], hidden),
        "wh2": 0.1 * jax.random.normal(keys[6], (Cout, hidden, 1, 1), jnp.float32),
        "bh2": 0.1 * jax.random.normal(keys[7], (Cout,), jnp.float32),
    }

    kernel_in = jax.random.normal(keys[8], (B, Cin, Hz, Wz), jnp.float32)
    search_in = jax.random.normal(keys[9], (B, Cin, Hx, Wx), jnp.float32)

    fwd = jax.jit(functools.partial(depthwise_xcorr_forward, params))
    outputs = fwd(kernel_in, search_in)
    jax.block_until_ready(outputs)

    # References: bf16-matched (same matmul-operand precision as the kernels)
    # checked tightly, and pure-f32 semantics checked with a bf16-sized margin.
    ref16 = _ref_forward(params, kernel_in, search_in, use_bf16=True)
    ref32 = _ref_forward(params, kernel_in, search_in, use_bf16=False)

    # Each 3x3 VALID conv removes 2, so xcorr output is (Hx-2)-(Hz-2)+1 = 9.
    Hc, Wc = Hx - Hz + 1, Wx - Wz + 1
    assert outputs["xcorr"].shape == (B, Cout, Hc, Wc) == (2, 8, 9, 9)
    assert outputs["zf"].shape == (B, hidden, Hz - 2, Wz - 2)
    assert outputs["xf"].shape == (B, hidden, Hx - 2, Wx - 2)
    for name in ("zf", "xf", "xcorr"):
        assert jnp.allclose(outputs[name], ref16[name], atol=5e-3, rtol=5e-3), name
        assert jnp.allclose(outputs[name], ref32[name], atol=2e-2, rtol=2e-2), name

    # Also exercise the large-Cin (9-shifted-matmul) conv path once.
    out9 = jax.jit(functools.partial(depthwise_xcorr_forward, params,
                                     pack_taps=False))(kernel_in, search_in)
    jax.block_until_ready(out9)
    assert jnp.allclose(out9["xcorr"], ref16["xcorr"], atol=5e-3, rtol=5e-3)
    assert jnp.allclose(out9["xf"], ref16["xf"], atol=5e-3, rtol=5e-3)

    print("KERNEL_OK")
</pallas_src>

<mosaic_0001>
module attributes {stable_mosaic.version = 11 : i64} {
  func.func @kernel(%arg0: i32, %arg1: i32, %arg2: memref<1x208x36xbf16, #tpu.memory_space<vmem>>, %arg3: memref<36x128xbf16, #tpu.memory_space<vmem>>, %arg4: memref<1x128xf32, #tpu.memory_space<vmem>>, %arg5: memref<1x128xf32, #tpu.memory_space<vmem>>, %arg6: memref<1x208x128xf32, #tpu.memory_space<vmem>>) attributes {dimension_semantics = [#tpu.dimension_semantics<parallel>, #tpu.dimension_semantics<parallel>], iteration_bounds = array<i64: 2, 1>, scalar_prefetch = 0 : i64, scratch_operands = 0 : i64, tpu.core_type = #tpu.core_type<tc>, window_params = [{transform_indices = @transform_0, window_bounds = array<i64: 1, 208, 36>}, {pipeline_mode = #tpu.pipeline_mode<synchronous>, transform_indices = @transform_1, window_bounds = array<i64: 36, 128>}, {pipeline_mode = #tpu.pipeline_mode<synchronous>, transform_indices = @transform_2, window_bounds = array<i64: 1, 128>}, {pipeline_mode = #tpu.pipeline_mode<synchronous>, transform_indices = @transform_3, window_bounds = array<i64: 1, 128>}, {transform_indices = @transform_4, window_bounds = array<i64: 1, 208, 128>}]} {
    %c0 = arith.constant 0 : index
    %c0_0 = arith.constant 0 : index
    %c0_1 = arith.constant 0 : index
    %0 = vector.load %arg2[%c0, %c0_0, %c0_1] : memref<1x208x36xbf16, #tpu.memory_space<vmem>>, vector<1x208x36xbf16>
    %1 = vector.shape_cast %0 : vector<1x208x36xbf16> to vector<208x36xbf16>
    %c0_2 = arith.constant 0 : index
    %c0_3 = arith.constant 0 : index
    %2 = vector.load %arg3[%c0_2, %c0_3] : memref<36x128xbf16, #tpu.memory_space<vmem>>, vector<36x128xbf16>
    %cst = arith.constant dense<0.000000e+00> : vector<208x128xf32>
    %3 = tpu.matmul %1, %2, %cst {dimension_numbers = #tpu.dot_dimension_numbers<[1], [0], [0], [1], [0, 0, 1, 1], [], []>} : vector<208x36xbf16>, vector<36x128xbf16>, vector<208x128xf32> -> vector<208x128xf32>
    %c0_4 = arith.constant 0 : index
    %c0_5 = arith.constant 0 : index
    %4 = vector.load %arg4[%c0_4, %c0_5] : memref<1x128xf32, #tpu.memory_space<vmem>>, vector<1x128xf32>
    %5 = vector.broadcast %4 : vector<1x128xf32> to vector<208x128xf32>
    %6 = arith.mulf %3, %5 : vector<208x128xf32>
    %c0_6 = arith.constant 0 : index
    %c0_7 = arith.constant 0 : index
    %7 = vector.load %arg5[%c0_6, %c0_7] : memref<1x128xf32, #tpu.memory_space<vmem>>, vector<1x128xf32>
    %8 = vector.broadcast %7 : vector<1x128xf32> to vector<208x128xf32>
    %9 = arith.addf %6, %8 : vector<208x128xf32>
    %cst_8 = arith.constant 0.000000e+00 : f32
    %10 = vector.broadcast %cst_8 : f32 to vector<208x128xf32>
    %11 = arith.maximumf %9, %10 : vector<208x128xf32>
    %c0_9 = arith.constant 0 : index
    %c0_10 = arith.constant 0 : index
    %c0_11 = arith.constant 0 : index
    %12 = vector.load %arg6[%c0_9, %c0_10, %c0_11] : memref<1x208x128xf32, #tpu.memory_space<vmem>>, vector<1x208x128xf32>
    %13 = vector.shape_cast %12 : vector<1x208x128xf32> to vector<208x128xf32>
    %14 = vector.shape_cast %11 : vector<208x128xf32> to vector<1x208x128xf32>
    tpu.vector_store %arg6[%c0_9, %c0_10, %c0_11], %14 {strides = array<i32>} : memref<1x208x128xf32, #tpu.memory_space<vmem>>, vector<1x208x128xf32>,
    return
  }
  func.func @transform_0(%arg0: i32, %arg1: i32) -> (i32, i32, i32) {
    %c0_i32 = arith.constant 0 : i32
    %c0_i32_0 = arith.constant 0 : i32
    return %arg0, %arg1, %c0_i32 : i32, i32, i32
  }
  func.func @transform_1(%arg0: i32, %arg1: i32) -> (i32, i32) {
    %c0_i32 = arith.constant 0 : i32
    %c0_i32_0 = arith.constant 0 : i32
    %c0_i32_1 = arith.constant 0 : i32
    return %c0_i32, %c0_i32_0 : i32, i32
  }
  func.func @transform_2(%arg0: i32, %arg1: i32) -> (i32, i32) {
    %c0_i32 = arith.constant 0 : i32
    %c0_i32_0 = arith.constant 0 : i32
    %c0_i32_1 = arith.constant 0 : i32
    return %c0_i32, %c0_i32_0 : i32, i32
  }
  func.func @transform_3(%arg0: i32, %arg1: i32) -> (i32, i32) {
    %c0_i32 = arith.constant 0 : i32
    %c0_i32_0 = arith.constant 0 : i32
    %c0_i32_1 = arith.constant 0 : i32
    return %c0_i32, %c0_i32_0 : i32, i32
  }
  func.func @transform_4(%arg0: i32, %arg1: i32) -> (i32, i32, i32) {
    %c0_i32 = arith.constant 0 : i32
    %c0_i32_0 = arith.constant 0 : i32
    return %arg0, %arg1, %c0_i32 : i32, i32, i32
  }
}

module attributes {stable_mosaic.version = 11 : i64} {
  func.func @kernel(%arg0: i32, %arg1: i32, %arg2: memref<1x48x36xbf16, #tpu.memory_space<vmem>>, %arg3: memref<36x128xbf16, #tpu.memory_space<vmem>>, %arg4: memref<1x128xf32, #tpu.memory_space<vmem>>, %arg5: memref<1x128xf32, #tpu.memory_space<vmem>>, %arg6: memref<1x48x128xf32, #tpu.memory_space<vmem>>) attributes {dimension_semantics = [#tpu.dimension_semantics<parallel>, #tpu.dimension_semantics<parallel>], iteration_bounds = array<i64: 2, 1>, scalar_prefetch = 0 : i64, scratch_operands = 0 : i64, tpu.core_type = #tpu.core_type<tc>, window_params = [{transform_indices = @transform_0, window_bounds = array<i64: 1, 48, 36>}, {pipeline_mode = #tpu.pipeline_mode<synchronous>, transform_indices = @transform_1, window_bounds = array<i64: 36, 128>}, {pipeline_mode = #tpu.pipeline_mode<synchronous>, transform_indices = @transform_2, window_bounds = array<i64: 1, 128>}, {pipeline_mode = #tpu.pipeline_mode<synchronous>, transform_indices = @transform_3, window_bounds = array<i64: 1, 128>}, {transform_indices = @transform_4, window_bounds = array<i64: 1, 48, 128>}]} {
    %c0 = arith.constant 0 : index
    %c0_0 = arith.constant 0 : index
    %c0_1 = arith.constant 0 : index
    %0 = vector.load %arg2[%c0, %c0_0, %c0_1] : memref<1x48x36xbf16, #tpu.memory_space<vmem>>, vector<1x48x36xbf16>
    %1 = vector.shape_cast %0 : vector<1x48x36xbf16> to vector<48x36xbf16>
    %c0_2 = arith.constant 0 : index
    %c0_3 = arith.constant 0 : index
    %2 = vector.load %arg3[%c0_2, %c0_3] : memref<36x128xbf16, #tpu.memory_space<vmem>>, vector<36x128xbf16>
    %cst = arith.constant dense<0.000000e+00> : vector<48x128xf32>
    %3 = tpu.matmul %1, %2, %cst {dimension_numbers = #tpu.dot_dimension_numbers<[1], [0], [0], [1], [0, 0, 1, 1], [], []>} : vector<48x36xbf16>, vector<36x128xbf16>, vector<48x128xf32> -> vector<48x128xf32>
    %c0_4 = arith.constant 0 : index
    %c0_5 = arith.constant 0 : index
    %4 = vector.load %arg4[%c0_4, %c0_5] : memref<1x128xf32, #tpu.memory_space<vmem>>, vector<1x128xf32>
    %5 = vector.broadcast %4 : vector<1x128xf32> to vector<48x128xf32>
    %6 = arith.mulf %3, %5 : vector<48x128xf32>
    %c0_6 = arith.constant 0 : index
    %c0_7 = arith.constant 0 : index
    %7 = vector.load %arg5[%c0_6, %c0_7] : memref<1x128xf32, #tpu.memory_space<vmem>>, vector<1x128xf32>
    %8 = vector.broadcast %7 : vector<1x128xf32> to vector<48x128xf32>
    %9 = arith.addf %6, %8 : vector<48x128xf32>
    %cst_8 = arith.constant 0.000000e+00 : f32
    %10 = vector.broadcast %cst_8 : f32 to vector<48x128xf32>
    %11 = arith.maximumf %9, %10 : vector<48x128xf32>
    %c0_9 = arith.constant 0 : index
    %c0_10 = arith.constant 0 : index
    %c0_11 = arith.constant 0 : index
    %12 = vector.load %arg6[%c0_9, %c0_10, %c0_11] : memref<1x48x128xf32, #tpu.memory_space<vmem>>, vector<1x48x128xf32>
    %13 = vector.shape_cast %12 : vector<1x48x128xf32> to vector<48x128xf32>
    %14 = vector.shape_cast %11 : vector<48x128xf32> to vector<1x48x128xf32>
    tpu.vector_store %arg6[%c0_9, %c0_10, %c0_11], %14 {strides = array<i32>} : memref<1x48x128xf32, #tpu.memory_space<vmem>>, vector<1x48x128xf32>,
    return
  }
  func.func @transform_0(%arg0: i32, %arg1: i32) -> (i32, i32, i32) {
    %c0_i32 = arith.constant 0 : i32
    %c0_i32_0 = arith.constant 0 : i32
    return %arg0, %arg1, %c0_i32 : i32, i32, i32
  }
  func.func @transform_1(%arg0: i32, %arg1: i32) -> (i32, i32) {
    %c0_i32 = arith.constant 0 : i32
    %c0_i32_0 = arith.constant 0 : i32
    %c0_i32_1 = arith.constant 0 : i32
    return %c0_i32, %c0_i32_0 : i32, i32
  }
  func.func @transform_2(%arg0: i32, %arg1: i32) -> (i32, i32) {
    %c0_i32 = arith.constant 0 : i32
    %c0_i32_0 = arith.constant 0 : i32
    %c0_i32_1 = arith.constant 0 : i32
    return %c0_i32, %c0_i32_0 : i32, i32
  }
  func.func @transform_3(%arg0: i32, %arg1: i32) -> (i32, i32) {
    %c0_i32 = arith.constant 0 : i32
    %c0_i32_0 = arith.constant 0 : i32
    %c0_i32_1 = arith.constant 0 : i32
    return %c0_i32, %c0_i32_0 : i32, i32
  }
  func.func @transform_4(%arg0: i32, %arg1: i32) -> (i32, i32, i32) {
    %c0_i32 = arith.constant 0 : i32
    %c0_i32_0 = arith.constant 0 : i32
    return %arg0, %arg1, %c0_i32 : i32, i32, i32
  }
}

module attributes {stable_mosaic.version = 11 : i64} {
  func.func @kernel(%arg0: i32, %arg1: i32, %arg2: memref<1x208x128xf32, #tpu.memory_space<vmem>>, %arg3: memref<1x48x128xf32, #tpu.memory_space<vmem>>, %arg4: memref<128x128xbf16, #tpu.memory_space<vmem>>, %arg5: memref<1x128xf32, #tpu.memory_space<vmem>>, %arg6: memref<1x128xf32, #tpu.memory_space<vmem>>, %arg7: memref<128x128xbf16, #tpu.memory_space<vmem>>, %arg8: memref<1x128xf32, #tpu.memory_space<vmem>>, %arg9: memref<1x144x128xf32, #tpu.memory_space<vmem>>) attributes {dimension_semantics = [#tpu.dimension_semantics<parallel>, #tpu.dimension_semantics<parallel>], iteration_bounds = array<i64: 2, 1>, scalar_prefetch = 0 : i64, scratch_operands = 0 : i64, tpu.core_type = #tpu.core_type<tc>, window_params = [{transform_indices = @transform_0, window_bounds = array<i64: 1, 208, 128>}, {transform_indices = @transform_1, window_bounds = array<i64: 1, 48, 128>}, {pipeline_mode = #tpu.pipeline_mode<synchronous>, transform_indices = @transform_2, window_bounds = array<i64: 128, 128>}, {pipeline_mode = #tpu.pipeline_mode<synchronous>, transform_indices = @transform_3, window_bounds = array<i64: 1, 128>}, {pipeline_mode = #tpu.pipeline_mode<synchronous>, transform_indices = @transform_4, window_bounds = array<i64: 1, 128>}, {pipeline_mode = #tpu.pipeline_mode<synchronous>, transform_indices = @transform_5, window_bounds = array<i64: 128, 128>}, {pipeline_mode = #tpu.pipeline_mode<synchronous>, transform_indices = @transform_6, window_bounds = array<i64: 1, 128>}, {transform_indices = @transform_7, window_bounds = array<i64: 1, 144, 128>}]} {
    %c144_i32 = arith.constant 144 : i32
    %0 = arith.muli %arg1, %c144_i32 : i32
    %cst = arith.constant 0.000000e+00 : f32
    %1 = vector.broadcast %cst : f32 to vector<144x128xf32>
    %c0 = arith.constant 0 : index
    %c0_0 = arith.constant 0 : index
    %c0_1 = arith.constant 0 : index
    %2 = vector.load %arg3[%c0, %c0_0, %c0_1] : memref<1x48x128xf32, #tpu.memory_space<vmem>>, vector<1x1x128xf32>
    %3 = vector.shape_cast %2 : vector<1x1x128xf32> to vector<128xf32>
    %c0_i32 = arith.constant 0 : i32
    %4 = arith.addi %0, %c0_i32 : i32
    %c0_i32_2 = arith.constant 0 : i32
    %5 = arith.addi %4, %c0_i32_2 : i32
    %c0_3 = arith.constant 0 : index
    %6 = arith.index_cast %5 : i32 to index
    %c0_4 = arith.constant 0 : index
    %7 = vector.load %arg2[%c0_3, %6, %c0_4] : memref<1x208x128xf32, #tpu.memory_space<vmem>>, vector<1x144x128xf32>
    %8 = vector.shape_cast %7 : vector<1x144x128xf32> to vector<144x128xf32>
    %9 = vector.shape_cast %3 : vector<128xf32> to vector<1x128xf32>
    %10 = vector.broadcast %9 : vector<1x128xf32> to vector<144x128xf32>
    %11 = arith.mulf %8, %10 : vector<144x128xf32>
    %12 = arith.addf %1, %11 : vector<144x128xf32>
    %c0_5 = arith.constant 0 : index
    %c1 = arith.constant 1 : index
    %c0_6 = arith.constant 0 : index
    %13 = vector.load %arg3[%c0_5, %c1, %c0_6] : memref<1x48x128xf32, #tpu.memory_space<vmem>>, vector<1x1x128xf32>
    %14 = vector.shape_cast %13 : vector<1x1x128xf32> to vector<128xf32>
    %c0_i32_7 = arith.constant 0 : i32
    %15 = arith.addi %0, %c0_i32_7 : i32
    %c1_i32 = arith.constant 1 : i32
    %16 = arith.addi %15, %c1_i32 : i32
    %c0_8 = arith.constant 0 : index
    %17 = arith.index_cast %16 : i32 to index
    %c0_9 = arith.constant 0 : index
    %18 = vector.load %arg2[%c0_8, %17, %c0_9] : memref<1x208x128xf32, #tpu.memory_space<vmem>>, vector<1x144x128xf32>
    %19 = vector.shape_cast %18 : vector<1x144x128xf32> to vector<144x128xf32>
    %20 = vector.shape_cast %14 : vector<128xf32> to vector<1x128xf32>
    %21 = vector.broadcast %20 : vector<1x128xf32> to vector<144x128xf32>
    %22 = arith.mulf %19, %21 : vector<144x128xf32>
    %23 = arith.addf %12, %22 : vector<144x128xf32>
    %c0_10 = arith.constant 0 : index
    %c2 = arith.constant 2 : index
    %c0_11 = arith.constant 0 : index
    %24 = vector.load %arg3[%c0_10, %c2, %c0_11] : memref<1x48x128xf32, #tpu.memory_space<vmem>>, vector<1x1x128xf32>
    %25 = vector.shape_cast %24 : vector<1x1x128xf32> to vector<128xf32>
    %c0_i32_12 = arith.constant 0 : i32
    %26 = arith.addi %0, %c0_i32_12 : i32
    %c2_i32 = arith.constant 2 : i32
    %27 = arith.addi %26, %c2_i32 : i32
    %c0_13 = arith.constant 0 : index
    %28 = arith.index_cast %27 : i32 to index
    %c0_14 = arith.constant 0 : index
    %29 = vector.load %arg2[%c0_13, %28, %c0_14] : memref<1x208x128xf32, #tpu.memory_space<vmem>>, vector<1x144x128xf32>
    %30 = vector.shape_cast %29 : vector<1x144x128xf32> to vector<144x128xf32>
    %31 = vector.shape_cast %25 : vector<128xf32> to vector<1x128xf32>
    %32 = vector.broadcast %31 : vector<1x128xf32> to vector<144x128xf32>
    %33 = arith.mulf %30, %32 : vector<144x128xf32>
    %34 = arith.addf %23, %33 : vector<144x128xf32>
    %c0_15 = arith.constant 0 : index
    %c3 = arith.constant 3 : index
    %c0_16 = arith.constant 0 : index
    %35 = vector.load %arg3[%c0_15, %c3, %c0_16] : memref<1x48x128xf32, #tpu.memory_space<vmem>>, vector<1x1x128xf32>
    %36 = vector.shape_cast %35 : vector<1x1x128xf32> to vector<128xf32>
    %c0_i32_17 = arith.constant 0 : i32
    %37 = arith.addi %0, %c0_i32_17 : i32
    %c3_i32 = arith.constant 3 : i32
    %38 = arith.addi %37, %c3_i32 : i32
    %c0_18 = arith.constant 0 : index
    %39 = arith.index_cast %38 : i32 to index
    %c0_19 = arith.constant 0 : index
    %40 = vector.load %arg2[%c0_18, %39, %c0_19] : memref<1x208x128xf32, #tpu.memory_space<vmem>>, vector<1x144x128xf32>
    %41 = vector.shape_cast %40 : vector<1x144x128xf32> to vector<144x128xf32>
    %42 = vector.shape_cast %36 : vector<128xf32> to vector<1x128xf32>
    %43 = vector.broadcast %42 : vector<1x128xf32> to vector<144x128xf32>
    %44 = arith.mulf %41, %43 : vector<144x128xf32>
    %45 = arith.addf %34, %44 : vector<144x128xf32>
    %c0_20 = arith.constant 0 : index
    %c4 = arith.constant 4 : index
    %c0_21 = arith.constant 0 : index
    %46 = vector.load %arg3[%c0_20, %c4, %c0_21] : memref<1x48x128xf32, #tpu.memory_space<vmem>>, vector<1x1x128xf32>
    %47 = vector.shape_cast %46 : vector<1x1x128xf32> to vector<128xf32>
    %c0_i32_22 = arith.constant 0 : i32
    %48 = arith.addi %0, %c0_i32_22 : i32
    %c4_i32 = arith.constant 4 : i32
    %49 = arith.addi %48, %c4_i32 : i32
    %c0_23 = arith.constant 0 : index
    %50 = arith.index_cast %49 : i32 to index
    %c0_24 = arith.constant 0 : index
    %51 = vector.load %arg2[%c0_23, %50, %c0_24] : memref<1x208x128xf32, #tpu.memory_space<vmem>>, vector<1x144x128xf32>
    %52 = vector.shape_cast %51 : vector<1x144x128xf32> to vector<144x128xf32>
    %53 = vector.shape_cast %47 : vector<128xf32> to vector<1x128xf32>
    %54 = vector.broadcast %53 : vector<1x128xf32> to vector<144x128xf32>
    %55 = arith.mulf %52, %54 : vector<144x128xf32>
    %56 = arith.addf %45, %55 : vector<144x128xf32>
    %c0_25 = arith.constant 0 : index
    %c7 = arith.constant 7 : index
    %c0_26 = arith.constant 0 : index
    %57 = vector.load %arg3[%c0_25, %c7, %c0_26] : memref<1x48x128xf32, #tpu.memory_space<vmem>>, vector<1x1x128xf32>
    %58 = vector.shape_cast %57 : vector<1x1x128xf32> to vector<128xf32>
    %c15_i32 = arith.constant 15 : i32
    %59 = arith.addi %0, %c15_i32 : i32
    %c0_i32_27 = arith.constant 0 : i32
    %60 = arith.addi %59, %c0_i32_27 : i32
    %c0_28 = arith.constant 0 : index
    %61 = arith.index_cast %60 : i32 to index
    %c0_29 = arith.constant 0 : index
    %62 = vector.load %arg2[%c0_28, %61, %c0_29] : memref<1x208x128xf32, #tpu.memory_space<vmem>>, vector<1x144x128xf32>
    %63 = vector.shape_cast %62 : vector<1x144x128xf32> to vector<144x128xf32>
    %64 = vector.shape_cast %58 : vector<128xf32> to vector<1x128xf32>
    %65 = vector.broadcast %64 : vector<1x128xf32> to vector<144x128xf32>
    %66 = arith.mulf %63, %65 : vector<144x128xf32>
    %67 = arith.addf %56, %66 : vector<144x128xf32>
    %c0_30 = arith.constant 0 : index
    %c8 = arith.constant 8 : index
    %c0_31 = arith.constant 0 : index
    %68 = vector.load %arg3[%c0_30, %c8, %c0_31] : memref<1x48x128xf32, #tpu.memory_space<vmem>>, vector<1x1x128xf32>
    %69 = vector.shape_cast %68 : vector<1x1x128xf32> to vector<128xf32>
    %c15_i32_32 = arith.constant 15 : i32
    %70 = arith.addi %0, %c15_i32_32 : i32
    %c1_i32_33 = arith.constant 1 : i32
    %71 = arith.addi %70, %c1_i32_33 : i32
    %c0_34 = arith.constant 0 : index
    %72 = arith.index_cast %71 : i32 to index
    %c0_35 = arith.constant 0 : index
    %73 = vector.load %arg2[%c0_34, %72, %c0_35] : memref<1x208x128xf32, #tpu.memory_space<vmem>>, vector<1x144x128xf32>
    %74 = vector.shape_cast %73 : vector<1x144x128xf32> to vector<144x128xf32>
    %75 = vector.shape_cast %69 : vector<128xf32> to vector<1x128xf32>
    %76 = vector.broadcast %75 : vector<1x128xf32> to vector<144x128xf32>
    %77 = arith.mulf %74, %76 : vector<144x128xf32>
    %78 = arith.addf %67, %77 : vector<144x128xf32>
    %c0_36 = arith.constant 0 : index
    %c9 = arith.constant 9 : index
    %c0_37 = arith.constant 0 : index
    %79 = vector.load %arg3[%c0_36, %c9, %c0_37] : memref<1x48x128xf32, #tpu.memory_space<vmem>>, vector<1x1x128xf32>
    %80 = vector.shape_cast %79 : vector<1x1x128xf32> to vector<128xf32>
    %c15_i32_38 = arith.constant 15 : i32
    %81 = arith.addi %0, %c15_i32_38 : i32
    %c2_i32_39 = arith.constant 2 : i32
    %82 = arith.addi %81, %c2_i32_39 : i32
    %c0_40 = arith.constant 0 : index
    %83 = arith.index_cast %82 : i32 to index
    %c0_41 = arith.constant 0 : index
    %84 = vector.load %arg2[%c0_40, %83, %c0_41] : memref<1x208x128xf32, #tpu.memory_space<vmem>>, vector<1x144x128xf32>
    %85 = vector.shape_cast %84 : vector<1x144x128xf32> to vector<144x128xf32>
    %86 = vector.shape_cast %80 : vector<128xf32> to vector<1x128xf32>
    %87 = vector.broadcast %86 : vector<1x128xf32> to vector<144x128xf32>
    %88 = arith.mulf %85, %87 : vector<144x128xf32>
    %89 = arith.addf %78, %88 : vector<144x128xf32>
    %c0_42 = arith.constant 0 : index
    %c10 = arith.constant 10 : index
    %c0_43 = arith.constant 0 : index
    %90 = vector.load %arg3[%c0_42, %c10, %c0_43] : memref<1x48x128xf32, #tpu.memory_space<vmem>>, vector<1x1x128xf32>
    %91 = vector.shape_cast %90 : vector<1x1x128xf32> to vector<128xf32>
    %c15_i32_44 = arith.constant 15 : i32
    %92 = arith.addi %0, %c15_i32_44 : i32
    %c3_i32_45 = arith.constant 3 : i32
    %93 = arith.addi %92, %c3_i32_45 : i32
    %c0_46 = arith.constant 0 : index
    %94 = arith.index_cast %93 : i32 to index
    %c0_47 = arith.constant 0 : index
    %95 = vector.load %arg2[%c0_46, %94, %c0_47] : memref<1x208x128xf32, #tpu.memory_space<vmem>>, vector<1x144x128xf32>
    %96 = vector.shape_cast %95 : vector<1x144x128xf32> to vector<144x128xf32>
    %97 = vector.shape_cast %91 : vector<128xf32> to vector<1x128xf32>
    %98 = vector.broadcast %97 : vector<1x128xf32> to vector<144x128xf32>
    %99 = arith.mulf %96, %98 : vector<144x128xf32>
    %100 = arith.addf %89, %99 : vector<144x128xf32>
    %c0_48 = arith.constant 0 : index
    %c11 = arith.constant 11 : index
    %c0_49 = arith.constant 0 : index
    %101 = vector.load %arg3[%c0_48, %c11, %c0_49] : memref<1x48x128xf32, #tpu.memory_space<vmem>>, vector<1x1x128xf32>
    %102 = vector.shape_cast %101 : vector<1x1x128xf32> to vector<128xf32>
    %c15_i32_50 = arith.constant 15 : i32
    %103 = arith.addi %0, %c15_i32_50 : i32
    %c4_i32_51 = arith.constant 4 : i32
    %104 = arith.addi %103, %c4_i32_51 : i32
    %c0_52 = arith.constant 0 : index
    %105 = arith.index_cast %104 : i32 to index
    %c0_53 = arith.constant 0 : index
    %106 = vector.load %arg2[%c0_52, %105, %c0_53] : memref<1x208x128xf32, #tpu.memory_space<vmem>>, vector<1x144x128xf32>
    %107 = vector.shape_cast %106 : vector<1x144x128xf32> to vector<144x128xf32>
    %108 = vector.shape_cast %102 : vector<128xf32> to vector<1x128xf32>
    %109 = vector.broadcast %108 : vector<1x128xf32> to vector<144x128xf32>
    %110 = arith.mulf %107, %109 : vector<144x128xf32>
    %111 = arith.addf %100, %110 : vector<144x128xf32>
    %c0_54 = arith.constant 0 : index
    %c14 = arith.constant 14 : index
    %c0_55 = arith.constant 0 : index
    %112 = vector.load %arg3[%c0_54, %c14, %c0_55] : memref<1x48x128xf32, #tpu.memory_space<vmem>>, vector<1x1x128xf32>
    %113 = vector.shape_cast %112 : vector<1x1x128xf32> to vector<128xf32>
    %c30_i32 = arith.constant 30 : i32
    %114 = arith.addi %0, %c30_i32 : i32
    %c0_i32_56 = arith.constant 0 : i32
    %115 = arith.addi %114, %c0_i32_56 : i32
    %c0_57 = arith.constant 0 : index
    %116 = arith.index_cast %115 : i32 to index
    %c0_58 = arith.constant 0 : index
    %117 = vector.load %arg2[%c0_57, %116, %c0_58] : memref<1x208x128xf32, #tpu.memory_space<vmem>>, vector<1x144x128xf32>
    %118 = vector.shape_cast %117 : vector<1x144x128xf32> to vector<144x128xf32>
    %119 = vector.shape_cast %113 : vector<128xf32> to vector<1x128xf32>
    %120 = vector.broadcast %119 : vector<1x128xf32> to vector<144x128xf32>
    %121 = arith.mulf %118, %120 : vector<144x128xf32>
    %122 = arith.addf %111, %121 : vector<144x128xf32>
    %c0_59 = arith.constant 0 : index
    %c15 = arith.constant 15 : index
    %c0_60 = arith.constant 0 : index
    %123 = vector.load %arg3[%c0_59, %c15, %c0_60] : memref<1x48x128xf32, #tpu.memory_space<vmem>>, vector<1x1x128xf32>
    %124 = vector.shape_cast %123 : vector<1x1x128xf32> to vector<128xf32>
    %c30_i32_61 = arith.constant 30 : i32
    %125 = arith.addi %0, %c30_i32_61 : i32
    %c1_i32_62 = arith.constant 1 : i32
    %126 = arith.addi %125, %c1_i32_62 : i32
    %c0_63 = arith.constant 0 : index
    %127 = arith.index_cast %126 : i32 to index
    %c0_64 = arith.constant 0 : index
    %128 = vector.load %arg2[%c0_63, %127, %c0_64] : memref<1x208x128xf32, #tpu.memory_space<vmem>>, vector<1x144x128xf32>
    %129 = vector.shape_cast %128 : vector<1x144x128xf32> to vector<144x128xf32>
    %130 = vector.shape_cast %124 : vector<128xf32> to vector<1x128xf32>
    %131 = vector.broadcast %130 : vector<1x128xf32> to vector<144x128xf32>
    %132 = arith.mulf %129, %131 : vector<144x128xf32>
    %133 = arith.addf %122, %132 : vector<144x128xf32>
    %c0_65 = arith.constant 0 : index
    %c16 = arith.constant 16 : index
    %c0_66 = arith.constant 0 : index
    %134 = vector.load %arg3[%c0_65, %c16, %c0_66] : memref<1x48x128xf32, #tpu.memory_space<vmem>>, vector<1x1x128xf32>
    %135 = vector.shape_cast %134 : vector<1x1x128xf32> to vector<128xf32>
    %c30_i32_67 = arith.constant 30 : i32
    %136 = arith.addi %0, %c30_i32_67 : i32
    %c2_i32_68 = arith.constant 2 : i32
    %137 = arith.addi %136, %c2_i32_68 : i32
    %c0_69 = arith.constant 0 : index
    %138 = arith.index_cast %137 : i32 to index
    %c0_70 = arith.constant 0 : index
    %139 = vector.load %arg2[%c0_69, %138, %c0_70] : memref<1x208x128xf32, #tpu.memory_space<vmem>>, vector<1x144x128xf32>
    %140 = vector.shape_cast %139 : vector<1x144x128xf32> to vector<144x128xf32>
    %141 = vector.shape_cast %135 : vector<128xf32> to vector<1x128xf32>
    %142 = vector.broadcast %141 : vector<1x128xf32> to vector<144x128xf32>
    %143 = arith.mulf %140, %142 : vector<144x128xf32>
    %144 = arith.addf %133, %143 : vector<144x128xf32>
    %c0_71 = arith.constant 0 : index
    %c17 = arith.constant 17 : index
    %c0_72 = arith.constant 0 : index
    %145 = vector.load %arg3[%c0_71, %c17, %c0_72] : memref<1x48x128xf32, #tpu.memory_space<vmem>>, vector<1x1x128xf32>
    %146 = vector.shape_cast %145 : vector<1x1x128xf32> to vector<128xf32>
    %c30_i32_73 = arith.constant 30 : i32
    %147 = arith.addi %0, %c30_i32_73 : i32
    %c3_i32_74 = arith.constant 3 : i32
    %148 = arith.addi %147, %c3_i32_74 : i32
    %c0_75 = arith.constant 0 : index
    %149 = arith.index_cast %148 : i32 to index
    %c0_76 = arith.constant 0 : index
    %150 = vector.load %arg2[%c0_75, %149, %c0_76] : memref<1x208x128xf32, #tpu.memory_space<vmem>>, vector<1x144x128xf32>
    %151 = vector.shape_cast %150 : vector<1x144x128xf32> to vector<144x128xf32>
    %152 = vector.shape_cast %146 : vector<128xf32> to vector<1x128xf32>
    %153 = vector.broadcast %152 : vector<1x128xf32> to vector<144x128xf32>
    %154 = arith.mulf %151, %153 : vector<144x128xf32>
    %155 = arith.addf %144, %154 : vector<144x128xf32>
    %c0_77 = arith.constant 0 : index
    %c18 = arith.constant 18 : index
    %c0_78 = arith.constant 0 : index
    %156 = vector.load %arg3[%c0_77, %c18, %c0_78] : memref<1x48x128xf32, #tpu.memory_space<vmem>>, vector<1x1x128xf32>
    %157 = vector.shape_cast %156 : vector<1x1x128xf32> to vector<128xf32>
    %c30_i32_79 = arith.constant 30 : i32
    %158 = arith.addi %0, %c30_i32_79 : i32
    %c4_i32_80 = arith.constant 4 : i32
    %159 = arith.addi %158, %c4_i32_80 : i32
    %c0_81 = arith.constant 0 : index
    %160 = arith.index_cast %159 : i32 to index
    %c0_82 = arith.constant 0 : index
    %161 = vector.load %arg2[%c0_81, %160, %c0_82] : memref<1x208x128xf32, #tpu.memory_space<vmem>>, vector<1x144x128xf32>
    %162 = vector.shape_cast %161 : vector<1x144x128xf32> to vector<144x128xf32>
    %163 = vector.shape_cast %157 : vector<128xf32> to vector<1x128xf32>
    %164 = vector.broadcast %163 : vector<1x128xf32> to vector<144x128xf32>
    %165 = arith.mulf %162, %164 : vector<144x128xf32>
    %166 = arith.addf %155, %165 : vector<144x128xf32>
    %c0_83 = arith.constant 0 : index
    %c21 = arith.constant 21 : index
    %c0_84 = arith.constant 0 : index
    %167 = vector.load %arg3[%c0_83, %c21, %c0_84] : memref<1x48x128xf32, #tpu.memory_space<vmem>>, vector<1x1x128xf32>
    %168 = vector.shape_cast %167 : vector<1x1x128xf32> to vector<128xf32>
    %c45_i32 = arith.constant 45 : i32
    %169 = arith.addi %0, %c45_i32 : i32
    %c0_i32_85 = arith.constant 0 : i32
    %170 = arith.addi %169, %c0_i32_85 : i32
    %c0_86 = arith.constant 0 : index
    %171 = arith.index_cast %170 : i32 to index
    %c0_87 = arith.constant 0 : index
    %172 = vector.load %arg2[%c0_86, %171, %c0_87] : memref<1x208x128xf32, #tpu.memory_space<vmem>>, vector<1x144x128xf32>
    %173 = vector.shape_cast %172 : vector<1x144x128xf32> to vector<144x128xf32>
    %174 = vector.shape_cast %168 : vector<128xf32> to vector<1x128xf32>
    %175 = vector.broadcast %174 : vector<1x128xf32> to vector<144x128xf32>
    %176 = arith.mulf %173, %175 : vector<144x128xf32>
    %177 = arith.addf %166, %176 : vector<144x128xf32>
    %c0_88 = arith.constant 0 : index
    %c22 = arith.constant 22 : index
    %c0_89 = arith.constant 0 : index
    %178 = vector.load %arg3[%c0_88, %c22, %c0_89] : memref<1x48x128xf32, #tpu.memory_space<vmem>>, vector<1x1x128xf32>
    %179 = vector.shape_cast %178 : vector<1x1x128xf32> to vector<128xf32>
    %c45_i32_90 = arith.constant 45 : i32
    %180 = arith.addi %0, %c45_i32_90 : i32
    %c1_i32_91 = arith.constant 1 : i32
    %181 = arith.addi %180, %c1_i32_91 : i32
    %c0_92 = arith.constant 0 : index
    %182 = arith.index_cast %181 : i32 to index
    %c0_93 = arith.constant 0 : index
    %183 = vector.load %arg2[%c0_92, %182, %c0_93] : memref<1x208x128xf32, #tpu.memory_space<vmem>>, vector<1x144x128xf32>
    %184 = vector.shape_cast %183 : vector<1x144x128xf32> to vector<144x128xf32>
    %185 = vector.shape_cast %179 : vector<128xf32> to vector<1x128xf32>
    %186 = vector.broadcast %185 : vector<1x128xf32> to vector<144x128xf32>
    %187 = arith.mulf %184, %186 : vector<144x128xf32>
    %188 = arith.addf %177, %187 : vector<144x128xf32>
    %c0_94 = arith.constant 0 : index
    %c23 = arith.constant 23 : index
    %c0_95 = arith.constant 0 : index
    %189 = vector.load %arg3[%c0_94, %c23, %c0_95] : memref<1x48x128xf32, #tpu.memory_space<vmem>>, vector<1x1x128xf32>
    %190 = vector.shape_cast %189 : vector<1x1x128xf32> to vector<128xf32>
    %c45_i32_96 = arith.constant 45 : i32
    %191 = arith.addi %0, %c45_i32_96 : i32
    %c2_i32_97 = arith.constant 2 : i32
    %192 = arith.addi %191, %c2_i32_97 : i32
    %c0_98 = arith.constant 0 : index
    %193 = arith.index_cast %192 : i32 to index
    %c0_99 = arith.constant 0 : index
    %194 = vector.load %arg2[%c0_98, %193, %c0_99] : memref<1x208x128xf32, #tpu.memory_space<vmem>>, vector<1x144x128xf32>
    %195 = vector.shape_cast %194 : vector<1x144x128xf32> to vector<144x128xf32>
    %196 = vector.shape_cast %190 : vector<128xf32> to vector<1x128xf32>
    %197 = vector.broadcast %196 : vector<1x128xf32> to vector<144x128xf32>
    %198 = arith.mulf %195, %197 : vector<144x128xf32>
    %199 = arith.addf %188, %198 : vector<144x128xf32>
    %c0_100 = arith.constant 0 : index
    %c24 = arith.constant 24 : index
    %c0_101 = arith.constant 0 : index
    %200 = vector.load %arg3[%c0_100, %c24, %c0_101] : memref<1x48x128xf32, #tpu.memory_space<vmem>>, vector<1x1x128xf32>
    %201 = vector.shape_cast %200 : vector<1x1x128xf32> to vector<128xf32>
    %c45_i32_102 = arith.constant 45 : i32
    %202 = arith.addi %0, %c45_i32_102 : i32
    %c3_i32_103 = arith.constant 3 : i32
    %203 = arith.addi %202, %c3_i32_103 : i32
    %c0_104 = arith.constant 0 : index
    %204 = arith.index_cast %203 : i32 to index
    %c0_105 = arith.constant 0 : index
    %205 = vector.load %arg2[%c0_104, %204, %c0_105] : memref<1x208x128xf32, #tpu.memory_space<vmem>>, vector<1x144x128xf32>
    %206 = vector.shape_cast %205 : vector<1x144x128xf32> to vector<144x128xf32>
    %207 = vector.shape_cast %201 : vector<128xf32> to vector<1x128xf32>
    %208 = vector.broadcast %207 : vector<1x128xf32> to vector<144x128xf32>
    %209 = arith.mulf %206, %208 : vector<144x128xf32>
    %210 = arith.addf %199, %209 : vector<144x128xf32>
    %c0_106 = arith.constant 0 : index
    %c25 = arith.constant 25 : index
    %c0_107 = arith.constant 0 : index
    %211 = vector.load %arg3[%c0_106, %c25, %c0_107] : memref<1x48x128xf32, #tpu.memory_space<vmem>>, vector<1x1x128xf32>
    %212 = vector.shape_cast %211 : vector<1x1x128xf32> to vector<128xf32>
    %c45_i32_108 = arith.constant 45 : i32
    %213 = arith.addi %0, %c45_i32_108 : i32
    %c4_i32_109 = arith.constant 4 : i32
    %214 = arith.addi %213, %c4_i32_109 : i32
    %c0_110 = arith.constant 0 : index
    %215 = arith.index_cast %214 : i32 to index
    %c0_111 = arith.constant 0 : index
    %216 = vector.load %arg2[%c0_110, %215, %c0_111] : memref<1x208x128xf32, #tpu.memory_space<vmem>>, vector<1x144x128xf32>
    %217 = vector.shape_cast %216 : vector<1x144x128xf32> to vector<144x128xf32>
    %218 = vector.shape_cast %212 : vector<128xf32> to vector<1x128xf32>
    %219 = vector.broadcast %218 : vector<1x128xf32> to vector<144x128xf32>
    %220 = arith.mulf %217, %219 : vector<144x128xf32>
    %221 = arith.addf %210, %220 : vector<144x128xf32>
    %c0_112 = arith.constant 0 : index
    %c28 = arith.constant 28 : index
    %c0_113 = arith.constant 0 : index
    %222 = vector.load %arg3[%c0_112, %c28, %c0_113] : memref<1x48x128xf32, #tpu.memory_space<vmem>>, vector<1x1x128xf32>
    %223 = vector.shape_cast %222 : vector<1x1x128xf32> to vector<128xf32>
    %c60_i32 = arith.constant 60 : i32
    %224 = arith.addi %0, %c60_i32 : i32
    %c0_i32_114 = arith.constant 0 : i32
    %225 = arith.addi %224, %c0_i32_114 : i32
    %c0_115 = arith.constant 0 : index
    %226 = arith.index_cast %225 : i32 to index
    %c0_116 = arith.constant 0 : index
    %227 = vector.load %arg2[%c0_115, %226, %c0_116] : memref<1x208x128xf32, #tpu.memory_space<vmem>>, vector<1x144x128xf32>
    %228 = vector.shape_cast %227 : vector<1x144x128xf32> to vector<144x128xf32>
    %229 = vector.shape_cast %223 : vector<128xf32> to vector<1x128xf32>
    %230 = vector.broadcast %229 : vector<1x128xf32> to vector<144x128xf32>
    %231 = arith.mulf %228, %230 : vector<144x128xf32>
    %232 = arith.addf %221, %231 : vector<144x128xf32>
    %c0_117 = arith.constant 0 : index
    %c29 = arith.constant 29 : index
    %c0_118 = arith.constant 0 : index
    %233 = vector.load %arg3[%c0_117, %c29, %c0_118] : memref<1x48x128xf32, #tpu.memory_space<vmem>>, vector<1x1x128xf32>
    %234 = vector.shape_cast %233 : vector<1x1x128xf32> to vector<128xf32>
    %c60_i32_119 = arith.constant 60 : i32
    %235 = arith.addi %0, %c60_i32_119 : i32
    %c1_i32_120 = arith.constant 1 : i32
    %236 = arith.addi %235, %c1_i32_120 : i32
    %c0_121 = arith.constant 0 : index
    %237 = arith.index_cast %236 : i32 to index
    %c0_122 = arith.constant 0 : index
    %238 = vector.load %arg2[%c0_121, %237, %c0_122] : memref<1x208x128xf32, #tpu.memory_space<vmem>>, vector<1x144x128xf32>
    %239 = vector.shape_cast %238 : vector<1x144x128xf32> to vector<144x128xf32>
    %240 = vector.shape_cast %234 : vector<128xf32> to vector<1x128xf32>
    %241 = vector.broadcast %240 : vector<1x128xf32> to vector<144x128xf32>
    %242 = arith.mulf %239, %241 : vector<144x128xf32>
    %243 = arith.addf %232, %242 : vector<144x128xf32>
    %c0_123 = arith.constant 0 : index
    %c30 = arith.constant 30 : index
    %c0_124 = arith.constant 0 : index
    %244 = vector.load %arg3[%c0_123, %c30, %c0_124] : memref<1x48x128xf32, #tpu.memory_space<vmem>>, vector<1x1x128xf32>
    %245 = vector.shape_cast %244 : vector<1x1x128xf32> to vector<128xf32>
    %c60_i32_125 = arith.constant 60 : i32
    %246 = arith.addi %0, %c60_i32_125 : i32
    %c2_i32_126 = arith.constant 2 : i32
    %247 = arith.addi %246, %c2_i32_126 : i32
    %c0_127 = arith.constant 0 : index
    %248 = arith.index_cast %247 : i32 to index
    %c0_128 = arith.constant 0 : index
    %249 = vector.load %arg2[%c0_127, %248, %c0_128] : memref<1x208x128xf32, #tpu.memory_space<vmem>>, vector<1x144x128xf32>
    %250 = vector.shape_cast %249 : vector<1x144x128xf32> to vector<144x128xf32>
    %251 = vector.shape_cast %245 : vector<128xf32> to vector<1x128xf32>
    %252 = vector.broadcast %251 : vector<1x128xf32> to vector<144x128xf32>
    %253 = arith.mulf %250, %252 : vector<144x128xf32>
    %254 = arith.addf %243, %253 : vector<144x128xf32>
    %c0_129 = arith.constant 0 : index
    %c31 = arith.constant 31 : index
    %c0_130 = arith.constant 0 : index
    %255 = vector.load %arg3[%c0_129, %c31, %c0_130] : memref<1x48x128xf32, #tpu.memory_space<vmem>>, vector<1x1x128xf32>
    %256 = vector.shape_cast %255 : vector<1x1x128xf32> to vector<128xf32>
    %c60_i32_131 = arith.constant 60 : i32
    %257 = arith.addi %0, %c60_i32_131 : i32
    %c3_i32_132 = arith.constant 3 : i32
    %258 = arith.addi %257, %c3_i32_132 : i32
    %c0_133 = arith.constant 0 : index
    %259 = arith.index_cast %258 : i32 to index
    %c0_134 = arith.constant 0 : index
    %260 = vector.load %arg2[%c0_133, %259, %c0_134] : memref<1x208x128xf32, #tpu.memory_space<vmem>>, vector<1x144x128xf32>
    %261 = vector.shape_cast %260 : vector<1x144x128xf32> to vector<144x128xf32>
    %262 = vector.shape_cast %256 : vector<128xf32> to vector<1x128xf32>
    %263 = vector.broadcast %262 : vector<1x128xf32> to vector<144x128xf32>
    %264 = arith.mulf %261, %263 : vector<144x128xf32>
    %265 = arith.addf %254, %264 : vector<144x128xf32>
    %c0_135 = arith.constant 0 : index
    %c32 = arith.constant 32 : index
    %c0_136 = arith.constant 0 : index
    %266 = vector.load %arg3[%c0_135, %c32, %c0_136] : memref<1x48x128xf32, #tpu.memory_space<vmem>>, vector<1x1x128xf32>
    %267 = vector.shape_cast %266 : vector<1x1x128xf32> to vector<128xf32>
    %c60_i32_137 = arith.constant 60 : i32
    %268 = arith.addi %0, %c60_i32_137 : i32
    %c4_i32_138 = arith.constant 4 : i32
    %269 = arith.addi %268, %c4_i32_138 : i32
    %c0_139 = arith.constant 0 : index
    %270 = arith.index_cast %269 : i32 to index
    %c0_140 = arith.constant 0 : index
    %271 = vector.load %arg2[%c0_139, %270, %c0_140] : memref<1x208x128xf32, #tpu.memory_space<vmem>>, vector<1x144x128xf32>
    %272 = vector.shape_cast %271 : vector<1x144x128xf32> to vector<144x128xf32>
    %273 = vector.shape_cast %267 : vector<128xf32> to vector<1x128xf32>
    %274 = vector.broadcast %273 : vector<1x128xf32> to vector<144x128xf32>
    %275 = arith.mulf %272, %274 : vector<144x128xf32>
    %276 = arith.addf %265, %275 : vector<144x128xf32>
    %277 = arith.truncf %276 : vector<144x128xf32> to vector<144x128xbf16>
    %c0_141 = arith.constant 0 : index
    %c0_142 = arith.constant 0 : index
    %278 = vector.load %arg4[%c0_141, %c0_142] : memref<128x128xbf16, #tpu.memory_space<vmem>>, vector<128x128xbf16>
    %cst_143 = arith.constant dense<0.000000e+00> : vector<144x128xf32>
    %279 = tpu.matmul %277, %278, %cst_143 {dimension_numbers = #tpu.dot_dimension_numbers<[1], [0], [0], [1], [0, 0, 1, 1], [], []>} : vector<144x128xbf16>, vector<128x128xbf16>, vector<144x128xf32> -> vector<144x128xf32>
    %c0_144 = arith.constant 0 : index
    %c0_145 = arith.constant 0 : index
    %280 = vector.load %arg5[%c0_144, %c0_145] : memref<1x128xf32, #tpu.memory_space<vmem>>, vector<1x128xf32>
    %281 = vector.broadcast %280 : vector<1x128xf32> to vector<144x128xf32>
    %282 = arith.mulf %279, %281 : vector<144x128xf32>
    %c0_146 = arith.constant 0 : index
    %c0_147 = arith.constant 0 : index
    %283 = vector.load %arg6[%c0_146, %c0_147] : memref<1x128xf32, #tpu.memory_space<vmem>>, vector<1x128xf32>
    %284 = vector.broadcast %283 : vector<1x128xf32> to vector<144x128xf32>
    %285 = arith.addf %282, %284 : vector<144x128xf32>
    %cst_148 = arith.constant 0.000000e+00 : f32
    %286 = vector.broadcast %cst_148 : f32 to vector<144x128xf32>
    %287 = arith.maximumf %285, %286 : vector<144x128xf32>
    %288 = arith.truncf %287 : vector<144x128xf32> to vector<144x128xbf16>
    %c0_149 = arith.constant 0 : index
    %c0_150 = arith.constant 0 : index
    %289 = vector.load %arg7[%c0_149, %c0_150] : memref<128x128xbf16, #tpu.memory_space<vmem>>, vector<128x128xbf16>
    %cst_151 = arith.constant dense<0.000000e+00> : vector<144x128xf32>
    %290 = tpu.matmul %288, %289, %cst_151 {dimension_numbers = #tpu.dot_dimension_numbers<[1], [0], [0], [1], [0, 0, 1, 1], [], []>} : vector<144x128xbf16>, vector<128x128xbf16>, vector<144x128xf32> -> vector<144x128xf32>
    %c0_152 = arith.constant 0 : index
    %c0_153 = arith.constant 0 : index
    %291 = vector.load %arg8[%c0_152, %c0_153] : memref<1x128xf32, #tpu.memory_space<vmem>>, vector<1x128xf32>
    %292 = vector.broadcast %291 : vector<1x128xf32> to vector<144x128xf32>
    %293 = arith.addf %290, %292 : vector<144x128xf32>
    %c0_154 = arith.constant 0 : index
    %c0_155 = arith.constant 0 : index
    %c0_156 = arith.constant 0 : index
    %294 = vector.load %arg9[%c0_154, %c0_155, %c0_156] : memref<1x144x128xf32, #tpu.memory_space<vmem>>, vector<1x144x128xf32>
    %295 = vector.shape_cast %294 : vector<1x144x128xf32> to vector<144x128xf32>
    %296 = vector.shape_cast %293 : vector<144x128xf32> to vector<1x144x128xf32>
    tpu.vector_store %arg9[%c0_154, %c0_155, %c0_156], %296 {strides = array<i32>} : memref<1x144x128xf32, #tpu.memory_space<vmem>>, vector<1x144x128xf32>,
    return
  }
  func.func @transform_0(%arg0: i32, %arg1: i32) -> (i32, i32, i32) {
    %c0_i32 = arith.constant 0 : i32
    %c0_i32_0 = arith.constant 0 : i32
    %c0_i32_1 = arith.constant 0 : i32
    return %arg0, %c0_i32, %c0_i32_0 : i32, i32, i32
  }
  func.func @transform_1(%arg0: i32, %arg1: i32) -> (i32, i32, i32) {
    %c0_i32 = arith.constant 0 : i32
    %c0_i32_0 = arith.constant 0 : i32
    %c0_i32_1 = arith.constant 0 : i32
    return %arg0, %c0_i32, %c0_i32_0 : i32, i32, i32
  }
  func.func @transform_2(%arg0: i32, %arg1: i32) -> (i32, i32) {
    %c0_i32 = arith.constant 0 : i32
    %c0_i32_0 = arith.constant 0 : i32
    %c0_i32_1 = arith.constant 0 : i32
    return %c0_i32, %c0_i32_0 : i32, i32
  }
  func.func @transform_3(%arg0: i32, %arg1: i32) -> (i32, i32) {
    %c0_i32 = arith.constant 0 : i32
    %c0_i32_0 = arith.constant 0 : i32
    %c0_i32_1 = arith.constant 0 : i32
    return %c0_i32, %c0_i32_0 : i32, i32
  }
  func.func @transform_4(%arg0: i32, %arg1: i32) -> (i32, i32) {
    %c0_i32 = arith.constant 0 : i32
    %c0_i32_0 = arith.constant 0 : i32
    %c0_i32_1 = arith.constant 0 : i32
    return %c0_i32, %c0_i32_0 : i32, i32
  }
  func.func @transform_5(%arg0: i32, %arg1: i32) -> (i32, i32) {
    %c0_i32 = arith.constant 0 : i32
    %c0_i32_0 = arith.constant 0 : i32
    %c0_i32_1 = arith.constant 0 : i32
    return %c0_i32, %c0_i32_0 : i32, i32
  }
  func.func @transform_6(%arg0: i32, %arg1: i32) -> (i32, i32) {
    %c0_i32 = arith.constant 0 : i32
    %c0_i32_0 = arith.constant 0 : i32
    %c0_i32_1 = arith.constant 0 : i32
    return %c0_i32, %c0_i32_0 : i32, i32
  }
  func.func @transform_7(%arg0: i32, %arg1: i32) -> (i32, i32, i32) {
    %c0_i32 = arith.constant 0 : i32
    %c0_i32_0 = arith.constant 0 : i32
    return %arg0, %arg1, %c0_i32 : i32, i32, i32
  }
}

</mosaic_0001>

<llo_original>
// kernel: depthwise_xcorr_forward.4
$region0: #{depthwise_xcorr_forward.4}
  #allocation0 [shape = 'u32[]', space=smem, size = 0x4, offset = 0x4, fixed_abs, tag = 'smem constant byte address 0x4 - core index']
  #allocation1 [shape = 'u32[144,128]{1,0:T(1,128)}', space=vmem, size = 0x12000, scoped, tag = 'internal scratch']
  %s0 = inlined_call_operand.vmem [shape: bf16[2,208,36], index: 0, kind: input, shape index: {}]
  %s1 = inlined_call_operand.vmem [shape: bf16[36,128], index: 1, kind: input, shape index: {}]
  %s2 = inlined_call_operand.vmem [shape: f32[1,128], index: 2, kind: input, shape index: {}]
  %s3 = inlined_call_operand.vmem [shape: f32[1,128], index: 3, kind: input, shape index: {}]
  %s4 = inlined_call_operand.vmem [shape: f32[2,208,128], index: 4, kind: output, shape index: {}]
  %s5 = sld [smem:[#allocation0]]
  $region49: #{depthwise_xcorr_forward.4} parent=0
    _
  %s7 = ssub.s32 1, %s5
  %s8 = scalar_select 0, %s7, %s5
  loop: start=0, step=1, limit=4
  $region2: #{depthwise_xcorr_forward.4} parent=0 // loop_pre_header
    _
  $region3: #{depthwise_xcorr_forward.4} parent=0 // loop_header
    %s10 = sphi 0, %s14
    %p11 = scmp.ge.s32.totalorder %s10, 4
    %s17 = sphi 0, %s29
    %s18 = sphi 0, %s25
    %s19 = sphi 0, %s17
    %s20 = sphi 0, %s18
    %s21 = sphi 0, %s19
    %s22 = sphi 0, %s20
    %s34 = sphi 0, %s36
    %s37 = sphi 0, %s34
    %s38 = sphi 0, %s37
    %s54 = sphi 0, %s38
    %s58 = sphi 0, %s58
    %s60 = sphi 0, %s58
    %s61 = sphi 0, %s60
    %s75 = sphi 0, %s61
    %s79 = sphi 0, %s79
    %s81 = sphi 0, %s79
    %s82 = sphi 0, %s81
    %s96 = sphi 0, %s82
    %s100 = sphi 0, %s100
    %s102 = sphi 0, %s100
    %s103 = sphi 0, %s102
    %s117 = sphi 0, %s103
    %s125 = sphi 0, %s127
    %s128 = sphi 0, %s125
    %s129 = sphi 0, %s128
    %s145 = sphi 0, %s129
  $region4: #{depthwise_xcorr_forward.4} parent=0 // loop_header_branch
    %13 = sbr.rel (%p11) target = $region8
  $region5: #{depthwise_xcorr_forward.4} parent=0 // loop_body
    %s15 = ssub.s32 %s10, 1
    %s16 = ssub.s32 %s10, 2
    %s23 = sadd.s32 1, %s18
    %p24 = scmp.ge.s32.totalorder %s23, 1
    %s25 = scalar_select %p24, 0, %s23
    %s26 = sadd.s32 1, %s17
    %s27 = scalar_select %p24, %s26, %s17
    %p28 = scmp.ge.s32.totalorder %s27, 2
    %s29 = scalar_select %p28, 0, %s27
    %s30 = ssub.s32 %s17, %s29
    %s31 = ssub.s32 %s18, %s25
    %s32 = sor.u32 %s30, %s31
    %p33 = scmp.eq.s32.totalorder %s32, 0
    %s35 = sadd.s32 %s34, 1
    %s36 = scalar_select %p33, %s34, %s35
    %p39 = pneg %p33
    %p40 = scmp.eq.s32.totalorder %s10, 1
    %p41 = por %p39, %p40
    %p42 = scmp.ne.s32.totalorder %s34, %s37
    %p43 = scmp.eq.s32.totalorder %s10, 0
    %p44 = por %p42, %p43
    %p45 = scmp.ne.s32.totalorder %s34, %s37
    %p46 = scmp.eq.s32.totalorder %s15, 1
    %p47 = por %p45, %p46
    %p48 = scmp.ne.s32.totalorder %s37, %s38
    %p49 = scmp.eq.s32.totalorder %s15, 0
    %p50 = por %p48, %p49
    %p51 = scmp.ne.s32.totalorder %s37, %s38
    %p52 = scmp.eq.s32.totalorder %s16, 1
    %p53 = por %p51, %p52
    %p55 = scmp.ne.s32.totalorder %s38, %s54
    %p56 = scmp.eq.s32.totalorder %s16, 0
    %p57 = por %p55, %p56
    %s59 = sadd.s32 %s58, 1
    %p62 = scmp.eq.s32.totalorder %s10, 1
    %p63 = scmp.ne.s32.totalorder %s58, %s60
    %p64 = scmp.eq.s32.totalorder %s10, 0
    %p65 = por %p63, %p64
    %p66 = scmp.ne.s32.totalorder %s58, %s60
    %p67 = scmp.eq.s32.totalorder %s15, 1
    %p68 = por %p66, %p67
    %p69 = scmp.ne.s32.totalorder %s60, %s61
    %p70 = scmp.eq.s32.totalorder %s15, 0
    %p71 = por %p69, %p70
    %p72 = scmp.ne.s32.totalorder %s60, %s61
    %p73 = scmp.eq.s32.totalorder %s16, 1
    %p74 = por %p72, %p73
    %p76 = scmp.ne.s32.totalorder %s61, %s75
    %p77 = scmp.eq.s32.totalorder %s16, 0
    %p78 = por %p76, %p77
    %s80 = sadd.s32 %s79, 1
    %p83 = scmp.eq.s32.totalorder %s10, 1
    %p84 = scmp.ne.s32.totalorder %s79, %s81
    %p85 = scmp.eq.s32.totalorder %s10, 0
    %p86 = por %p84, %p85
    %p87 = scmp.ne.s32.totalorder %s79, %s81
    %p88 = scmp.eq.s32.totalorder %s15, 1
    %p89 = por %p87, %p88
    %p90 = scmp.ne.s32.totalorder %s81, %s82
    %p91 = scmp.eq.s32.totalorder %s15, 0
    %p92 = por %p90, %p91
    %p93 = scmp.ne.s32.totalorder %s81, %s82
    %p94 = scmp.eq.s32.totalorder %s16, 1
    %p95 = por %p93, %p94
    %p97 = scmp.ne.s32.totalorder %s82, %s96
    %p98 = scmp.eq.s32.totalorder %s16, 0
    %p99 = por %p97, %p98
    %s101 = sadd.s32 %s100, 1
    %p104 = scmp.eq.s32.totalorder %s10, 1
    %p105 = scmp.ne.s32.totalorder %s100, %s102
    %p106 = scmp.eq.s32.totalorder %s10, 0
    %p107 = por %p105, %p106
    %p108 = scmp.ne.s32.totalorder %s100, %s102
    %p109 = scmp.eq.s32.totalorder %s15, 1
    %p110 = por %p108, %p109
    %p111 = scmp.ne.s32.totalorder %s102, %s103
    %p112 = scmp.eq.s32.totalorder %s15, 0
    %p113 = por %p111, %p112
    %p114 = scmp.ne.s32.totalorder %s102, %s103
    %p115 = scmp.eq.s32.totalorder %s16, 1
    %p116 = por %p114, %p115
    %p118 = scmp.ne.s32.totalorder %s103, %s117
    %p119 = scmp.eq.s32.totalorder %s16, 0
    %p120 = por %p118, %p119
    %s121 = ssub.s32 %s17, %s29
    %s122 = ssub.s32 %s18, %s25
    %s123 = sor.u32 %s121, %s122
    %p124 = scmp.eq.s32.totalorder %s123, 0
    %s126 = sadd.s32 %s125, 1
    %s127 = scalar_select %p124, %s125, %s126
    %p130 = pneg %p124
    %p131 = scmp.eq.s32.totalorder %s10, 1
    %p132 = por %p130, %p131
    %p133 = scmp.ne.s32.totalorder %s125, %s128
    %p134 = scmp.eq.s32.totalorder %s10, 0
    %p135 = por %p133, %p134
    %p136 = scmp.ne.s32.totalorder %s125, %s128
    %p137 = scmp.eq.s32.totalorder %s15, 1
    %p138 = por %p136, %p137
    %p139 = scmp.ne.s32.totalorder %s128, %s129
    %p140 = scmp.eq.s32.totalorder %s15, 0
    %p141 = por %p139, %p140
    %p142 = scmp.ne.s32.totalorder %s128, %s129
    %p143 = scmp.eq.s32.totalorder %s16, 1
    %p144 = por %p142, %p143
    %p146 = scmp.ne.s32.totalorder %s129, %s145
    %p147 = scmp.eq.s32.totalorder %s16, 0
    %p148 = por %p146, %p147
    %p149 = scmp.le.s32.totalorder 1, %s10
    %p150 = scmp.lt.s32.totalorder %s10, 3
    %p151 = pnand %p149, %p150
    %p152 = pneg %p151
    // Predicated region
    $region9: #{depthwise_xcorr_forward.4} parent=5 // pred_check
      _
    $region10: #{depthwise_xcorr_forward.4} parent=5 // pred_check_branch
      %154 = sbr.rel (%p151) target = $region12
    $region11: #{depthwise_xcorr_forward.4} parent=5 // pred_region
      %s155 = ssub.s32 %s10, 1
      // Predicated region
      $region13: #{depthwise_xcorr_forward.4} parent=11 // pred_check
        %p156 = pneg %p71
      $region14: #{depthwise_xcorr_forward.4} parent=11 // pred_check_branch
        %158 = sbr.rel (%p156) target = $region16
      $region15: #{depthwise_xcorr_forward.4} parent=11 // pred_region
        _
      $region16: #{depthwise_xcorr_forward.4} parent=11 // pred_fallthru
        _
      // Predicated region
      $region17: #{depthwise_xcorr_forward.4} parent=11 // pred_check
        %p159 = pneg %p92
      $region18: #{depthwise_xcorr_forward.4} parent=11 // pred_check_branch
        %161 = sbr.rel (%p159) target = $region20
      $region19: #{depthwise_xcorr_forward.4} parent=11 // pred_region
        _
      $region20: #{depthwise_xcorr_forward.4} parent=11 // pred_fallthru
        _
      // Predicated region
      $region21: #{depthwise_xcorr_forward.4} parent=11 // pred_check
        %p162 = pneg %p113
      $region22: #{depthwise_xcorr_forward.4} parent=11 // pred_check_branch
        %164 = sbr.rel (%p162) target = $region24
      $region23: #{depthwise_xcorr_forward.4} parent=11 // pred_region
        _
      $region24: #{depthwise_xcorr_forward.4} parent=11 // pred_fallthru
        _
    $region12: #{depthwise_xcorr_forward.4} parent=5 // pred_fallthru
      _
    %p165 = scmp.lt.s32.totalorder %s10, 2
    // Predicated region
    $region25: #{depthwise_xcorr_forward.4} parent=5 // pred_check
      %p166 = pneg %p165
    $region26: #{depthwise_xcorr_forward.4} parent=5 // pred_check_branch
      %168 = sbr.rel (%p166) target = $region28
    $region27: #{depthwise_xcorr_forward.4} parent=5 // pred_region
      // Predicated region
      $region29: #{depthwise_xcorr_forward.4} parent=27 // pred_check
        %p169 = pneg %p44
      $region30: #{depthwise_xcorr_forward.4} parent=27 // pred_check_branch
        %171 = sbr.rel (%p169) target = $region32
      $region31: #{depthwise_xcorr_forward.4} parent=27 // pred_region
        %s172 = smul.u32 26, %s18
        %p173 = scmp.lt.s32.totalorder %s17, 1
        %s174 = scalar_select %p173, %s17, 1
        %p175 = scmp.lt.s32.totalorder %s172, 25
        %s176 = scalar_select %p175, %s172, 25
        %s177 = smul.addr %s174, 26
        %s178 = sadd.s32 %s176, %s177
        %s179 = smul.addr %s178, 4
        %s180 = scalar_lea.vmem %s0, %s179
        %s181 = smul.u32 26, %s18
      $region32: #{depthwise_xcorr_forward.4} parent=27 // pred_fallthru
        _
    $region28: #{depthwise_xcorr_forward.4} parent=5 // pred_fallthru
      _
    %p182 = scmp.le.s32.totalorder 1, %s10
    %p183 = scmp.lt.s32.totalorder %s10, 3
    %p184 = pnand %p182, %p183
    %p185 = pneg %p184
    // Predicated region
    $region33: #{depthwise_xcorr_forward.4} parent=5 // pred_check
      _
    $region34: #{depthwise_xcorr_forward.4} parent=5 // pred_check_branch
      %187 = sbr.rel (%p184) target = $region36
    $region35: #{depthwise_xcorr_forward.4} parent=5 // pred_region
      %s188 = ssub.s32 %s10, 1
      %s189 = smul.u32 26, %s20
      %p190 = scmp.lt.s32.totalorder %s19, 1
      %s191 = scalar_select %p190, %s19, 1
      %p192 = scmp.lt.s32.totalorder %s189, 25
      %s193 = scalar_select %p192, %s189, 25
      %s194 = smul.addr %s191, 26
      %s195 = sadd.s32 %s193, %s194
      %s196 = smul.addr %s195, 4
      %s197 = scalar_lea.vmem %s0, %s196
      %p198 = pneg %p50
      %p199 = pneg %p47
      %p200 = pneg %p71
      %p201 = pneg %p68
      %p202 = pneg %p92
      %p203 = pneg %p89
      %p204 = pneg %p113
      %p205 = pneg %p110
      %p206 = pneg %p141
      %p207 = pneg %p138
      %s208 = smul.u32 26, %s20
      %p209 = scmp.lt.s32.totalorder %s19, 1
      %s210 = scalar_select %p209, %s19, 1
      %p211 = scmp.lt.s32.totalorder %s208, 25
      %s212 = scalar_select %p211, %s208, 25
      %s213 = smul.addr %s210, 26
      %s214 = sadd.s32 %s212, %s213
      %s215 = smul.addr %s214, 8
      %s216 = scalar_lea.vmem %s4, %s215
      %s217 = smul.u32 26, %s20
      %p218 = scmp.lt.s32.totalorder %s19, 1
      %s219 = scalar_select %p218, %s19, 1
      %p220 = scmp.lt.s32.totalorder %s217, 25
      %s221 = scalar_select %p220, %s217, 25
      %s222 = smul.addr %s219, 26
      %s223 = sadd.s32 %s221, %s222
      %s224 = smul.addr %s223, 4
      %s225 = scalar_lea.vmem %s0, %s224
      %s226 = smul.u32 26, %s20
      %s227 = smul.u32 26, %s20
      %p228 = scmp.lt.s32.totalorder %s19, 1
      %s229 = scalar_select %p228, %s19, 1
      %p230 = scmp.lt.s32.totalorder %s227, 25
      %s231 = scalar_select %p230, %s227, 25
      %s232 = smul.addr %s229, 26
      %s233 = sadd.s32 %s231, %s232
      %s234 = smul.addr %s233, 8
      %s235 = scalar_lea.vmem %s4, %s234
      %s236 = smul.u32 26, %s20
      %v238 = vld [vmem:[%s225] sm:$0xf]
      %v239 = vld [vmem:[%s225 + $0x4] sm:$0xf]
      %v240 = vld [vmem:[%s225 + $0x8] sm:$0xf]
      %v241 = vld [vmem:[%s225 + $0xc] sm:$0xf]
      %v242 = vld [vmem:[%s225 + $0x10] sm:$0xf]
      %v243 = vld [vmem:[%s225 + $0x14] sm:$0xf]
      %v244 = vld [vmem:[%s225 + $0x18] sm:$0xf]
      %v245 = vld [vmem:[%s225 + $0x1c] sm:$0xf]
      %v246 = vld [vmem:[%s225 + $0x20] sm:$0xf]
      %v247 = vld [vmem:[%s225 + $0x24] sm:$0xf]
      %v248 = vld [vmem:[%s225 + $0x28] sm:$0xf]
      %v249 = vld [vmem:[%s225 + $0x2c] sm:$0xf]
      %v250 = vld [vmem:[%s225 + $0x30] sm:$0xf]
      %v251 = vld [vmem:[%s225 + $0x34] sm:$0xf]
      %v252 = vld [vmem:[%s225 + $0x38] sm:$0xf]
      %v253 = vld [vmem:[%s225 + $0x3c] sm:$0xf]
      %v254 = vld [vmem:[%s225 + $0x40] sm:$0xf]
      %v255 = vld [vmem:[%s225 + $0x44] sm:$0xf]
      %v256 = vld [vmem:[%s225 + $0x48] sm:$0xf]
      %v257 = vld [vmem:[%s225 + $0x4c] sm:$0xf]
      %v258 = vld [vmem:[%s225 + $0x50] sm:$0xf]
      %v259 = vld [vmem:[%s225 + $0x54] sm:$0xf]
      %v260 = vld [vmem:[%s225 + $0x58] sm:$0xf]
      %v261 = vld [vmem:[%s225 + $0x5c] sm:$0xf]
      %v262 = vld [vmem:[%s225 + $0x60] sm:$0xf]
      %v263 = vld [vmem:[%s225 + $0x64] sm:$0xf]
      %v264 = vld [vmem:[%s1] sm:$0xf]
      %v265 = vld [vmem:[%s1 + $0x4] sm:$0xf]
      %v266 = vld [vmem:[%s1 + $0x8] sm:$0xf]
      %v267 = vld [vmem:[%s1 + $0xc] sm:$0xf]
      %v268 = vld [vmem:[%s1 + $0x10] sm:$0x3]
      %v295 = vunpack.c.l.b16 %v238
      %v296 = vunpack.c.l.b16 %v239
      %v297 = vunpack.c.l.b16 %v240
      %v298 = vunpack.c.l.b16 %v241
      %v299 = vunpack.c.l.b16 %v242
      %v300 = vunpack.c.l.b16 %v243
      %v301 = vunpack.c.l.b16 %v244
      %v302 = vunpack.c.l.b16 %v245
      %v303 = vunpack.c.l.b16 %v246
      %v304 = vunpack.c.l.b16 %v247
      %v305 = vunpack.c.l.b16 %v248
      %v306 = vunpack.c.l.b16 %v249
      %v307 = vunpack.c.l.b16 %v250
      %v308 = vunpack.c.l.b16 %v251
      %v309 = vunpack.c.l.b16 %v252
      %v310 = vunpack.c.l.b16 %v253
      %v311 = vunpack.c.l.b16 %v254
      %v312 = vunpack.c.l.b16 %v255
      %v313 = vunpack.c.l.b16 %v256
      %v314 = vunpack.c.l.b16 %v257
      %v315 = vunpack.c.l.b16 %v258
      %v316 = vunpack.c.l.b16 %v259
      %v317 = vunpack.c.l.b16 %v260
      %v318 = vunpack.c.l.b16 %v261
      %v319 = vunpack.c.l.b16 %v262
      %v320 = vunpack.c.l.b16 %v263
      %v321 = vpack.c.b16 %v296, %v295
      %v322 = vpack.c.b16 %v298, %v297
      %v323 = vpack.c.b16 %v300, %v299
      %v324 = vpack.c.b16 %v302, %v301
      %v325 = vpack.c.b16 %v304, %v303
      %v326 = vpack.c.b16 %v306, %v305
      %v327 = vpack.c.b16 %v308, %v307
      %v328 = vpack.c.b16 %v310, %v309
      %v329 = vpack.c.b16 %v312, %v311
      %v330 = vpack.c.b16 %v314, %v313
      %v331 = vpack.c.b16 %v316, %v315
      %v332 = vpack.c.b16 %v318, %v317
      %v333 = vpack.c.b16 %v320, %v319
      %v339 = vunpack.c.l.b16 %v264
      %v340 = vunpack.c.l.b16 %v265
      %v341 = vunpack.c.l.b16 %v266
      %v342 = vunpack.c.l.b16 %v267
      %v343 = vunpack.c.l.b16 %v268
      %v344 = vpack.c.b16 %v340, %v339
      %v345 = vpack.c.b16 %v342, %v341
      %v346 = vpack.c.b16 %v343, %v343
      %vm349 = vcmask 293888
      %v351 = vsel %vm349, %v321, 0
      %v354 = vsel %vm349, %v322, 0
      %v357 = vsel %vm349, %v323, 0
      %v360 = vsel %vm349, %v324, 0
      %v363 = vsel %vm349, %v325, 0
      %v366 = vsel %vm349, %v326, 0
      %v369 = vsel %vm349, %v327, 0
      %v372 = vsel %vm349, %v328, 0
      %v375 = vsel %vm349, %v329, 0
      %v378 = vsel %vm349, %v330, 0
      %v381 = vsel %vm349, %v331, 0
      %v384 = vsel %vm349, %v332, 0
      %v387 = vsel %vm349, %v333, 0
      %vm389 = vcmask 1041408
      %v391 = vsel %vm389, %v346, 0
      %393 = vmatprep.subr.bf16.mxu0 0
      %394 = vmatpush1.bf16.msra.mxu0 %v344
      %395 = vmatprep.subr.bf16.mxu0 0
      %396 = vmatpush1.bf16.msra.mxu0 %v345
      %397 = vmatprep.subr.bf16.mxu0 0
      %398 = vmatpush1.bf16.msra.mxu0 %v391
      %399 = vmatprep.subr.bf16.mxu0 0
      %400 = vmatpush1.bf16.msra.mxu0 0
      %401 = vmatprep.subr.bf16.mxu0 0
      %402 = vmatpush1.bf16.msra.mxu0 0
      %403 = vmatprep.subr.bf16.mxu0 0
      %404 = vmatpush1.bf16.msra.mxu0 0
      %405 = vmatprep.subr.bf16.mxu0 0
      %406 = vmatpush1.bf16.msra.mxu0 0
      %407 = vmatprep.subr.bf16.mxu0 0
      %408 = vmatpush1.bf16.msra.mxu0 0
      %409 = vmatprep.subr.bf16.mxu0 0
      %410 = vmatpush1.bf16.msra.mxu0 0
      %411 = vmatprep.subr.bf16.mxu0 0
      %412 = vmatpush1.bf16.msra.mxu0 0
      %413 = vmatprep.subr.bf16.mxu0 0
      %414 = vmatpush1.bf16.msra.mxu0 0
      %415 = vmatprep.subr.bf16.mxu0 0
      %416 = vmatpush1.bf16.msra.mxu0 0
      %417 = vmatprep.subr.bf16.mxu0 0
      %418 = vmatpush1.bf16.msra.mxu0 0
      %419 = vmatprep.subr.bf16.mxu0 0
      %420 = vmatpush1.bf16.msra.mxu0 0
      %421 = vmatprep.subr.bf16.mxu0 0
      %422 = vmatpush1.bf16.msra.mxu0 0
      %423 = vmatprep.subr.bf16.mxu0 0
      %424 = vmatpush1.bf16.msra.mxu0 0
      %425 = vmatprep.mubr.bf16.mxu0 0
      %426 = vmatmul.mubr.bf16.gmra.mrb[0].mxu0 %v351
      %v427 = vpop.f32.mrb[0].mxu0
      %v428 = vadd.f32 0.0, %v427
      %v429 = vpop.f32.mrb[0].mxu0
      %v430 = vpop.f32.mrb[0].mxu0
      %v431 = vadd.f32 0.0, %v430
      %v432 = vpop.f32.mrb[0].mxu0
      %433 = vmatprep.mubr.bf16.mxu0 0
      %434 = vmatmul.mubr.bf16.gmra.mrb[0].mxu0 %v354
      %v435 = vpop.f32.mrb[0].mxu0
      %v436 = vadd.f32 0.0, %v435
      %v437 = vpop.f32.mrb[0].mxu0
      %v438 = vpop.f32.mrb[0].mxu0
      %v439 = vadd.f32 0.0, %v438
      %v440 = vpop.f32.mrb[0].mxu0
      %441 = vmatprep.mubr.bf16.mxu0 0
      %442 = vmatmul.mubr.bf16.gmra.mrb[0].mxu0 %v357
      %v443 = vpop.f32.mrb[0].mxu0
      %v444 = vadd.f32 0.0, %v443
      %v445 = vpop.f32.mrb[0].mxu0
      %v446 = vpop.f32.mrb[0].mxu0
      %v447 = vadd.f32 0.0, %v446
      %v448 = vpop.f32.mrb[0].mxu0
      %449 = vmatprep.mubr.bf16.mxu0 0
      %450 = vmatmul.mubr.bf16.gmra.mrb[0].mxu0 %v360
      %v451 = vpop.f32.mrb[0].mxu0
      %v452 = vadd.f32 0.0, %v451
      %v453 = vpop.f32.mrb[0].mxu0
      %v454 = vpop.f32.mrb[0].mxu0
      %v455 = vadd.f32 0.0, %v454
      %v456 = vpop.f32.mrb[0].mxu0
      %457 = vmatprep.mubr.bf16.mxu0 0
      %458 = vmatmul.mubr.bf16.gmra.mrb[0].mxu0 %v363
      %v459 = vpop.f32.mrb[0].mxu0
      %v460 = vadd.f32 0.0, %v459
      %v461 = vpop.f32.mrb[0].mxu0
      %v462 = vpop.f32.mrb[0].mxu0
      %v463 = vadd.f32 0.0, %v462
      %v464 = vpop.f32.mrb[0].mxu0
      %465 = vmatprep.mubr.bf16.mxu0 0
      %466 = vmatmul.mubr.bf16.gmra.mrb[0].mxu0 %v366
      %v467 = vpop.f32.mrb[0].mxu0
      %v468 = vadd.f32 0.0, %v467
      %v469 = vpop.f32.mrb[0].mxu0
      %v470 = vpop.f32.mrb[0].mxu0
      %v471 = vadd.f32 0.0, %v470
      %v472 = vpop.f32.mrb[0].mxu0
      %473 = vmatprep.mubr.bf16.mxu0 0
      %474 = vmatmul.mubr.bf16.gmra.mrb[0].mxu0 %v369
      %v475 = vpop.f32.mrb[0].mxu0
      %v476 = vadd.f32 0.0, %v475
      %v477 = vpop.f32.mrb[0].mxu0
      %v478 = vpop.f32.mrb[0].mxu0
      %v479 = vadd.f32 0.0, %v478
      %v480 = vpop.f32.mrb[0].mxu0
      %481 = vmatprep.mubr.bf16.mxu0 0
      %482 = vmatmul.mubr.bf16.gmra.mrb[0].mxu0 %v372
      %v483 = vpop.f32.mrb[0].mxu0
      %v484 = vadd.f32 0.0, %v483
      %v485 = vpop.f32.mrb[0].mxu0
      %v486 = vpop.f32.mrb[0].mxu0
      %v487 = vadd.f32 0.0, %v486
      %v488 = vpop.f32.mrb[0].mxu0
      %489 = vmatprep.mubr.bf16.mxu0 0
      %490 = vmatmul.mubr.bf16.gmra.mrb[0].mxu0 %v375
      %v491 = vpop.f32.mrb[0].mxu0
      %v492 = vadd.f32 0.0, %v491
      %v493 = vpop.f32.mrb[0].mxu0
      %v494 = vpop.f32.mrb[0].mxu0
      %v495 = vadd.f32 0.0, %v494
      %v496 = vpop.f32.mrb[0].mxu0
      %497 = vmatprep.mubr.bf16.mxu0 0
      %498 = vmatmul.mubr.bf16.gmra.mrb[0].mxu0 %v378
      %v499 = vpop.f32.mrb[0].mxu0
      %v500 = vadd.f32 0.0, %v499
      %v501 = vpop.f32.mrb[0].mxu0
      %v502 = vpop.f32.mrb[0].mxu0
      %v503 = vadd.f32 0.0, %v502
      %v504 = vpop.f32.mrb[0].mxu0
      %505 = vmatprep.mubr.bf16.mxu0 0
      %506 = vmatmul.mubr.bf16.gmra.mrb[0].mxu0 %v381
      %v507 = vpop.f32.mrb[0].mxu0
      %v508 = vadd.f32 0.0, %v507
      %v509 = vpop.f32.mrb[0].mxu0
      %v510 = vpop.f32.mrb[0].mxu0
      %v511 = vadd.f32 0.0, %v510
      %v512 = vpop.f32.mrb[0].mxu0
      %513 = vmatprep.mubr.bf16.mxu0 0
      %514 = vmatmul.mubr.bf16.gmra.mrb[0].mxu0 %v384
      %v515 = vpop.f32.mrb[0].mxu0
      %v516 = vadd.f32 0.0, %v515
      %v517 = vpop.f32.mrb[0].mxu0
      %v518 = vpop.f32.mrb[0].mxu0
      %v519 = vadd.f32 0.0, %v518
      %v520 = vpop.f32.mrb[0].mxu0
      %521 = vmatprep.mubr.bf16.mxu0 0
      %522 = vmatmul.mubr.bf16.gmra.mrb[0].mxu0 %v387
      %v523 = vpop.f32.mrb[0].mxu0
      %v524 = vadd.f32 0.0, %v523
      %v525 = vpop.f32.mrb[0].mxu0
      %v526 = vpop.f32.mrb[0].mxu0
      %v527 = vadd.f32 0.0, %v526
      %v528 = vpop.f32.mrb[0].mxu0
      %529 = vdwg.mxu0
      %v530 = vld [vmem:[%s2] sm:$0x1]
      %v532 = vlaneseq
      %v533 = vshrl.u32 %v532, 7
      %v534 = vsub.s32 0, %v533
      %v535 = vrot.slane %v530, %v534
      %v537 = vmul.f32 %v428, %v535
      %v538 = vmul.f32 %v431, %v535
      %v539 = vmul.f32 %v436, %v535
      %v540 = vmul.f32 %v439, %v535
      %v541 = vmul.f32 %v444, %v535
      %v542 = vmul.f32 %v447, %v535
      %v543 = vmul.f32 %v452, %v535
      %v544 = vmul.f32 %v455, %v535
      %v545 = vmul.f32 %v460, %v535
      %v546 = vmul.f32 %v463, %v535
      %v547 = vmul.f32 %v468, %v535
      %v548 = vmul.f32 %v471, %v535
      %v549 = vmul.f32 %v476, %v535
      %v550 = vmul.f32 %v479, %v535
      %v551 = vmul.f32 %v484, %v535
      %v552 = vmul.f32 %v487, %v535
      %v553 = vmul.f32 %v492, %v535
      %v554 = vmul.f32 %v495, %v535
      %v555 = vmul.f32 %v500, %v535
      %v556 = vmul.f32 %v503, %v535
      %v557 = vmul.f32 %v508, %v535
      %v558 = vmul.f32 %v511, %v535
      %v559 = vmul.f32 %v516, %v535
      %v560 = vmul.f32 %v519, %v535
      %v561 = vmul.f32 %v524, %v535
      %v562 = vmul.f32 %v527, %v535
      %v563 = vld [vmem:[%s3] sm:$0x1]
      %v565 = vlaneseq
      %v566 = vshrl.u32 %v565, 7
      %v567 = vsub.s32 0, %v566
      %v568 = vrot.slane %v563, %v567
      %v570 = vadd.f32 %v537, %v568
      %v571 = vadd.f32 %v538, %v568
      %v572 = vadd.f32 %v539, %v568
      %v573 = vadd.f32 %v540, %v568
      %v574 = vadd.f32 %v541, %v568
      %v575 = vadd.f32 %v542, %v568
      %v576 = vadd.f32 %v543, %v568
      %v577 = vadd.f32 %v544, %v568
      %v578 = vadd.f32 %v545, %v568
      %v579 = vadd.f32 %v546, %v568
      %v580 = vadd.f32 %v547, %v568
      %v581 = vadd.f32 %v548, %v568
      %v582 = vadd.f32 %v549, %v568
      %v583 = vadd.f32 %v550, %v568
      %v584 = vadd.f32 %v551, %v568
      %v585 = vadd.f32 %v552, %v568
      %v586 = vadd.f32 %v553, %v568
      %v587 = vadd.f32 %v554, %v568
      %v588 = vadd.f32 %v555, %v568
      %v589 = vadd.f32 %v556, %v568
      %v590 = vadd.f32 %v557, %v568
      %v591 = vadd.f32 %v558, %v568
      %v592 = vadd.f32 %v559, %v568
      %v593 = vadd.f32 %v560, %v568
      %v594 = vadd.f32 %v561, %v568
      %v595 = vadd.f32 %v562, %v568
      %v596 = vmax.f32 %v570, 0.0
      %v597 = vmax.f32 %v571, 0.0
      %v598 = vmax.f32 %v572, 0.0
      %v599 = vmax.f32 %v573, 0.0
      %v600 = vmax.f32 %v574, 0.0
      %v601 = vmax.f32 %v575, 0.0
      %v602 = vmax.f32 %v576, 0.0
      %v603 = vmax.f32 %v577, 0.0
      %v604 = vmax.f32 %v578, 0.0
      %v605 = vmax.f32 %v579, 0.0
      %v606 = vmax.f32 %v580, 0.0
      %v607 = vmax.f32 %v581, 0.0
      %v608 = vmax.f32 %v582, 0.0
      %v609 = vmax.f32 %v583, 0.0
      %v610 = vmax.f32 %v584, 0.0
      %v611 = vmax.f32 %v585, 0.0
      %v612 = vmax.f32 %v586, 0.0
      %v613 = vmax.f32 %v587, 0.0
      %v614 = vmax.f32 %v588, 0.0
      %v615 = vmax.f32 %v589, 0.0
      %v616 = vmax.f32 %v590, 0.0
      %v617 = vmax.f32 %v591, 0.0
      %v618 = vmax.f32 %v592, 0.0
      %v619 = vmax.f32 %v593, 0.0
      %v620 = vmax.f32 %v594, 0.0
      %v621 = vmax.f32 %v595, 0.0
      %622 = vst [vmem:[%s235] sm:$0xff] %v596
      %623 = vst [vmem:[%s235 + $0x8] sm:$0xff] %v597
      %624 = vst [vmem:[%s235 + $0x10] sm:$0xff] %v598
      %625 = vst [vmem:[%s235 + $0x18] sm:$0xff] %v599
      %626 = vst [vmem:[%s235 + $0x20] sm:$0xff] %v600
      %627 = vst [vmem:[%s235 + $0x28] sm:$0xff] %v601
      %628 = vst [vmem:[%s235 + $0x30] sm:$0xff] %v602
      %629 = vst [vmem:[%s235 + $0x38] sm:$0xff] %v603
      %630 = vst [vmem:[%s235 + $0x40] sm:$0xff] %v604
      %631 = vst [vmem:[%s235 + $0x48] sm:$0xff] %v605
      %632 = vst [vmem:[%s235 + $0x50] sm:$0xff] %v606
      %633 = vst [vmem:[%s235 + $0x58] sm:$0xff] %v607
      %634 = vst [vmem:[%s235 + $0x60] sm:$0xff] %v608
      %635 = vst [vmem:[%s235 + $0x68] sm:$0xff] %v609
      %636 = vst [vmem:[%s235 + $0x70] sm:$0xff] %v610
      %637 = vst [vmem:[%s235 + $0x78] sm:$0xff] %v611
      %638 = vst [vmem:[%s235 + $0x80] sm:$0xff] %v612
      %639 = vst [vmem:[%s235 + $0x88] sm:$0xff] %v613
      %640 = vst [vmem:[%s235 + $0x90] sm:$0xff] %v614
      %641 = vst [vmem:[%s235 + $0x98] sm:$0xff] %v615
      %642 = vst [vmem:[%s235 + $0xa0] sm:$0xff] %v616
      %643 = vst [vmem:[%s235 + $0xa8] sm:$0xff] %v617
      %644 = vst [vmem:[%s235 + $0xb0] sm:$0xff] %v618
      %645 = vst [vmem:[%s235 + $0xb8] sm:$0xff] %v619
      %646 = vst [vmem:[%s235 + $0xc0] sm:$0xff] %v620
      %647 = vst [vmem:[%s235 + $0xc8] sm:$0xff] %v621
      %s648 = smul.u32 26, %s20
      %p649 = scmp.lt.s32.totalorder %s19, 1
      %s650 = scalar_select %p649, %s19, 1
      %p651 = scmp.lt.s32.totalorder %s648, 25
      %s652 = scalar_select %p651, %s648, 25
      %s653 = smul.addr %s650, 26
      %s654 = sadd.s32 %s652, %s653
      %s655 = smul.addr %s654, 8
      %s656 = scalar_lea.vmem %s4, %s655
      // Predicated region
      $region37: #{depthwise_xcorr_forward.4} parent=35 // pred_check
        %p657 = pneg %p138
      $region38: #{depthwise_xcorr_forward.4} parent=35 // pred_check_branch
        %659 = sbr.rel (%p657) target = $region40
      $region39: #{depthwise_xcorr_forward.4} parent=35 // pred_region
        %s660 = smul.u32 26, %s20
      $region40: #{depthwise_xcorr_forward.4} parent=35 // pred_fallthru
        _
    $region36: #{depthwise_xcorr_forward.4} parent=5 // pred_fallthru
      _
    %p661 = scmp.le.s32.totalorder 2, %s10
    // Predicated region
    $region41: #{depthwise_xcorr_forward.4} parent=5 // pred_check
      %p662 = pneg %p661
    $region42: #{depthwise_xcorr_forward.4} parent=5 // pred_check_branch
      %664 = sbr.rel (%p662) target = $region44
    $region43: #{depthwise_xcorr_forward.4} parent=5 // pred_region
      %s665 = ssub.s32 %s10, 2
      // Predicated region
      $region45: #{depthwise_xcorr_forward.4} parent=43 // pred_check
        %p666 = pneg %p144
      $region46: #{depthwise_xcorr_forward.4} parent=43 // pred_check_branch
        %668 = sbr.rel (%p666) target = $region48
      $region47: #{depthwise_xcorr_forward.4} parent=43 // pred_region
        %s669 = smul.u32 26, %s22
        %p670 = scmp.lt.s32.totalorder %s21, 1
        %s671 = scalar_select %p670, %s21, 1
        %p672 = scmp.lt.s32.totalorder %s669, 25
        %s673 = scalar_select %p672, %s669, 25
        %s674 = smul.addr %s671, 26
        %s675 = sadd.s32 %s673, %s674
        %s676 = smul.addr %s675, 8
        %s677 = scalar_lea.vmem %s4, %s676
      $region48: #{depthwise_xcorr_forward.4} parent=43 // pred_fallthru
        _
    $region44: #{depthwise_xcorr_forward.4} parent=5 // pred_fallthru
      _
  $region6: #{depthwise_xcorr_forward.4} parent=0 // loop_footer
    %s14 = sadd.s32 1, %s10
  $region7: #{depthwise_xcorr_forward.4} parent=0 // loop_footer_branch
    %9 = sbr.rel target = $region3
  $region8: #{depthwise_xcorr_forward.4} parent=0 // loop_exit
    _

// kernel: depthwise_xcorr_forward.3
$region0: #{depthwise_xcorr_forward.3}
  #allocation0 [shape = 'u32[]', space=smem, size = 0x4, offset = 0x4, fixed_abs, tag = 'smem constant byte address 0x4 - core index']
  #allocation1 [shape = 'u32[144,128]{1,0:T(1,128)}', space=vmem, size = 0x12000, scoped, tag = 'internal scratch']
  %s0 = inlined_call_operand.vmem [shape: bf16[2,48,36], index: 0, kind: input, shape index: {}]
  %s1 = inlined_call_operand.vmem [shape: bf16[36,128], index: 1, kind: input, shape index: {}]
  %s2 = inlined_call_operand.vmem [shape: f32[1,128], index: 2, kind: input, shape index: {}]
  %s3 = inlined_call_operand.vmem [shape: f32[1,128], index: 3, kind: input, shape index: {}]
  %s4 = inlined_call_operand.vmem [shape: f32[2,48,128], index: 4, kind: output, shape index: {}]
  %s5 = sld [smem:[#allocation0]]
  $region49: #{depthwise_xcorr_forward.3} parent=0
    _
  %s7 = ssub.s32 1, %s5
  %s8 = scalar_select 0, %s7, %s5
  loop: start=0, step=1, limit=4
  $region2: #{depthwise_xcorr_forward.3} parent=0 // loop_pre_header
    _
  $region3: #{depthwise_xcorr_forward.3} parent=0 // loop_header
    %s10 = sphi 0, %s14
    %p11 = scmp.ge.s32.totalorder %s10, 4
    %s17 = sphi 0, %s29
    %s18 = sphi 0, %s25
    %s19 = sphi 0, %s17
    %s20 = sphi 0, %s18
    %s21 = sphi 0, %s19
    %s22 = sphi 0, %s20
    %s34 = sphi 0, %s36
    %s37 = sphi 0, %s34
    %s38 = sphi 0, %s37
    %s54 = sphi 0, %s38
    %s58 = sphi 0, %s58
    %s60 = sphi 0, %s58
    %s61 = sphi 0, %s60
    %s75 = sphi 0, %s61
    %s79 = sphi 0, %s79
    %s81 = sphi 0, %s79
    %s82 = sphi 0, %s81
    %s96 = sphi 0, %s82
    %s100 = sphi 0, %s100
    %s102 = sphi 0, %s100
    %s103 = sphi 0, %s102
    %s117 = sphi 0, %s103
    %s125 = sphi 0, %s127
    %s128 = sphi 0, %s125
    %s129 = sphi 0, %s128
    %s145 = sphi 0, %s129
  $region4: #{depthwise_xcorr_forward.3} parent=0 // loop_header_branch
    %13 = sbr.rel (%p11) target = $region8
  $region5: #{depthwise_xcorr_forward.3} parent=0 // loop_body
    %s15 = ssub.s32 %s10, 1
    %s16 = ssub.s32 %s10, 2
    %s23 = sadd.s32 1, %s18
    %p24 = scmp.ge.s32.totalorder %s23, 1
    %s25 = scalar_select %p24, 0, %s23
    %s26 = sadd.s32 1, %s17
    %s27 = scalar_select %p24, %s26, %s17
    %p28 = scmp.ge.s32.totalorder %s27, 2
    %s29 = scalar_select %p28, 0, %s27
    %s30 = ssub.s32 %s17, %s29
    %s31 = ssub.s32 %s18, %s25
    %s32 = sor.u32 %s30, %s31
    %p33 = scmp.eq.s32.totalorder %s32, 0
    %s35 = sadd.s32 %s34, 1
    %s36 = scalar_select %p33, %s34, %s35
    %p39 = pneg %p33
    %p40 = scmp.eq.s32.totalorder %s10, 1
    %p41 = por %p39, %p40
    %p42 = scmp.ne.s32.totalorder %s34, %s37
    %p43 = scmp.eq.s32.totalorder %s10, 0
    %p44 = por %p42, %p43
    %p45 = scmp.ne.s32.totalorder %s34, %s37
    %p46 = scmp.eq.s32.totalorder %s15, 1
    %p47 = por %p45, %p46
    %p48 = scmp.ne.s32.totalorder %s37, %s38
    %p49 = scmp.eq.s32.totalorder %s15, 0
    %p50 = por %p48, %p49
    %p51 = scmp.ne.s32.totalorder %s37, %s38
    %p52 = scmp.eq.s32.totalorder %s16, 1
    %p53 = por %p51, %p52
    %p55 = scmp.ne.s32.totalorder %s38, %s54
    %p56 = scmp.eq.s32.totalorder %s16, 0
    %p57 = por %p55, %p56
    %s59 = sadd.s32 %s58, 1
    %p62 = scmp.eq.s32.totalorder %s10, 1
    %p63 = scmp.ne.s32.totalorder %s58, %s60
    %p64 = scmp.eq.s32.totalorder %s10, 0
    %p65 = por %p63, %p64
    %p66 = scmp.ne.s32.totalorder %s58, %s60
    %p67 = scmp.eq.s32.totalorder %s15, 1
    %p68 = por %p66, %p67
    %p69 = scmp.ne.s32.totalorder %s60, %s61
    %p70 = scmp.eq.s32.totalorder %s15, 0
    %p71 = por %p69, %p70
    %p72 = scmp.ne.s32.totalorder %s60, %s61
    %p73 = scmp.eq.s32.totalorder %s16, 1
    %p74 = por %p72, %p73
    %p76 = scmp.ne.s32.totalorder %s61, %s75
    %p77 = scmp.eq.s32.totalorder %s16, 0
    %p78 = por %p76, %p77
    %s80 = sadd.s32 %s79, 1
    %p83 = scmp.eq.s32.totalorder %s10, 1
    %p84 = scmp.ne.s32.totalorder %s79, %s81
    %p85 = scmp.eq.s32.totalorder %s10, 0
    %p86 = por %p84, %p85
    %p87 = scmp.ne.s32.totalorder %s79, %s81
    %p88 = scmp.eq.s32.totalorder %s15, 1
    %p89 = por %p87, %p88
    %p90 = scmp.ne.s32.totalorder %s81, %s82
    %p91 = scmp.eq.s32.totalorder %s15, 0
    %p92 = por %p90, %p91
    %p93 = scmp.ne.s32.totalorder %s81, %s82
    %p94 = scmp.eq.s32.totalorder %s16, 1
    %p95 = por %p93, %p94
    %p97 = scmp.ne.s32.totalorder %s82, %s96
    %p98 = scmp.eq.s32.totalorder %s16, 0
    %p99 = por %p97, %p98
    %s101 = sadd.s32 %s100, 1
    %p104 = scmp.eq.s32.totalorder %s10, 1
    %p105 = scmp.ne.s32.totalorder %s100, %s102
    %p106 = scmp.eq.s32.totalorder %s10, 0
    %p107 = por %p105, %p106
    %p108 = scmp.ne.s32.totalorder %s100, %s102
    %p109 = scmp.eq.s32.totalorder %s15, 1
    %p110 = por %p108, %p109
    %p111 = scmp.ne.s32.totalorder %s102, %s103
    %p112 = scmp.eq.s32.totalorder %s15, 0
    %p113 = por %p111, %p112
    %p114 = scmp.ne.s32.totalorder %s102, %s103
    %p115 = scmp.eq.s32.totalorder %s16, 1
    %p116 = por %p114, %p115
    %p118 = scmp.ne.s32.totalorder %s103, %s117
    %p119 = scmp.eq.s32.totalorder %s16, 0
    %p120 = por %p118, %p119
    %s121 = ssub.s32 %s17, %s29
    %s122 = ssub.s32 %s18, %s25
    %s123 = sor.u32 %s121, %s122
    %p124 = scmp.eq.s32.totalorder %s123, 0
    %s126 = sadd.s32 %s125, 1
    %s127 = scalar_select %p124, %s125, %s126
    %p130 = pneg %p124
    %p131 = scmp.eq.s32.totalorder %s10, 1
    %p132 = por %p130, %p131
    %p133 = scmp.ne.s32.totalorder %s125, %s128
    %p134 = scmp.eq.s32.totalorder %s10, 0
    %p135 = por %p133, %p134
    %p136 = scmp.ne.s32.totalorder %s125, %s128
    %p137 = scmp.eq.s32.totalorder %s15, 1
    %p138 = por %p136, %p137
    %p139 = scmp.ne.s32.totalorder %s128, %s129
    %p140 = scmp.eq.s32.totalorder %s15, 0
    %p141 = por %p139, %p140
    %p142 = scmp.ne.s32.totalorder %s128, %s129
    %p143 = scmp.eq.s32.totalorder %s16, 1
    %p144 = por %p142, %p143
    %p146 = scmp.ne.s32.totalorder %s129, %s145
    %p147 = scmp.eq.s32.totalorder %s16, 0
    %p148 = por %p146, %p147
    %p149 = scmp.le.s32.totalorder 1, %s10
    %p150 = scmp.lt.s32.totalorder %s10, 3
    %p151 = pnand %p149, %p150
    %p152 = pneg %p151
    // Predicated region
    $region9: #{depthwise_xcorr_forward.3} parent=5 // pred_check
      _
    $region10: #{depthwise_xcorr_forward.3} parent=5 // pred_check_branch
      %154 = sbr.rel (%p151) target = $region12
    $region11: #{depthwise_xcorr_forward.3} parent=5 // pred_region
      %s155 = ssub.s32 %s10, 1
      // Predicated region
      $region13: #{depthwise_xcorr_forward.3} parent=11 // pred_check
        %p156 = pneg %p71
      $region14: #{depthwise_xcorr_forward.3} parent=11 // pred_check_branch
        %158 = sbr.rel (%p156) target = $region16
      $region15: #{depthwise_xcorr_forward.3} parent=11 // pred_region
        _
      $region16: #{depthwise_xcorr_forward.3} parent=11 // pred_fallthru
        _
      // Predicated region
      $region17: #{depthwise_xcorr_forward.3} parent=11 // pred_check
        %p159 = pneg %p92
      $region18: #{depthwise_xcorr_forward.3} parent=11 // pred_check_branch
        %161 = sbr.rel (%p159) target = $region20
      $region19: #{depthwise_xcorr_forward.3} parent=11 // pred_region
        _
      $region20: #{depthwise_xcorr_forward.3} parent=11 // pred_fallthru
        _
      // Predicated region
      $region21: #{depthwise_xcorr_forward.3} parent=11 // pred_check
        %p162 = pneg %p113
      $region22: #{depthwise_xcorr_forward.3} parent=11 // pred_check_branch
        %164 = sbr.rel (%p162) target = $region24
      $region23: #{depthwise_xcorr_forward.3} parent=11 // pred_region
        _
      $region24: #{depthwise_xcorr_forward.3} parent=11 // pred_fallthru
        _
    $region12: #{depthwise_xcorr_forward.3} parent=5 // pred_fallthru
      _
    %p165 = scmp.lt.s32.totalorder %s10, 2
    // Predicated region
    $region25: #{depthwise_xcorr_forward.3} parent=5 // pred_check
      %p166 = pneg %p165
    $region26: #{depthwise_xcorr_forward.3} parent=5 // pred_check_branch
      %168 = sbr.rel (%p166) target = $region28
    $region27: #{depthwise_xcorr_forward.3} parent=5 // pred_region
      // Predicated region
      $region29: #{depthwise_xcorr_forward.3} parent=27 // pred_check
        %p169 = pneg %p44
      $region30: #{depthwise_xcorr_forward.3} parent=27 // pred_check_branch
        %171 = sbr.rel (%p169) target = $region32
      $region31: #{depthwise_xcorr_forward.3} parent=27 // pred_region
        %s172 = smul.u32 6, %s18
        %p173 = scmp.lt.s32.totalorder %s17, 1
        %s174 = scalar_select %p173, %s17, 1
        %p175 = scmp.lt.s32.totalorder %s172, 5
        %s176 = scalar_select %p175, %s172, 5
        %s177 = smul.addr %s174, 6
        %s178 = sadd.s32 %s176, %s177
        %s179 = smul.addr %s178, 4
        %s180 = scalar_lea.vmem %s0, %s179
        %s181 = smul.u32 6, %s18
      $region32: #{depthwise_xcorr_forward.3} parent=27 // pred_fallthru
        _
    $region28: #{depthwise_xcorr_forward.3} parent=5 // pred_fallthru
      _
    %p182 = scmp.le.s32.totalorder 1, %s10
    %p183 = scmp.lt.s32.totalorder %s10, 3
    %p184 = pnand %p182, %p183
    %p185 = pneg %p184
    // Predicated region
    $region33: #{depthwise_xcorr_forward.3} parent=5 // pred_check
      _
    $region34: #{depthwise_xcorr_forward.3} parent=5 // pred_check_branch
      %187 = sbr.rel (%p184) target = $region36
    $region35: #{depthwise_xcorr_forward.3} parent=5 // pred_region
      %s188 = ssub.s32 %s10, 1
      %s189 = smul.u32 6, %s20
      %p190 = scmp.lt.s32.totalorder %s19, 1
      %s191 = scalar_select %p190, %s19, 1
      %p192 = scmp.lt.s32.totalorder %s189, 5
      %s193 = scalar_select %p192, %s189, 5
      %s194 = smul.addr %s191, 6
      %s195 = sadd.s32 %s193, %s194
      %s196 = smul.addr %s195, 4
      %s197 = scalar_lea.vmem %s0, %s196
      %p198 = pneg %p50
      %p199 = pneg %p47
      %p200 = pneg %p71
      %p201 = pneg %p68
      %p202 = pneg %p92
      %p203 = pneg %p89
      %p204 = pneg %p113
      %p205 = pneg %p110
      %p206 = pneg %p141
      %p207 = pneg %p138
      %s208 = smul.u32 6, %s20
      %p209 = scmp.lt.s32.totalorder %s19, 1
      %s210 = scalar_select %p209, %s19, 1
      %p211 = scmp.lt.s32.totalorder %s208, 5
      %s212 = scalar_select %p211, %s208, 5
      %s213 = smul.addr %s210, 6
      %s214 = sadd.s32 %s212, %s213
      %s215 = smul.addr %s214, 8
      %s216 = scalar_lea.vmem %s4, %s215
      %s217 = smul.u32 6, %s20
      %p218 = scmp.lt.s32.totalorder %s19, 1
      %s219 = scalar_select %p218, %s19, 1
      %p220 = scmp.lt.s32.totalorder %s217, 5
      %s221 = scalar_select %p220, %s217, 5
      %s222 = smul.addr %s219, 6
      %s223 = sadd.s32 %s221, %s222
      %s224 = smul.addr %s223, 4
      %s225 = scalar_lea.vmem %s0, %s224
      %s226 = smul.u32 6, %s20
      %s227 = smul.u32 6, %s20
      %p228 = scmp.lt.s32.totalorder %s19, 1
      %s229 = scalar_select %p228, %s19, 1
      %p230 = scmp.lt.s32.totalorder %s227, 5
      %s231 = scalar_select %p230, %s227, 5
      %s232 = smul.addr %s229, 6
      %s233 = sadd.s32 %s231, %s232
      %s234 = smul.addr %s233, 8
      %s235 = scalar_lea.vmem %s4, %s234
      %s236 = smul.u32 6, %s20
      %v238 = vld [vmem:[%s225] sm:$0xf]
      %v239 = vld [vmem:[%s225 + $0x4] sm:$0xf]
      %v240 = vld [vmem:[%s225 + $0x8] sm:$0xf]
      %v241 = vld [vmem:[%s225 + $0xc] sm:$0xf]
      %v242 = vld [vmem:[%s225 + $0x10] sm:$0xf]
      %v243 = vld [vmem:[%s225 + $0x14] sm:$0xf]
      %v244 = vld [vmem:[%s1] sm:$0xf]
      %v245 = vld [vmem:[%s1 + $0x4] sm:$0xf]
      %v246 = vld [vmem:[%s1 + $0x8] sm:$0xf]
      %v247 = vld [vmem:[%s1 + $0xc] sm:$0xf]
      %v248 = vld [vmem:[%s1 + $0x10] sm:$0x3]
      %v255 = vunpack.c.l.b16 %v238
      %v256 = vunpack.c.l.b16 %v239
      %v257 = vunpack.c.l.b16 %v240
      %v258 = vunpack.c.l.b16 %v241
      %v259 = vunpack.c.l.b16 %v242
      %v260 = vunpack.c.l.b16 %v243
      %v261 = vpack.c.b16 %v256, %v255
      %v262 = vpack.c.b16 %v258, %v257
      %v263 = vpack.c.b16 %v260, %v259
      %v269 = vunpack.c.l.b16 %v244
      %v270 = vunpack.c.l.b16 %v245
      %v271 = vunpack.c.l.b16 %v246
      %v272 = vunpack.c.l.b16 %v247
      %v273 = vunpack.c.l.b16 %v248
      %v274 = vpack.c.b16 %v270, %v269
      %v275 = vpack.c.b16 %v272, %v271
      %v276 = vpack.c.b16 %v273, %v273
      %vm279 = vcmask 293888
      %v281 = vsel %vm279, %v261, 0
      %v284 = vsel %vm279, %v262, 0
      %v287 = vsel %vm279, %v263, 0
      %vm289 = vcmask 1041408
      %v291 = vsel %vm289, %v276, 0
      %293 = vmatprep.subr.bf16.mxu0 0
      %294 = vmatpush1.bf16.msra.mxu0 %v274
      %295 = vmatprep.subr.bf16.mxu0 0
      %296 = vmatpush1.bf16.msra.mxu0 %v275
      %297 = vmatprep.subr.bf16.mxu0 0
      %298 = vmatpush1.bf16.msra.mxu0 %v291
      %299 = vmatprep.subr.bf16.mxu0 0
      %300 = vmatpush1.bf16.msra.mxu0 0
      %301 = vmatprep.subr.bf16.mxu0 0
      %302 = vmatpush1.bf16.msra.mxu0 0
      %303 = vmatprep.subr.bf16.mxu0 0
      %304 = vmatpush1.bf16.msra.mxu0 0
      %305 = vmatprep.subr.bf16.mxu0 0
      %306 = vmatpush1.bf16.msra.mxu0 0
      %307 = vmatprep.subr.bf16.mxu0 0
      %308 = vmatpush1.bf16.msra.mxu0 0
      %309 = vmatprep.subr.bf16.mxu0 0
      %310 = vmatpush1.bf16.msra.mxu0 0
      %311 = vmatprep.subr.bf16.mxu0 0
      %312 = vmatpush1.bf16.msra.mxu0 0
      %313 = vmatprep.subr.bf16.mxu0 0
      %314 = vmatpush1.bf16.msra.mxu0 0
      %315 = vmatprep.subr.bf16.mxu0 0
      %316 = vmatpush1.bf16.msra.mxu0 0
      %317 = vmatprep.subr.bf16.mxu0 0
      %318 = vmatpush1.bf16.msra.mxu0 0
      %319 = vmatprep.subr.bf16.mxu0 0
      %320 = vmatpush1.bf16.msra.mxu0 0
      %321 = vmatprep.subr.bf16.mxu0 0
      %322 = vmatpush1.bf16.msra.mxu0 0
      %323 = vmatprep.subr.bf16.mxu0 0
      %324 = vmatpush1.bf16.msra.mxu0 0
      %325 = vmatprep.mubr.bf16.mxu0 0
      %326 = vmatmul.mubr.bf16.gmra.mrb[0].mxu0 %v281
      %v327 = vpop.f32.mrb[0].mxu0
      %v328 = vadd.f32 0.0, %v327
      %v329 = vpop.f32.mrb[0].mxu0
      %v330 = vpop.f32.mrb[0].mxu0
      %v331 = vadd.f32 0.0, %v330
      %v332 = vpop.f32.mrb[0].mxu0
      %333 = vmatprep.mubr.bf16.mxu0 0
      %334 = vmatmul.mubr.bf16.gmra.mrb[0].mxu0 %v284
      %v335 = vpop.f32.mrb[0].mxu0
      %v336 = vadd.f32 0.0, %v335
      %v337 = vpop.f32.mrb[0].mxu0
      %v338 = vpop.f32.mrb[0].mxu0
      %v339 = vadd.f32 0.0, %v338
      %v340 = vpop.f32.mrb[0].mxu0
      %341 = vmatprep.mubr.bf16.mxu0 0
      %342 = vmatmul.mubr.bf16.gmra.mrb[0].mxu0 %v287
      %v343 = vpop.f32.mrb[0].mxu0
      %v344 = vadd.f32 0.0, %v343
      %v345 = vpop.f32.mrb[0].mxu0
      %v346 = vpop.f32.mrb[0].mxu0
      %v347 = vadd.f32 0.0, %v346
      %v348 = vpop.f32.mrb[0].mxu0
      %349 = vdwg.mxu0
      %v350 = vld [vmem:[%s2] sm:$0x1]
      %v352 = vlaneseq
      %v353 = vshrl.u32 %v352, 7
      %v354 = vsub.s32 0, %v353
      %v355 = vrot.slane %v350, %v354
      %v357 = vmul.f32 %v328, %v355
      %v358 = vmul.f32 %v331, %v355
      %v359 = vmul.f32 %v336, %v355
      %v360 = vmul.f32 %v339, %v355
      %v361 = vmul.f32 %v344, %v355
      %v362 = vmul.f32 %v347, %v355
      %v363 = vld [vmem:[%s3] sm:$0x1]
      %v365 = vlaneseq
      %v366 = vshrl.u32 %v365, 7
      %v367 = vsub.s32 0, %v366
      %v368 = vrot.slane %v363, %v367
      %v370 = vadd.f32 %v357, %v368
      %v371 = vadd.f32 %v358, %v368
      %v372 = vadd.f32 %v359, %v368
      %v373 = vadd.f32 %v360, %v368
      %v374 = vadd.f32 %v361, %v368
      %v375 = vadd.f32 %v362, %v368
      %v376 = vmax.f32 %v370, 0.0
      %v377 = vmax.f32 %v371, 0.0
      %v378 = vmax.f32 %v372, 0.0
      %v379 = vmax.f32 %v373, 0.0
      %v380 = vmax.f32 %v374, 0.0
      %v381 = vmax.f32 %v375, 0.0
      %382 = vst [vmem:[%s235] sm:$0xff] %v376
      %383 = vst [vmem:[%s235 + $0x8] sm:$0xff] %v377
      %384 = vst [vmem:[%s235 + $0x10] sm:$0xff] %v378
      %385 = vst [vmem:[%s235 + $0x18] sm:$0xff] %v379
      %386 = vst [vmem:[%s235 + $0x20] sm:$0xff] %v380
      %387 = vst [vmem:[%s235 + $0x28] sm:$0xff] %v381
      %s388 = smul.u32 6, %s20
      %p389 = scmp.lt.s32.totalorder %s19, 1
      %s390 = scalar_select %p389, %s19, 1
      %p391 = scmp.lt.s32.totalorder %s388, 5
      %s392 = scalar_select %p391, %s388, 5
      %s393 = smul.addr %s390, 6
      %s394 = sadd.s32 %s392, %s393
      %s395 = smul.addr %s394, 8
      %s396 = scalar_lea.vmem %s4, %s395
      // Predicated region
      $region37: #{depthwise_xcorr_forward.3} parent=35 // pred_check
        %p397 = pneg %p138
      $region38: #{depthwise_xcorr_forward.3} parent=35 // pred_check_branch
        %399 = sbr.rel (%p397) target = $region40
      $region39: #{depthwise_xcorr_forward.3} parent=35 // pred_region
        %s400 = smul.u32 6, %s20
      $region40: #{depthwise_xcorr_forward.3} parent=35 // pred_fallthru
        _
    $region36: #{depthwise_xcorr_forward.3} parent=5 // pred_fallthru
      _
    %p401 = scmp.le.s32.totalorder 2, %s10
    // Predicated region
    $region41: #{depthwise_xcorr_forward.3} parent=5 // pred_check
      %p402 = pneg %p401
    $region42: #{depthwise_xcorr_forward.3} parent=5 // pred_check_branch
      %404 = sbr.rel (%p402) target = $region44
    $region43: #{depthwise_xcorr_forward.3} parent=5 // pred_region
      %s405 = ssub.s32 %s10, 2
      // Predicated region
      $region45: #{depthwise_xcorr_forward.3} parent=43 // pred_check
        %p406 = pneg %p144
      $region46: #{depthwise_xcorr_forward.3} parent=43 // pred_check_branch
        %408 = sbr.rel (%p406) target = $region48
      $region47: #{depthwise_xcorr_forward.3} parent=43 // pred_region
        %s409 = smul.u32 6, %s22
        %p410 = scmp.lt.s32.totalorder %s21, 1
        %s411 = scalar_select %p410, %s21, 1
        %p412 = scmp.lt.s32.totalorder %s409, 5
        %s413 = scalar_select %p412, %s409, 5
        %s414 = smul.addr %s411, 6
        %s415 = sadd.s32 %s413, %s414
        %s416 = smul.addr %s415, 8
        %s417 = scalar_lea.vmem %s4, %s416
      $region48: #{depthwise_xcorr_forward.3} parent=43 // pred_fallthru
        _
    $region44: #{depthwise_xcorr_forward.3} parent=5 // pred_fallthru
      _
  $region6: #{depthwise_xcorr_forward.3} parent=0 // loop_footer
    %s14 = sadd.s32 1, %s10
  $region7: #{depthwise_xcorr_forward.3} parent=0 // loop_footer_branch
    %9 = sbr.rel target = $region3
  $region8: #{depthwise_xcorr_forward.3} parent=0 // loop_exit
    _

// kernel: depthwise_xcorr_forward.5
$region0: #{depthwise_xcorr_forward.5}
  #allocation0 [shape = 'u32[]', space=smem, size = 0x4, offset = 0x4, fixed_abs, tag = 'smem constant byte address 0x4 - core index']
  #allocation1 [shape = 'u32[144,128]{1,0:T(1,128)}', space=vmem, size = 0x12000, scoped, tag = 'internal scratch']
  %s0 = inlined_call_operand.vmem [shape: f32[2,208,128], index: 0, kind: input, shape index: {}]
  %s1 = inlined_call_operand.vmem [shape: f32[2,48,128], index: 1, kind: input, shape index: {}]
  %s2 = inlined_call_operand.vmem [shape: bf16[128,128], index: 2, kind: input, shape index: {}]
  %s3 = inlined_call_operand.vmem [shape: f32[1,128], index: 3, kind: input, shape index: {}]
  %s4 = inlined_call_operand.vmem [shape: f32[1,128], index: 4, kind: input, shape index: {}]
  %s5 = inlined_call_operand.vmem [shape: bf16[128,128], index: 5, kind: input, shape index: {}]
  %s6 = inlined_call_operand.vmem [shape: f32[1,128], index: 6, kind: input, shape index: {}]
  %s7 = inlined_call_operand.vmem [shape: f32[2,144,128], index: 7, kind: output, shape index: {}]
  %s8 = sld [smem:[#allocation0]]
  $region61: #{depthwise_xcorr_forward.5} parent=0
    _
  %s10 = ssub.s32 1, %s8
  %s11 = scalar_select 0, %s10, %s8
  loop: start=0, step=1, limit=4
  $region2: #{depthwise_xcorr_forward.5} parent=0 // loop_pre_header
    _
  $region3: #{depthwise_xcorr_forward.5} parent=0 // loop_header
    %s13 = sphi 0, %s17
    %p14 = scmp.ge.s32.totalorder %s13, 4
    %s20 = sphi 0, %s32
    %s21 = sphi 0, %s28
    %s22 = sphi 0, %s20
    %s23 = sphi 0, %s21
    %s24 = sphi 0, %s22
    %s25 = sphi 0, %s23
    %s35 = sphi 0, %s37
    %s38 = sphi 0, %s35
    %s39 = sphi 0, %s38
    %s55 = sphi 0, %s39
    %s61 = sphi 0, %s63
    %s64 = sphi 0, %s61
    %s65 = sphi 0, %s64
    %s81 = sphi 0, %s65
    %s85 = sphi 0, %s85
    %s87 = sphi 0, %s85
    %s88 = sphi 0, %s87
    %s102 = sphi 0, %s88
    %s106 = sphi 0, %s106
    %s108 = sphi 0, %s106
    %s109 = sphi 0, %s108
    %s123 = sphi 0, %s109
    %s127 = sphi 0, %s127
    %s129 = sphi 0, %s127
    %s130 = sphi 0, %s129
    %s144 = sphi 0, %s130
    %s148 = sphi 0, %s148
    %s150 = sphi 0, %s148
    %s151 = sphi 0, %s150
    %s165 = sphi 0, %s151
    %s169 = sphi 0, %s169
    %s171 = sphi 0, %s169
    %s172 = sphi 0, %s171
    %s186 = sphi 0, %s172
    %s194 = sphi 0, %s196
    %s197 = sphi 0, %s194
    %s198 = sphi 0, %s197
    %s214 = sphi 0, %s198
  $region4: #{depthwise_xcorr_forward.5} parent=0 // loop_header_branch
    %16 = sbr.rel (%p14) target = $region8
  $region5: #{depthwise_xcorr_forward.5} parent=0 // loop_body
    %s18 = ssub.s32 %s13, 1
    %s19 = ssub.s32 %s13, 2
    %s26 = sadd.s32 1, %s21
    %p27 = scmp.ge.s32.totalorder %s26, 1
    %s28 = scalar_select %p27, 0, %s26
    %s29 = sadd.s32 1, %s20
    %s30 = scalar_select %p27, %s29, %s20
    %p31 = scmp.ge.s32.totalorder %s30, 2
    %s32 = scalar_select %p31, 0, %s30
    %s33 = ssub.s32 %s20, %s32
    %p34 = scmp.eq.s32.totalorder %s33, 0
    %s36 = sadd.s32 %s35, 1
    %s37 = scalar_select %p34, %s35, %s36
    %p40 = pneg %p34
    %p41 = scmp.eq.s32.totalorder %s13, 1
    %p42 = por %p40, %p41
    %p43 = scmp.ne.s32.totalorder %s35, %s38
    %p44 = scmp.eq.s32.totalorder %s13, 0
    %p45 = por %p43, %p44
    %p46 = scmp.ne.s32.totalorder %s35, %s38
    %p47 = scmp.eq.s32.totalorder %s18, 1
    %p48 = por %p46, %p47
    %p49 = scmp.ne.s32.totalorder %s38, %s39
    %p50 = scmp.eq.s32.totalorder %s18, 0
    %p51 = por %p49, %p50
    %p52 = scmp.ne.s32.totalorder %s38, %s39
    %p53 = scmp.eq.s32.totalorder %s19, 1
    %p54 = por %p52, %p53
    %p56 = scmp.ne.s32.totalorder %s39, %s55
    %p57 = scmp.eq.s32.totalorder %s19, 0
    %p58 = por %p56, %p57
    %s59 = ssub.s32 %s20, %s32
    %p60 = scmp.eq.s32.totalorder %s59, 0
    %s62 = sadd.s32 %s61, 1
    %s63 = scalar_select %p60, %s61, %s62
    %p66 = pneg %p60
    %p67 = scmp.eq.s32.totalorder %s13, 1
    %p68 = por %p66, %p67
    %p69 = scmp.ne.s32.totalorder %s61, %s64
    %p70 = scmp.eq.s32.totalorder %s13, 0
    %p71 = por %p69, %p70
    %p72 = scmp.ne.s32.totalorder %s61, %s64
    %p73 = scmp.eq.s32.totalorder %s18, 1
    %p74 = por %p72, %p73
    %p75 = scmp.ne.s32.totalorder %s64, %s65
    %p76 = scmp.eq.s32.totalorder %s18, 0
    %p77 = por %p75, %p76
    %p78 = scmp.ne.s32.totalorder %s64, %s65
    %p79 = scmp.eq.s32.totalorder %s19, 1
    %p80 = por %p78, %p79
    %p82 = scmp.ne.s32.totalorder %s65, %s81
    %p83 = scmp.eq.s32.totalorder %s19, 0
    %p84 = por %p82, %p83
    %s86 = sadd.s32 %s85, 1
    %p89 = scmp.eq.s32.totalorder %s13, 1
    %p90 = scmp.ne.s32.totalorder %s85, %s87
    %p91 = scmp.eq.s32.totalorder %s13, 0
    %p92 = por %p90, %p91
    %p93 = scmp.ne.s32.totalorder %s85, %s87
    %p94 = scmp.eq.s32.totalorder %s18, 1
    %p95 = por %p93, %p94
    %p96 = scmp.ne.s32.totalorder %s87, %s88
    %p97 = scmp.eq.s32.totalorder %s18, 0
    %p98 = por %p96, %p97
    %p99 = scmp.ne.s32.totalorder %s87, %s88
    %p100 = scmp.eq.s32.totalorder %s19, 1
    %p101 = por %p99, %p100
    %p103 = scmp.ne.s32.totalorder %s88, %s102
    %p104 = scmp.eq.s32.totalorder %s19, 0
    %p105 = por %p103, %p104
    %s107 = sadd.s32 %s106, 1
    %p110 = scmp.eq.s32.totalorder %s13, 1
    %p111 = scmp.ne.s32.totalorder %s106, %s108
    %p112 = scmp.eq.s32.totalorder %s13, 0
    %p113 = por %p111, %p112
    %p114 = scmp.ne.s32.totalorder %s106, %s108
    %p115 = scmp.eq.s32.totalorder %s18, 1
    %p116 = por %p114, %p115
    %p117 = scmp.ne.s32.totalorder %s108, %s109
    %p118 = scmp.eq.s32.totalorder %s18, 0
    %p119 = por %p117, %p118
    %p120 = scmp.ne.s32.totalorder %s108, %s109
    %p121 = scmp.eq.s32.totalorder %s19, 1
    %p122 = por %p120, %p121
    %p124 = scmp.ne.s32.totalorder %s109, %s123
    %p125 = scmp.eq.s32.totalorder %s19, 0
    %p126 = por %p124, %p125
    %s128 = sadd.s32 %s127, 1
    %p131 = scmp.eq.s32.totalorder %s13, 1
    %p132 = scmp.ne.s32.totalorder %s127, %s129
    %p133 = scmp.eq.s32.totalorder %s13, 0
    %p134 = por %p132, %p133
    %p135 = scmp.ne.s32.totalorder %s127, %s129
    %p136 = scmp.eq.s32.totalorder %s18, 1
    %p137 = por %p135, %p136
    %p138 = scmp.ne.s32.totalorder %s129, %s130
    %p139 = scmp.eq.s32.totalorder %s18, 0
    %p140 = por %p138, %p139
    %p141 = scmp.ne.s32.totalorder %s129, %s130
    %p142 = scmp.eq.s32.totalorder %s19, 1
    %p143 = por %p141, %p142
    %p145 = scmp.ne.s32.totalorder %s130, %s144
    %p146 = scmp.eq.s32.totalorder %s19, 0
    %p147 = por %p145, %p146
    %s149 = sadd.s32 %s148, 1
    %p152 = scmp.eq.s32.totalorder %s13, 1
    %p153 = scmp.ne.s32.totalorder %s148, %s150
    %p154 = scmp.eq.s32.totalorder %s13, 0
    %p155 = por %p153, %p154
    %p156 = scmp.ne.s32.totalorder %s148, %s150
    %p157 = scmp.eq.s32.totalorder %s18, 1
    %p158 = por %p156, %p157
    %p159 = scmp.ne.s32.totalorder %s150, %s151
    %p160 = scmp.eq.s32.totalorder %s18, 0
    %p161 = por %p159, %p160
    %p162 = scmp.ne.s32.totalorder %s150, %s151
    %p163 = scmp.eq.s32.totalorder %s19, 1
    %p164 = por %p162, %p163
    %p166 = scmp.ne.s32.totalorder %s151, %s165
    %p167 = scmp.eq.s32.totalorder %s19, 0
    %p168 = por %p166, %p167
    %s170 = sadd.s32 %s169, 1
    %p173 = scmp.eq.s32.totalorder %s13, 1
    %p174 = scmp.ne.s32.totalorder %s169, %s171
    %p175 = scmp.eq.s32.totalorder %s13, 0
    %p176 = por %p174, %p175
    %p177 = scmp.ne.s32.totalorder %s169, %s171
    %p178 = scmp.eq.s32.totalorder %s18, 1
    %p179 = por %p177, %p178
    %p180 = scmp.ne.s32.totalorder %s171, %s172
    %p181 = scmp.eq.s32.totalorder %s18, 0
    %p182 = por %p180, %p181
    %p183 = scmp.ne.s32.totalorder %s171, %s172
    %p184 = scmp.eq.s32.totalorder %s19, 1
    %p185 = por %p183, %p184
    %p187 = scmp.ne.s32.totalorder %s172, %s186
    %p188 = scmp.eq.s32.totalorder %s19, 0
    %p189 = por %p187, %p188
    %s190 = ssub.s32 %s20, %s32
    %s191 = ssub.s32 %s21, %s28
    %s192 = sor.u32 %s190, %s191
    %p193 = scmp.eq.s32.totalorder %s192, 0
    %s195 = sadd.s32 %s194, 1
    %s196 = scalar_select %p193, %s194, %s195
    %p199 = pneg %p193
    %p200 = scmp.eq.s32.totalorder %s13, 1
    %p201 = por %p199, %p200
    %p202 = scmp.ne.s32.totalorder %s194, %s197
    %p203 = scmp.eq.s32.totalorder %s13, 0
    %p204 = por %p202, %p203
    %p205 = scmp.ne.s32.totalorder %s194, %s197
    %p206 = scmp.eq.s32.totalorder %s18, 1
    %p207 = por %p205, %p206
    %p208 = scmp.ne.s32.totalorder %s197, %s198
    %p209 = scmp.eq.s32.totalorder %s18, 0
    %p210 = por %p208, %p209
    %p211 = scmp.ne.s32.totalorder %s197, %s198
    %p212 = scmp.eq.s32.totalorder %s19, 1
    %p213 = por %p211, %p212
    %p215 = scmp.ne.s32.totalorder %s198, %s214
    %p216 = scmp.eq.s32.totalorder %s19, 0
    %p217 = por %p215, %p216
    %p218 = scmp.le.s32.totalorder 1, %s13
    %p219 = scmp.lt.s32.totalorder %s13, 3
    %p220 = pnand %p218, %p219
    %p221 = pneg %p220
    // Predicated region
    $region9: #{depthwise_xcorr_forward.5} parent=5 // pred_check
      _
    $region10: #{depthwise_xcorr_forward.5} parent=5 // pred_check_branch
      %223 = sbr.rel (%p220) target = $region12
    $region11: #{depthwise_xcorr_forward.5} parent=5 // pred_region
      %s224 = ssub.s32 %s13, 1
      // Predicated region
      $region13: #{depthwise_xcorr_forward.5} parent=11 // pred_check
        %p225 = pneg %p98
      $region14: #{depthwise_xcorr_forward.5} parent=11 // pred_check_branch
        %227 = sbr.rel (%p225) target = $region16
      $region15: #{depthwise_xcorr_forward.5} parent=11 // pred_region
        _
      $region16: #{depthwise_xcorr_forward.5} parent=11 // pred_fallthru
        _
      // Predicated region
      $region17: #{depthwise_xcorr_forward.5} parent=11 // pred_check
        %p228 = pneg %p119
      $region18: #{depthwise_xcorr_forward.5} parent=11 // pred_check_branch
        %230 = sbr.rel (%p228) target = $region20
      $region19: #{depthwise_xcorr_forward.5} parent=11 // pred_region
        _
      $region20: #{depthwise_xcorr_forward.5} parent=11 // pred_fallthru
        _
      // Predicated region
      $region21: #{depthwise_xcorr_forward.5} parent=11 // pred_check
        %p231 = pneg %p140
      $region22: #{depthwise_xcorr_forward.5} parent=11 // pred_check_branch
        %233 = sbr.rel (%p231) target = $region24
      $region23: #{depthwise_xcorr_forward.5} parent=11 // pred_region
        _
      $region24: #{depthwise_xcorr_forward.5} parent=11 // pred_fallthru
        _
      // Predicated region
      $region25: #{depthwise_xcorr_forward.5} parent=11 // pred_check
        %p234 = pneg %p161
      $region26: #{depthwise_xcorr_forward.5} parent=11 // pred_check_branch
        %236 = sbr.rel (%p234) target = $region28
      $region27: #{depthwise_xcorr_forward.5} parent=11 // pred_region
        _
      $region28: #{depthwise_xcorr_forward.5} parent=11 // pred_fallthru
        _
      // Predicated region
      $region29: #{depthwise_xcorr_forward.5} parent=11 // pred_check
        %p237 = pneg %p182
      $region30: #{depthwise_xcorr_forward.5} parent=11 // pred_check_branch
        %239 = sbr.rel (%p237) target = $region32
      $region31: #{depthwise_xcorr_forward.5} parent=11 // pred_region
        _
      $region32: #{depthwise_xcorr_forward.5} parent=11 // pred_fallthru
        _
    $region12: #{depthwise_xcorr_forward.5} parent=5 // pred_fallthru
      _
    %p240 = scmp.lt.s32.totalorder %s13, 2
    // Predicated region
    $region33: #{depthwise_xcorr_forward.5} parent=5 // pred_check
      %p241 = pneg %p240
    $region34: #{depthwise_xcorr_forward.5} parent=5 // pred_check_branch
      %243 = sbr.rel (%p241) target = $region36
    $region35: #{depthwise_xcorr_forward.5} parent=5 // pred_region
      // Predicated region
      $region37: #{depthwise_xcorr_forward.5} parent=35 // pred_check
        %p244 = pneg %p45
      $region38: #{depthwise_xcorr_forward.5} parent=35 // pred_check_branch
        %246 = sbr.rel (%p244) target = $region40
      $region39: #{depthwise_xcorr_forward.5} parent=35 // pred_region
        %p247 = scmp.lt.s32.totalorder %s20, 1
        %s248 = scalar_select %p247, %s20, 1
        %s249 = smul.addr %s248, 26
        %s250 = smul.addr %s249, 8
        %s251 = scalar_lea.vmem %s0, %s250
      $region40: #{depthwise_xcorr_forward.5} parent=35 // pred_fallthru
        _
      // Predicated region
      $region41: #{depthwise_xcorr_forward.5} parent=35 // pred_check
        %p252 = pneg %p71
      $region42: #{depthwise_xcorr_forward.5} parent=35 // pred_check_branch
        %254 = sbr.rel (%p252) target = $region44
      $region43: #{depthwise_xcorr_forward.5} parent=35 // pred_region
        %p255 = scmp.lt.s32.totalorder %s20, 1
        %s256 = scalar_select %p255, %s20, 1
        %s257 = smul.addr %s256, 6
        %s258 = smul.addr %s257, 8
        %s259 = scalar_lea.vmem %s1, %s258
      $region44: #{depthwise_xcorr_forward.5} parent=35 // pred_fallthru
        _
    $region36: #{depthwise_xcorr_forward.5} parent=5 // pred_fallthru
      _
    %p260 = scmp.le.s32.totalorder 1, %s13
    %p261 = scmp.lt.s32.totalorder %s13, 3
    %p262 = pnand %p260, %p261
    %p263 = pneg %p262
    // Predicated region
    $region45: #{depthwise_xcorr_forward.5} parent=5 // pred_check
      _
    $region46: #{depthwise_xcorr_forward.5} parent=5 // pred_check_branch
      %265 = sbr.rel (%p262) target = $region48
    $region47: #{depthwise_xcorr_forward.5} parent=5 // pred_region
      %s266 = ssub.s32 %s13, 1
      %p267 = scmp.lt.s32.totalorder %s22, 1
      %s268 = scalar_select %p267, %s22, 1
      %s269 = smul.addr %s268, 26
      %s270 = smul.addr %s269, 8
      %s271 = scalar_lea.vmem %s0, %s270
      %p272 = pneg %p51
      %p273 = pneg %p48
      %p274 = scmp.lt.s32.totalorder %s22, 1
      %s275 = scalar_select %p274, %s22, 1
      %s276 = smul.addr %s275, 6
      %s277 = smul.addr %s276, 8
      %s278 = scalar_lea.vmem %s1, %s277
      %p279 = pneg %p77
      %p280 = pneg %p74
      %p281 = pneg %p98
      %p282 = pneg %p95
      %p283 = pneg %p119
      %p284 = pneg %p116
      %p285 = pneg %p140
      %p286 = pneg %p137
      %p287 = pneg %p161
      %p288 = pneg %p158
      %p289 = pneg %p182
      %p290 = pneg %p179
      %p291 = pneg %p210
      %p292 = pneg %p207
      %s293 = smul.u32 18, %s23
      %p294 = scmp.lt.s32.totalorder %s22, 1
      %s295 = scalar_select %p294, %s22, 1
      %p296 = scmp.lt.s32.totalorder %s293, 17
      %s297 = scalar_select %p296, %s293, 17
      %s298 = smul.addr %s295, 18
      %s299 = sadd.s32 %s297, %s298
      %s300 = smul.addr %s299, 8
      %s301 = scalar_lea.vmem %s7, %s300
      %p302 = scmp.lt.s32.totalorder %s22, 1
      %s303 = scalar_select %p302, %s22, 1
      %s304 = smul.addr %s303, 26
      %s305 = smul.addr %s304, 8
      %s306 = scalar_lea.vmem %s0, %s305
      %p307 = scmp.lt.s32.totalorder %s22, 1
      %s308 = scalar_select %p307, %s22, 1
      %s309 = smul.addr %s308, 6
      %s310 = smul.addr %s309, 8
      %s311 = scalar_lea.vmem %s1, %s310
      %s312 = smul.u32 18, %s23
      %p313 = scmp.lt.s32.totalorder %s22, 1
      %s314 = scalar_select %p313, %s22, 1
      %p315 = scmp.lt.s32.totalorder %s312, 17
      %s316 = scalar_select %p315, %s312, 17
      %s317 = smul.addr %s314, 18
      %s318 = sadd.s32 %s316, %s317
      %s319 = smul.addr %s318, 8
      %s320 = scalar_lea.vmem %s7, %s319
      %s321 = smul.u32 18, %s23
      %s323 = smul.u32 %s23, 144
      %v324 = vld [vmem:[%s311] sm:$0x1]
      %s325 = scalar_lea.vmem %s306, %s323
      %v326 = vld [vmem:[%s325] sm:$0xff]
      %v327 = vld [vmem:[%s325 + $0x8] sm:$0xff]
      %v328 = vld [vmem:[%s325 + $0x10] sm:$0xff]
      %v329 = vld [vmem:[%s325 + $0x18] sm:$0xff]
      %v330 = vld [vmem:[%s325 + $0x20] sm:$0xff]
      %v331 = vld [vmem:[%s325 + $0x28] sm:$0xff]
      %v332 = vld [vmem:[%s325 + $0x30] sm:$0xff]
      %v333 = vld [vmem:[%s325 + $0x38] sm:$0xff]
      %v334 = vld [vmem:[%s325 + $0x40] sm:$0xff]
      %v335 = vld [vmem:[%s325 + $0x48] sm:$0xff]
      %v336 = vld [vmem:[%s325 + $0x50] sm:$0xff]
      %v337 = vld [vmem:[%s325 + $0x58] sm:$0xff]
      %v338 = vld [vmem:[%s325 + $0x60] sm:$0xff]
      %v339 = vld [vmem:[%s325 + $0x68] sm:$0xff]
      %v340 = vld [vmem:[%s325 + $0x70] sm:$0xff]
      %v341 = vld [vmem:[%s325 + $0x78] sm:$0xff]
      %v342 = vld [vmem:[%s325 + $0x80] sm:$0xff]
      %v343 = vld [vmem:[%s325 + $0x88] sm:$0xff]
      %v344 = vlaneseq
      %v345 = vshrl.u32 %v344, 7
      %v346 = vsub.s32 0, %v345
      %v347 = vrot.slane %v324, %v346
      %v348 = vmul.f32 %v326, %v347
      %v349 = vmul.f32 %v327, %v347
      %v350 = vmul.f32 %v328, %v347
      %v351 = vmul.f32 %v329, %v347
      %v352 = vmul.f32 %v330, %v347
      %v353 = vmul.f32 %v331, %v347
      %v354 = vmul.f32 %v332, %v347
      %v355 = vmul.f32 %v333, %v347
      %v356 = vmul.f32 %v334, %v347
      %v357 = vmul.f32 %v335, %v347
      %v358 = vmul.f32 %v336, %v347
      %v359 = vmul.f32 %v337, %v347
      %v360 = vmul.f32 %v338, %v347
      %v361 = vmul.f32 %v339, %v347
      %v362 = vmul.f32 %v340, %v347
      %v363 = vmul.f32 %v341, %v347
      %v364 = vmul.f32 %v342, %v347
      %v365 = vmul.f32 %v343, %v347
      %v366 = vadd.f32 %v348, 0.0
      %v367 = vadd.f32 %v349, 0.0
      %v368 = vadd.f32 %v350, 0.0
      %v369 = vadd.f32 %v351, 0.0
      %v370 = vadd.f32 %v352, 0.0
      %v371 = vadd.f32 %v353, 0.0
      %v372 = vadd.f32 %v354, 0.0
      %v373 = vadd.f32 %v355, 0.0
      %v374 = vadd.f32 %v356, 0.0
      %v375 = vadd.f32 %v357, 0.0
      %v376 = vadd.f32 %v358, 0.0
      %v377 = vadd.f32 %v359, 0.0
      %v378 = vadd.f32 %v360, 0.0
      %v379 = vadd.f32 %v361, 0.0
      %v380 = vadd.f32 %v362, 0.0
      %v381 = vadd.f32 %v363, 0.0
      %v382 = vadd.f32 %v364, 0.0
      %v383 = vadd.f32 %v365, 0.0
      %v384 = vld [vmem:[%s311 + $0x1] sm:$0x1]
      %s385 = sadd.s32 %s323, 1
      %s386 = scalar_lea.vmem %s306, %s385
      %v387 = vld [vmem:[%s386] sm:$0xff]
      %v388 = vld [vmem:[%s386 + $0x8] sm:$0xff]
      %v389 = vld [vmem:[%s386 + $0x10] sm:$0xff]
      %v390 = vld [vmem:[%s386 + $0x18] sm:$0xff]
      %v391 = vld [vmem:[%s386 + $0x20] sm:$0xff]
      %v392 = vld [vmem:[%s386 + $0x28] sm:$0xff]
      %v393 = vld [vmem:[%s386 + $0x30] sm:$0xff]
      %v394 = vld [vmem:[%s386 + $0x38] sm:$0xff]
      %v395 = vld [vmem:[%s386 + $0x40] sm:$0xff]
      %v396 = vld [vmem:[%s386 + $0x48] sm:$0xff]
      %v397 = vld [vmem:[%s386 + $0x50] sm:$0xff]
      %v398 = vld [vmem:[%s386 + $0x58] sm:$0xff]
      %v399 = vld [vmem:[%s386 + $0x60] sm:$0xff]
      %v400 = vld [vmem:[%s386 + $0x68] sm:$0xff]
      %v401 = vld [vmem:[%s386 + $0x70] sm:$0xff]
      %v402 = vld [vmem:[%s386 + $0x78] sm:$0xff]
      %v403 = vld [vmem:[%s386 + $0x80] sm:$0xff]
      %v404 = vld [vmem:[%s386 + $0x88] sm:$0xff]
      %v405 = vlaneseq
      %v406 = vshrl.u32 %v405, 7
      %v407 = vsub.s32 0, %v406
      %v408 = vrot.slane %v384, %v407
      %v409 = vmul.f32 %v387, %v408
      %v410 = vmul.f32 %v388, %v408
      %v411 = vmul.f32 %v389, %v408
      %v412 = vmul.f32 %v390, %v408
      %v413 = vmul.f32 %v391, %v408
      %v414 = vmul.f32 %v392, %v408
      %v415 = vmul.f32 %v393, %v408
      %v416 = vmul.f32 %v394, %v408
      %v417 = vmul.f32 %v395, %v408
      %v418 = vmul.f32 %v396, %v408
      %v419 = vmul.f32 %v397, %v408
      %v420 = vmul.f32 %v398, %v408
      %v421 = vmul.f32 %v399, %v408
      %v422 = vmul.f32 %v400, %v408
      %v423 = vmul.f32 %v401, %v408
      %v424 = vmul.f32 %v402, %v408
      %v425 = vmul.f32 %v403, %v408
      %v426 = vmul.f32 %v404, %v408
      %v427 = vadd.f32 %v366, %v409
      %v428 = vadd.f32 %v367, %v410
      %v429 = vadd.f32 %v368, %v411
      %v430 = vadd.f32 %v369, %v412
      %v431 = vadd.f32 %v370, %v413
      %v432 = vadd.f32 %v371, %v414
      %v433 = vadd.f32 %v372, %v415
      %v434 = vadd.f32 %v373, %v416
      %v435 = vadd.f32 %v374, %v417
      %v436 = vadd.f32 %v375, %v418
      %v437 = vadd.f32 %v376, %v419
      %v438 = vadd.f32 %v377, %v420
      %v439 = vadd.f32 %v378, %v421
      %v440 = vadd.f32 %v379, %v422
      %v441 = vadd.f32 %v380, %v423
      %v442 = vadd.f32 %v381, %v424
      %v443 = vadd.f32 %v382, %v425
      %v444 = vadd.f32 %v383, %v426
      %v445 = vld [vmem:[%s311 + $0x2] sm:$0x1]
      %s446 = sadd.s32 %s323, 2
      %s447 = scalar_lea.vmem %s306, %s446
      %v448 = vld [vmem:[%s447] sm:$0xff]
      %v449 = vld [vmem:[%s447 + $0x8] sm:$0xff]
      %v450 = vld [vmem:[%s447 + $0x10] sm:$0xff]
      %v451 = vld [vmem:[%s447 + $0x18] sm:$0xff]
      %v452 = vld [vmem:[%s447 + $0x20] sm:$0xff]
      %v453 = vld [vmem:[%s447 + $0x28] sm:$0xff]
      %v454 = vld [vmem:[%s447 + $0x30] sm:$0xff]
      %v455 = vld [vmem:[%s447 + $0x38] sm:$0xff]
      %v456 = vld [vmem:[%s447 + $0x40] sm:$0xff]
      %v457 = vld [vmem:[%s447 + $0x48] sm:$0xff]
      %v458 = vld [vmem:[%s447 + $0x50] sm:$0xff]
      %v459 = vld [vmem:[%s447 + $0x58] sm:$0xff]
      %v460 = vld [vmem:[%s447 + $0x60] sm:$0xff]
      %v461 = vld [vmem:[%s447 + $0x68] sm:$0xff]
      %v462 = vld [vmem:[%s447 + $0x70] sm:$0xff]
      %v463 = vld [vmem:[%s447 + $0x78] sm:$0xff]
      %v464 = vld [vmem:[%s447 + $0x80] sm:$0xff]
      %v465 = vld [vmem:[%s447 + $0x88] sm:$0xff]
      %v466 = vlaneseq
      %v467 = vshrl.u32 %v466, 7
      %v468 = vsub.s32 0, %v467
      %v469 = vrot.slane %v445, %v468
      %v470 = vmul.f32 %v448, %v469
      %v471 = vmul.f32 %v449, %v469
      %v472 = vmul.f32 %v450, %v469
      %v473 = vmul.f32 %v451, %v469
      %v474 = vmul.f32 %v452, %v469
      %v475 = vmul.f32 %v453, %v469
      %v476 = vmul.f32 %v454, %v469
      %v477 = vmul.f32 %v455, %v469
      %v478 = vmul.f32 %v456, %v469
      %v479 = vmul.f32 %v457, %v469
      %v480 = vmul.f32 %v458, %v469
      %v481 = vmul.f32 %v459, %v469
      %v482 = vmul.f32 %v460, %v469
      %v483 = vmul.f32 %v461, %v469
      %v484 = vmul.f32 %v462, %v469
      %v485 = vmul.f32 %v463, %v469
      %v486 = vmul.f32 %v464, %v469
      %v487 = vmul.f32 %v465, %v469
      %v488 = vadd.f32 %v427, %v470
      %v489 = vadd.f32 %v428, %v471
      %v490 = vadd.f32 %v429, %v472
      %v491 = vadd.f32 %v430, %v473
      %v492 = vadd.f32 %v431, %v474
      %v493 = vadd.f32 %v432, %v475
      %v494 = vadd.f32 %v433, %v476
      %v495 = vadd.f32 %v434, %v477
      %v496 = vadd.f32 %v435, %v478
      %v497 = vadd.f32 %v436, %v479
      %v498 = vadd.f32 %v437, %v480
      %v499 = vadd.f32 %v438, %v481
      %v500 = vadd.f32 %v439, %v482
      %v501 = vadd.f32 %v440, %v483
      %v502 = vadd.f32 %v441, %v484
      %v503 = vadd.f32 %v442, %v485
      %v504 = vadd.f32 %v443, %v486
      %v505 = vadd.f32 %v444, %v487
      %v506 = vld [vmem:[%s311 + $0x3] sm:$0x1]
      %s507 = sadd.s32 %s323, 3
      %s508 = scalar_lea.vmem %s306, %s507
      %v509 = vld [vmem:[%s508] sm:$0xff]
      %v510 = vld [vmem:[%s508 + $0x8] sm:$0xff]
      %v511 = vld [vmem:[%s508 + $0x10] sm:$0xff]
      %v512 = vld [vmem:[%s508 + $0x18] sm:$0xff]
      %v513 = vld [vmem:[%s508 + $0x20] sm:$0xff]
      %v514 = vld [vmem:[%s508 + $0x28] sm:$0xff]
      %v515 = vld [vmem:[%s508 + $0x30] sm:$0xff]
      %v516 = vld [vmem:[%s508 + $0x38] sm:$0xff]
      %v517 = vld [vmem:[%s508 + $0x40] sm:$0xff]
      %v518 = vld [vmem:[%s508 + $0x48] sm:$0xff]
      %v519 = vld [vmem:[%s508 + $0x50] sm:$0xff]
      %v520 = vld [vmem:[%s508 + $0x58] sm:$0xff]
      %v521 = vld [vmem:[%s508 + $0x60] sm:$0xff]
      %v522 = vld [vmem:[%s508 + $0x68] sm:$0xff]
      %v523 = vld [vmem:[%s508 + $0x70] sm:$0xff]
      %v524 = vld [vmem:[%s508 + $0x78] sm:$0xff]
      %v525 = vld [vmem:[%s508 + $0x80] sm:$0xff]
      %v526 = vld [vmem:[%s508 + $0x88] sm:$0xff]
      %v527 = vlaneseq
      %v528 = vshrl.u32 %v527, 7
      %v529 = vsub.s32 0, %v528
      %v530 = vrot.slane %v506, %v529
      %v531 = vmul.f32 %v509, %v530
      %v532 = vmul.f32 %v510, %v530
      %v533 = vmul.f32 %v511, %v530
      %v534 = vmul.f32 %v512, %v530
      %v535 = vmul.f32 %v513, %v530
      %v536 = vmul.f32 %v514, %v530
      %v537 = vmul.f32 %v515, %v530
      %v538 = vmul.f32 %v516, %v530
      %v539 = vmul.f32 %v517, %v530
      %v540 = vmul.f32 %v518, %v530
      %v541 = vmul.f32 %v519, %v530
      %v542 = vmul.f32 %v520, %v530
      %v543 = vmul.f32 %v521, %v530
      %v544 = vmul.f32 %v522, %v530
      %v545 = vmul.f32 %v523, %v530
      %v546 = vmul.f32 %v524, %v530
      %v547 = vmul.f32 %v525, %v530
      %v548 = vmul.f32 %v526, %v530
      %v549 = vadd.f32 %v488, %v531
      %v550 = vadd.f32 %v489, %v532
      %v551 = vadd.f32 %v490, %v533
      %v552 = vadd.f32 %v491, %v534
      %v553 = vadd.f32 %v492, %v535
      %v554 = vadd.f32 %v493, %v536
      %v555 = vadd.f32 %v494, %v537
      %v556 = vadd.f32 %v495, %v538
      %v557 = vadd.f32 %v496, %v539
      %v558 = vadd.f32 %v497, %v540
      %v559 = vadd.f32 %v498, %v541
      %v560 = vadd.f32 %v499, %v542
      %v561 = vadd.f32 %v500, %v543
      %v562 = vadd.f32 %v501, %v544
      %v563 = vadd.f32 %v502, %v545
      %v564 = vadd.f32 %v503, %v546
      %v565 = vadd.f32 %v504, %v547
      %v566 = vadd.f32 %v505, %v548
      %v567 = vld [vmem:[%s311 + $0x4] sm:$0x1]
      %s568 = sadd.s32 %s323, 4
      %s569 = scalar_lea.vmem %s306, %s568
      %v570 = vld [vmem:[%s569] sm:$0xff]
      %v571 = vld [vmem:[%s569 + $0x8] sm:$0xff]
      %v572 = vld [vmem:[%s569 + $0x10] sm:$0xff]
      %v573 = vld [vmem:[%s569 + $0x18] sm:$0xff]
      %v574 = vld [vmem:[%s569 + $0x20] sm:$0xff]
      %v575 = vld [vmem:[%s569 + $0x28] sm:$0xff]
      %v576 = vld [vmem:[%s569 + $0x30] sm:$0xff]
      %v577 = vld [vmem:[%s569 + $0x38] sm:$0xff]
      %v578 = vld [vmem:[%s569 + $0x40] sm:$0xff]
      %v579 = vld [vmem:[%s569 + $0x48] sm:$0xff]
      %v580 = vld [vmem:[%s569 + $0x50] sm:$0xff]
      %v581 = vld [vmem:[%s569 + $0x58] sm:$0xff]
      %v582 = vld [vmem:[%s569 + $0x60] sm:$0xff]
      %v583 = vld [vmem:[%s569 + $0x68] sm:$0xff]
      %v584 = vld [vmem:[%s569 + $0x70] sm:$0xff]
      %v585 = vld [vmem:[%s569 + $0x78] sm:$0xff]
      %v586 = vld [vmem:[%s569 + $0x80] sm:$0xff]
      %v587 = vld [vmem:[%s569 + $0x88] sm:$0xff]
      %v588 = vlaneseq
      %v589 = vshrl.u32 %v588, 7
      %v590 = vsub.s32 0, %v589
      %v591 = vrot.slane %v567, %v590
      %v592 = vmul.f32 %v570, %v591
      %v593 = vmul.f32 %v571, %v591
      %v594 = vmul.f32 %v572, %v591
      %v595 = vmul.f32 %v573, %v591
      %v596 = vmul.f32 %v574, %v591
      %v597 = vmul.f32 %v575, %v591
      %v598 = vmul.f32 %v576, %v591
      %v599 = vmul.f32 %v577, %v591
      %v600 = vmul.f32 %v578, %v591
      %v601 = vmul.f32 %v579, %v591
      %v602 = vmul.f32 %v580, %v591
      %v603 = vmul.f32 %v581, %v591
      %v604 = vmul.f32 %v582, %v591
      %v605 = vmul.f32 %v583, %v591
      %v606 = vmul.f32 %v584, %v591
      %v607 = vmul.f32 %v585, %v591
      %v608 = vmul.f32 %v586, %v591
      %v609 = vmul.f32 %v587, %v591
      %v610 = vadd.f32 %v549, %v592
      %v611 = vadd.f32 %v550, %v593
      %v612 = vadd.f32 %v551, %v594
      %v613 = vadd.f32 %v552, %v595
      %v614 = vadd.f32 %v553, %v596
      %v615 = vadd.f32 %v554, %v597
      %v616 = vadd.f32 %v555, %v598
      %v617 = vadd.f32 %v556, %v599
      %v618 = vadd.f32 %v557, %v600
      %v619 = vadd.f32 %v558, %v601
      %v620 = vadd.f32 %v559, %v602
      %v621 = vadd.f32 %v560, %v603
      %v622 = vadd.f32 %v561, %v604
      %v623 = vadd.f32 %v562, %v605
      %v624 = vadd.f32 %v563, %v606
      %v625 = vadd.f32 %v564, %v607
      %v626 = vadd.f32 %v565, %v608
      %v627 = vadd.f32 %v566, %v609
      %v628 = vld [vmem:[%s311 + $0x7] sm:$0x1]
      %s629 = sadd.s32 %s323, 15
      %s630 = scalar_lea.vmem %s306, %s629
      %v631 = vld [vmem:[%s630] sm:$0xff]
      %v632 = vld [vmem:[%s630 + $0x8] sm:$0xff]
      %v633 = vld [vmem:[%s630 + $0x10] sm:$0xff]
      %v634 = vld [vmem:[%s630 + $0x18] sm:$0xff]
      %v635 = vld [vmem:[%s630 + $0x20] sm:$0xff]
      %v636 = vld [vmem:[%s630 + $0x28] sm:$0xff]
      %v637 = vld [vmem:[%s630 + $0x30] sm:$0xff]
      %v638 = vld [vmem:[%s630 + $0x38] sm:$0xff]
      %v639 = vld [vmem:[%s630 + $0x40] sm:$0xff]
      %v640 = vld [vmem:[%s630 + $0x48] sm:$0xff]
      %v641 = vld [vmem:[%s630 + $0x50] sm:$0xff]
      %v642 = vld [vmem:[%s630 + $0x58] sm:$0xff]
      %v643 = vld [vmem:[%s630 + $0x60] sm:$0xff]
      %v644 = vld [vmem:[%s630 + $0x68] sm:$0xff]
      %v645 = vld [vmem:[%s630 + $0x70] sm:$0xff]
      %v646 = vld [vmem:[%s630 + $0x78] sm:$0xff]
      %v647 = vld [vmem:[%s630 + $0x80] sm:$0xff]
      %v648 = vld [vmem:[%s630 + $0x88] sm:$0xff]
      %v649 = vlaneseq
      %v650 = vshrl.u32 %v649, 7
      %v651 = vsub.s32 0, %v650
      %v652 = vrot.slane %v628, %v651
      %v653 = vmul.f32 %v631, %v652
      %v654 = vmul.f32 %v632, %v652
      %v655 = vmul.f32 %v633, %v652
      %v656 = vmul.f32 %v634, %v652
      %v657 = vmul.f32 %v635, %v652
      %v658 = vmul.f32 %v636, %v652
      %v659 = vmul.f32 %v637, %v652
      %v660 = vmul.f32 %v638, %v652
      %v661 = vmul.f32 %v639, %v652
      %v662 = vmul.f32 %v640, %v652
      %v663 = vmul.f32 %v641, %v652
      %v664 = vmul.f32 %v642, %v652
      %v665 = vmul.f32 %v643, %v652
      %v666 = vmul.f32 %v644, %v652
      %v667 = vmul.f32 %v645, %v652
      %v668 = vmul.f32 %v646, %v652
      %v669 = vmul.f32 %v647, %v652
      %v670 = vmul.f32 %v648, %v652
      %v671 = vadd.f32 %v610, %v653
      %v672 = vadd.f32 %v611, %v654
      %v673 = vadd.f32 %v612, %v655
      %v674 = vadd.f32 %v613, %v656
      %v675 = vadd.f32 %v614, %v657
      %v676 = vadd.f32 %v615, %v658
      %v677 = vadd.f32 %v616, %v659
      %v678 = vadd.f32 %v617, %v660
      %v679 = vadd.f32 %v618, %v661
      %v680 = vadd.f32 %v619, %v662
      %v681 = vadd.f32 %v620, %v663
      %v682 = vadd.f32 %v621, %v664
      %v683 = vadd.f32 %v622, %v665
      %v684 = vadd.f32 %v623, %v666
      %v685 = vadd.f32 %v624, %v667
      %v686 = vadd.f32 %v625, %v668
      %v687 = vadd.f32 %v626, %v669
      %v688 = vadd.f32 %v627, %v670
      %v689 = vld [vmem:[%s311 + $0x8] sm:$0x1]
      %s690 = sadd.s32 %s323, 16
      %s691 = scalar_lea.vmem %s306, %s690
      %v692 = vld [vmem:[%s691] sm:$0xff]
      %v693 = vld [vmem:[%s691 + $0x8] sm:$0xff]
      %v694 = vld [vmem:[%s691 + $0x10] sm:$0xff]
      %v695 = vld [vmem:[%s691 + $0x18] sm:$0xff]
      %v696 = vld [vmem:[%s691 + $0x20] sm:$0xff]
      %v697 = vld [vmem:[%s691 + $0x28] sm:$0xff]
      %v698 = vld [vmem:[%s691 + $0x30] sm:$0xff]
      %v699 = vld [vmem:[%s691 + $0x38] sm:$0xff]
      %v700 = vld [vmem:[%s691 + $0x40] sm:$0xff]
      %v701 = vld [vmem:[%s691 + $0x48] sm:$0xff]
      %v702 = vld [vmem:[%s691 + $0x50] sm:$0xff]
      %v703 = vld [vmem:[%s691 + $0x58] sm:$0xff]
      %v704 = vld [vmem:[%s691 + $0x60] sm:$0xff]
      %v705 = vld [vmem:[%s691 + $0x68] sm:$0xff]
      %v706 = vld [vmem:[%s691 + $0x70] sm:$0xff]
      %v707 = vld [vmem:[%s691 + $0x78] sm:$0xff]
      %v708 = vld [vmem:[%s691 + $0x80] sm:$0xff]
      %v709 = vld [vmem:[%s691 + $0x88] sm:$0xff]
      %v710 = vlaneseq
      %v711 = vshrl.u32 %v710, 7
      %v712 = vsub.s32 0, %v711
      %v713 = vrot.slane %v689, %v712
      %v714 = vmul.f32 %v692, %v713
      %v715 = vmul.f32 %v693, %v713
      %v716 = vmul.f32 %v694, %v713
      %v717 = vmul.f32 %v695, %v713
      %v718 = vmul.f32 %v696, %v713
      %v719 = vmul.f32 %v697, %v713
      %v720 = vmul.f32 %v698, %v713
      %v721 = vmul.f32 %v699, %v713
      %v722 = vmul.f32 %v700, %v713
      %v723 = vmul.f32 %v701, %v713
      %v724 = vmul.f32 %v702, %v713
      %v725 = vmul.f32 %v703, %v713
      %v726 = vmul.f32 %v704, %v713
      %v727 = vmul.f32 %v705, %v713
      %v728 = vmul.f32 %v706, %v713
      %v729 = vmul.f32 %v707, %v713
      %v730 = vmul.f32 %v708, %v713
      %v731 = vmul.f32 %v709, %v713
      %v732 = vadd.f32 %v671, %v714
      %v733 = vadd.f32 %v672, %v715
      %v734 = vadd.f32 %v673, %v716
      %v735 = vadd.f32 %v674, %v717
      %v736 = vadd.f32 %v675, %v718
      %v737 = vadd.f32 %v676, %v719
      %v738 = vadd.f32 %v677, %v720
      %v739 = vadd.f32 %v678, %v721
      %v740 = vadd.f32 %v679, %v722
      %v741 = vadd.f32 %v680, %v723
      %v742 = vadd.f32 %v681, %v724
      %v743 = vadd.f32 %v682, %v725
      %v744 = vadd.f32 %v683, %v726
      %v745 = vadd.f32 %v684, %v727
      %v746 = vadd.f32 %v685, %v728
      %v747 = vadd.f32 %v686, %v729
      %v748 = vadd.f32 %v687, %v730
      %v749 = vadd.f32 %v688, %v731
      %v750 = vld [vmem:[%s311 + $0x9] sm:$0x1]
      %s751 = sadd.s32 %s323, 17
      %s752 = scalar_lea.vmem %s306, %s751
      %v753 = vld [vmem:[%s752] sm:$0xff]
      %v754 = vld [vmem:[%s752 + $0x8] sm:$0xff]
      %v755 = vld [vmem:[%s752 + $0x10] sm:$0xff]
      %v756 = vld [vmem:[%s752 + $0x18] sm:$0xff]
      %v757 = vld [vmem:[%s752 + $0x20] sm:$0xff]
      %v758 = vld [vmem:[%s752 + $0x28] sm:$0xff]
      %v759 = vld [vmem:[%s752 + $0x30] sm:$0xff]
      %v760 = vld [vmem:[%s752 + $0x38] sm:$0xff]
      %v761 = vld [vmem:[%s752 + $0x40] sm:$0xff]
      %v762 = vld [vmem:[%s752 + $0x48] sm:$0xff]
      %v763 = vld [vmem:[%s752 + $0x50] sm:$0xff]
      %v764 = vld [vmem:[%s752 + $0x58] sm:$0xff]
      %v765 = vld [vmem:[%s752 + $0x60] sm:$0xff]
      %v766 = vld [vmem:[%s752 + $0x68] sm:$0xff]
      %v767 = vld [vmem:[%s752 + $0x70] sm:$0xff]
      %v768 = vld [vmem:[%s752 + $0x78] sm:$0xff]
      %v769 = vld [vmem:[%s752 + $0x80] sm:$0xff]
      %v770 = vld [vmem:[%s752 + $0x88] sm:$0xff]
      %v771 = vlaneseq
      %v772 = vshrl.u32 %v771, 7
      %v773 = vsub.s32 0, %v772
      %v774 = vrot.slane %v750, %v773
      %v775 = vmul.f32 %v753, %v774
      %v776 = vmul.f32 %v754, %v774
      %v777 = vmul.f32 %v755, %v774
      %v778 = vmul.f32 %v756, %v774
      %v779 = vmul.f32 %v757, %v774
      %v780 = vmul.f32 %v758, %v774
      %v781 = vmul.f32 %v759, %v774
      %v782 = vmul.f32 %v760, %v774
      %v783 = vmul.f32 %v761, %v774
      %v784 = vmul.f32 %v762, %v774
      %v785 = vmul.f32 %v763, %v774
      %v786 = vmul.f32 %v764, %v774
      %v787 = vmul.f32 %v765, %v774
      %v788 = vmul.f32 %v766, %v774
      %v789 = vmul.f32 %v767, %v774
      %v790 = vmul.f32 %v768, %v774
      %v791 = vmul.f32 %v769, %v774
      %v792 = vmul.f32 %v770, %v774
      %v793 = vadd.f32 %v732, %v775
      %v794 = vadd.f32 %v733, %v776
      %v795 = vadd.f32 %v734, %v777
      %v796 = vadd.f32 %v735, %v778
      %v797 = vadd.f32 %v736, %v779
      %v798 = vadd.f32 %v737, %v780
      %v799 = vadd.f32 %v738, %v781
      %v800 = vadd.f32 %v739, %v782
      %v801 = vadd.f32 %v740, %v783
      %v802 = vadd.f32 %v741, %v784
      %v803 = vadd.f32 %v742, %v785
      %v804 = vadd.f32 %v743, %v786
      %v805 = vadd.f32 %v744, %v787
      %v806 = vadd.f32 %v745, %v788
      %v807 = vadd.f32 %v746, %v789
      %v808 = vadd.f32 %v747, %v790
      %v809 = vadd.f32 %v748, %v791
      %v810 = vadd.f32 %v749, %v792
      %v811 = vld [vmem:[%s311 + $0xa] sm:$0x1]
      %s812 = sadd.s32 %s323, 18
      %s813 = scalar_lea.vmem %s306, %s812
      %v814 = vld [vmem:[%s813] sm:$0xff]
      %v815 = vld [vmem:[%s813 + $0x8] sm:$0xff]
      %v816 = vld [vmem:[%s813 + $0x10] sm:$0xff]
      %v817 = vld [vmem:[%s813 + $0x18] sm:$0xff]
      %v818 = vld [vmem:[%s813 + $0x20] sm:$0xff]
      %v819 = vld [vmem:[%s813 + $0x28] sm:$0xff]
      %v820 = vld [vmem:[%s813 + $0x30] sm:$0xff]
      %v821 = vld [vmem:[%s813 + $0x38] sm:$0xff]
      %v822 = vld [vmem:[%s813 + $0x40] sm:$0xff]
      %v823 = vld [vmem:[%s813 + $0x48] sm:$0xff]
      %v824 = vld [vmem:[%s813 + $0x50] sm:$0xff]
      %v825 = vld [vmem:[%s813 + $0x58] sm:$0xff]
      %v826 = vld [vmem:[%s813 + $0x60] sm:$0xff]
      %v827 = vld [vmem:[%s813 + $0x68] sm:$0xff]
      %v828 = vld [vmem:[%s813 + $0x70] sm:$0xff]
      %v829 = vld [vmem:[%s813 + $0x78] sm:$0xff]
      %v830 = vld [vmem:[%s813 + $0x80] sm:$0xff]
      %v831 = vld [vmem:[%s813 + $0x88] sm:$0xff]
      %v832 = vlaneseq
      %v833 = vshrl.u32 %v832, 7
      %v834 = vsub.s32 0, %v833
      %v835 = vrot.slane %v811, %v834
      %v836 = vmul.f32 %v814, %v835
      %v837 = vmul.f32 %v815, %v835
      %v838 = vmul.f32 %v816, %v835
      %v839 = vmul.f32 %v817, %v835
      %v840 = vmul.f32 %v818, %v835
      %v841 = vmul.f32 %v819, %v835
      %v842 = vmul.f32 %v820, %v835
      %v843 = vmul.f32 %v821, %v835
      %v844 = vmul.f32 %v822, %v835
      %v845 = vmul.f32 %v823, %v835
      %v846 = vmul.f32 %v824, %v835
      %v847 = vmul.f32 %v825, %v835
      %v848 = vmul.f32 %v826, %v835
      %v849 = vmul.f32 %v827, %v835
      %v850 = vmul.f32 %v828, %v835
      %v851 = vmul.f32 %v829, %v835
      %v852 = vmul.f32 %v830, %v835
      %v853 = vmul.f32 %v831, %v835
      %v854 = vadd.f32 %v793, %v836
      %v855 = vadd.f32 %v794, %v837
      %v856 = vadd.f32 %v795, %v838
      %v857 = vadd.f32 %v796, %v839
      %v858 = vadd.f32 %v797, %v840
      %v859 = vadd.f32 %v798, %v841
      %v860 = vadd.f32 %v799, %v842
      %v861 = vadd.f32 %v800, %v843
      %v862 = vadd.f32 %v801, %v844
      %v863 = vadd.f32 %v802, %v845
      %v864 = vadd.f32 %v803, %v846
      %v865 = vadd.f32 %v804, %v847
      %v866 = vadd.f32 %v805, %v848
      %v867 = vadd.f32 %v806, %v849
      %v868 = vadd.f32 %v807, %v850
      %v869 = vadd.f32 %v808, %v851
      %v870 = vadd.f32 %v809, %v852
      %v871 = vadd.f32 %v810, %v853
      %v872 = vld [vmem:[%s311 + $0xb] sm:$0x1]
      %s873 = sadd.s32 %s323, 19
      %s874 = scalar_lea.vmem %s306, %s873
      %v875 = vld [vmem:[%s874] sm:$0xff]
      %v876 = vld [vmem:[%s874 + $0x8] sm:$0xff]
      %v877 = vld [vmem:[%s874 + $0x10] sm:$0xff]
      %v878 = vld [vmem:[%s874 + $0x18] sm:$0xff]
      %v879 = vld [vmem:[%s874 + $0x20] sm:$0xff]
      %v880 = vld [vmem:[%s874 + $0x28] sm:$0xff]
      %v881 = vld [vmem:[%s874 + $0x30] sm:$0xff]
      %v882 = vld [vmem:[%s874 + $0x38] sm:$0xff]
      %v883 = vld [vmem:[%s874 + $0x40] sm:$0xff]
      %v884 = vld [vmem:[%s874 + $0x48] sm:$0xff]
      %v885 = vld [vmem:[%s874 + $0x50] sm:$0xff]
      %v886 = vld [vmem:[%s874 + $0x58] sm:$0xff]
      %v887 = vld [vmem:[%s874 + $0x60] sm:$0xff]
      %v888 = vld [vmem:[%s874 + $0x68] sm:$0xff]
      %v889 = vld [vmem:[%s874 + $0x70] sm:$0xff]
      %v890 = vld [vmem:[%s874 + $0x78] sm:$0xff]
      %v891 = vld [vmem:[%s874 + $0x80] sm:$0xff]
      %v892 = vld [vmem:[%s874 + $0x88] sm:$0xff]
      %v893 = vlaneseq
      %v894 = vshrl.u32 %v893, 7
      %v895 = vsub.s32 0, %v894
      %v896 = vrot.slane %v872, %v895
      %v897 = vmul.f32 %v875, %v896
      %v898 = vmul.f32 %v876, %v896
      %v899 = vmul.f32 %v877, %v896
      %v900 = vmul.f32 %v878, %v896
      %v901 = vmul.f32 %v879, %v896
      %v902 = vmul.f32 %v880, %v896
      %v903 = vmul.f32 %v881, %v896
      %v904 = vmul.f32 %v882, %v896
      %v905 = vmul.f32 %v883, %v896
      %v906 = vmul.f32 %v884, %v896
      %v907 = vmul.f32 %v885, %v896
      %v908 = vmul.f32 %v886, %v896
      %v909 = vmul.f32 %v887, %v896
      %v910 = vmul.f32 %v888, %v896
      %v911 = vmul.f32 %v889, %v896
      %v912 = vmul.f32 %v890, %v896
      %v913 = vmul.f32 %v891, %v896
      %v914 = vmul.f32 %v892, %v896
      %v915 = vadd.f32 %v854, %v897
      %v916 = vadd.f32 %v855, %v898
      %v917 = vadd.f32 %v856, %v899
      %v918 = vadd.f32 %v857, %v900
      %v919 = vadd.f32 %v858, %v901
      %v920 = vadd.f32 %v859, %v902
      %v921 = vadd.f32 %v860, %v903
      %v922 = vadd.f32 %v861, %v904
      %v923 = vadd.f32 %v862, %v905
      %v924 = vadd.f32 %v863, %v906
      %v925 = vadd.f32 %v864, %v907
      %v926 = vadd.f32 %v865, %v908
      %v927 = vadd.f32 %v866, %v909
      %v928 = vadd.f32 %v867, %v910
      %v929 = vadd.f32 %v868, %v911
      %v930 = vadd.f32 %v869, %v912
      %v931 = vadd.f32 %v870, %v913
      %v932 = vadd.f32 %v871, %v914
      %v933 = vld [vmem:[%s311 + $0xe] sm:$0x1]
      %s934 = sadd.s32 %s323, 30
      %s935 = scalar_lea.vmem %s306, %s934
      %v936 = vld [vmem:[%s935] sm:$0xff]
      %v937 = vld [vmem:[%s935 + $0x8] sm:$0xff]
      %v938 = vld [vmem:[%s935 + $0x10] sm:$0xff]
      %v939 = vld [vmem:[%s935 + $0x18] sm:$0xff]
      %v940 = vld [vmem:[%s935 + $0x20] sm:$0xff]
      %v941 = vld [vmem:[%s935 + $0x28] sm:$0xff]
      %v942 = vld [vmem:[%s935 + $0x30] sm:$0xff]
      %v943 = vld [vmem:[%s935 + $0x38] sm:$0xff]
      %v944 = vld [vmem:[%s935 + $0x40] sm:$0xff]
      %v945 = vld [vmem:[%s935 + $0x48] sm:$0xff]
      %v946 = vld [vmem:[%s935 + $0x50] sm:$0xff]
      %v947 = vld [vmem:[%s935 + $0x58] sm:$0xff]
      %v948 = vld [vmem:[%s935 + $0x60] sm:$0xff]
      %v949 = vld [vmem:[%s935 + $0x68] sm:$0xff]
      %v950 = vld [vmem:[%s935 + $0x70] sm:$0xff]
      %v951 = vld [vmem:[%s935 + $0x78] sm:$0xff]
      %v952 = vld [vmem:[%s935 + $0x80] sm:$0xff]
      %v953 = vld [vmem:[%s935 + $0x88] sm:$0xff]
      %v954 = vlaneseq
      %v955 = vshrl.u32 %v954, 7
      %v956 = vsub.s32 0, %v955
      %v957 = vrot.slane %v933, %v956
      %v958 = vmul.f32 %v936, %v957
      %v959 = vmul.f32 %v937, %v957
      %v960 = vmul.f32 %v938, %v957
      %v961 = vmul.f32 %v939, %v957
      %v962 = vmul.f32 %v940, %v957
      %v963 = vmul.f32 %v941, %v957
      %v964 = vmul.f32 %v942, %v957
      %v965 = vmul.f32 %v943, %v957
      %v966 = vmul.f32 %v944, %v957
      %v967 = vmul.f32 %v945, %v957
      %v968 = vmul.f32 %v946, %v957
      %v969 = vmul.f32 %v947, %v957
      %v970 = vmul.f32 %v948, %v957
      %v971 = vmul.f32 %v949, %v957
      %v972 = vmul.f32 %v950, %v957
      %v973 = vmul.f32 %v951, %v957
      %v974 = vmul.f32 %v952, %v957
      %v975 = vmul.f32 %v953, %v957
      %v976 = vadd.f32 %v915, %v958
      %v977 = vadd.f32 %v916, %v959
      %v978 = vadd.f32 %v917, %v960
      %v979 = vadd.f32 %v918, %v961
      %v980 = vadd.f32 %v919, %v962
      %v981 = vadd.f32 %v920, %v963
      %v982 = vadd.f32 %v921, %v964
      %v983 = vadd.f32 %v922, %v965
      %v984 = vadd.f32 %v923, %v966
      %v985 = vadd.f32 %v924, %v967
      %v986 = vadd.f32 %v925, %v968
      %v987 = vadd.f32 %v926, %v969
      %v988 = vadd.f32 %v927, %v970
      %v989 = vadd.f32 %v928, %v971
      %v990 = vadd.f32 %v929, %v972
      %v991 = vadd.f32 %v930, %v973
      %v992 = vadd.f32 %v931, %v974
      %v993 = vadd.f32 %v932, %v975
      %v994 = vld [vmem:[%s311 + $0xf] sm:$0x1]
      %s995 = sadd.s32 %s323, 31
      %s996 = scalar_lea.vmem %s306, %s995
      %v997 = vld [vmem:[%s996] sm:$0xff]
      %v998 = vld [vmem:[%s996 + $0x8] sm:$0xff]
      %v999 = vld [vmem:[%s996 + $0x10] sm:$0xff]
      %v1000 = vld [vmem:[%s996 + $0x18] sm:$0xff]
      %v1001 = vld [vmem:[%s996 + $0x20] sm:$0xff]
      %v1002 = vld [vmem:[%s996 + $0x28] sm:$0xff]
      %v1003 = vld [vmem:[%s996 + $0x30] sm:$0xff]
      %v1004 = vld [vmem:[%s996 + $0x38] sm:$0xff]
      %v1005 = vld [vmem:[%s996 + $0x40] sm:$0xff]
      %v1006 = vld [vmem:[%s996 + $0x48] sm:$0xff]
      %v1007 = vld [vmem:[%s996 + $0x50] sm:$0xff]
      %v1008 = vld [vmem:[%s996 + $0x58] sm:$0xff]
      %v1009 = vld [vmem:[%s996 + $0x60] sm:$0xff]
      %v1010 = vld [vmem:[%s996 + $0x68] sm:$0xff]
      %v1011 = vld [vmem:[%s996 + $0x70] sm:$0xff]
      %v1012 = vld [vmem:[%s996 + $0x78] sm:$0xff]
      %v1013 = vld [vmem:[%s996 + $0x80] sm:$0xff]
      %v1014 = vld [vmem:[%s996 + $0x88] sm:$0xff]
      %v1015 = vlaneseq
      %v1016 = vshrl.u32 %v1015, 7
      %v1017 = vsub.s32 0, %v1016
      %v1018 = vrot.slane %v994, %v1017
      %v1019 = vmul.f32 %v997, %v1018
      %v1020 = vmul.f32 %v998, %v1018
      %v1021 = vmul.f32 %v999, %v1018
      %v1022 = vmul.f32 %v1000, %v1018
      %v1023 = vmul.f32 %v1001, %v1018
      %v1024 = vmul.f32 %v1002, %v1018
      %v1025 = vmul.f32 %v1003, %v1018
      %v1026 = vmul.f32 %v1004, %v1018
      %v1027 = vmul.f32 %v1005, %v1018
      %v1028 = vmul.f32 %v1006, %v1018
      %v1029 = vmul.f32 %v1007, %v1018
      %v1030 = vmul.f32 %v1008, %v1018
      %v1031 = vmul.f32 %v1009, %v1018
      %v1032 = vmul.f32 %v1010, %v1018
      %v1033 = vmul.f32 %v1011, %v1018
      %v1034 = vmul.f32 %v1012, %v1018
      %v1035 = vmul.f32 %v1013, %v1018
      %v1036 = vmul.f32 %v1014, %v1018
      %v1037 = vadd.f32 %v976, %v1019
      %v1038 = vadd.f32 %v977, %v1020
      %v1039 = vadd.f32 %v978, %v1021
      %v1040 = vadd.f32 %v979, %v1022
      %v1041 = vadd.f32 %v980, %v1023
      %v1042 = vadd.f32 %v981, %v1024
      %v1043 = vadd.f32 %v982, %v1025
      %v1044 = vadd.f32 %v983, %v1026
      %v1045 = vadd.f32 %v984, %v1027
      %v1046 = vadd.f32 %v985, %v1028
      %v1047 = vadd.f32 %v986, %v1029
      %v1048 = vadd.f32 %v987, %v1030
      %v1049 = vadd.f32 %v988, %v1031
      %v1050 = vadd.f32 %v989, %v1032
      %v1051 = vadd.f32 %v990, %v1033
      %v1052 = vadd.f32 %v991, %v1034
      %v1053 = vadd.f32 %v992, %v1035
      %v1054 = vadd.f32 %v993, %v1036
      %v1055 = vld [vmem:[%s311 + $0x10] sm:$0x1]
      %s1056 = sadd.s32 %s323, 32
      %s1057 = scalar_lea.vmem %s306, %s1056
      %v1058 = vld [vmem:[%s1057] sm:$0xff]
      %v1059 = vld [vmem:[%s1057 + $0x8] sm:$0xff]
      %v1060 = vld [vmem:[%s1057 + $0x10] sm:$0xff]
      %v1061 = vld [vmem:[%s1057 + $0x18] sm:$0xff]
      %v1062 = vld [vmem:[%s1057 + $0x20] sm:$0xff]
      %v1063 = vld [vmem:[%s1057 + $0x28] sm:$0xff]
      %v1064 = vld [vmem:[%s1057 + $0x30] sm:$0xff]
      %v1065 = vld [vmem:[%s1057 + $0x38] sm:$0xff]
      %v1066 = vld [vmem:[%s1057 + $0x40] sm:$0xff]
      %v1067 = vld [vmem:[%s1057 + $0x48] sm:$0xff]
      %v1068 = vld [vmem:[%s1057 + $0x50] sm:$0xff]
      %v1069 = vld [vmem:[%s1057 + $0x58] sm:$0xff]
      %v1070 = vld [vmem:[%s1057 + $0x60] sm:$0xff]
      %v1071 = vld [vmem:[%s1057 + $0x68] sm:$0xff]
      %v1072 = vld [vmem:[%s1057 + $0x70] sm:$0xff]
      %v1073 = vld [vmem:[%s1057 + $0x78] sm:$0xff]
      %v1074 = vld [vmem:[%s1057 + $0x80] sm:$0xff]
      %v1075 = vld [vmem:[%s1057 + $0x88] sm:$0xff]
      %v1076 = vlaneseq
      %v1077 = vshrl.u32 %v1076, 7
      %v1078 = vsub.s32 0, %v1077
      %v1079 = vrot.slane %v1055, %v1078
      %v1080 = vmul.f32 %v1058, %v1079
      %v1081 = vmul.f32 %v1059, %v1079
      %v1082 = vmul.f32 %v1060, %v1079
      %v1083 = vmul.f32 %v1061, %v1079
      %v1084 = vmul.f32 %v1062, %v1079
      %v1085 = vmul.f32 %v1063, %v1079
      %v1086 = vmul.f32 %v1064, %v1079
      %v1087 = vmul.f32 %v1065, %v1079
      %v1088 = vmul.f32 %v1066, %v1079
      %v1089 = vmul.f32 %v1067, %v1079
      %v1090 = vmul.f32 %v1068, %v1079
      %v1091 = vmul.f32 %v1069, %v1079
      %v1092 = vmul.f32 %v1070, %v1079
      %v1093 = vmul.f32 %v1071, %v1079
      %v1094 = vmul.f32 %v1072, %v1079
      %v1095 = vmul.f32 %v1073, %v1079
      %v1096 = vmul.f32 %v1074, %v1079
      %v1097 = vmul.f32 %v1075, %v1079
      %v1098 = vadd.f32 %v1037, %v1080
      %v1099 = vadd.f32 %v1038, %v1081
      %v1100 = vadd.f32 %v1039, %v1082
      %v1101 = vadd.f32 %v1040, %v1083
      %v1102 = vadd.f32 %v1041, %v1084
      %v1103 = vadd.f32 %v1042, %v1085
      %v1104 = vadd.f32 %v1043, %v1086
      %v1105 = vadd.f32 %v1044, %v1087
      %v1106 = vadd.f32 %v1045, %v1088
      %v1107 = vadd.f32 %v1046, %v1089
      %v1108 = vadd.f32 %v1047, %v1090
      %v1109 = vadd.f32 %v1048, %v1091
      %v1110 = vadd.f32 %v1049, %v1092
      %v1111 = vadd.f32 %v1050, %v1093
      %v1112 = vadd.f32 %v1051, %v1094
      %v1113 = vadd.f32 %v1052, %v1095
      %v1114 = vadd.f32 %v1053, %v1096
      %v1115 = vadd.f32 %v1054, %v1097
      %v1116 = vld [vmem:[%s311 + $0x11] sm:$0x1]
      %s1117 = sadd.s32 %s323, 33
      %s1118 = scalar_lea.vmem %s306, %s1117
      %v1119 = vld [vmem:[%s1118] sm:$0xff]
      %v1120 = vld [vmem:[%s1118 + $0x8] sm:$0xff]
      %v1121 = vld [vmem:[%s1118 + $0x10] sm:$0xff]
      %v1122 = vld [vmem:[%s1118 + $0x18] sm:$0xff]
      %v1123 = vld [vmem:[%s1118 + $0x20] sm:$0xff]
      %v1124 = vld [vmem:[%s1118 + $0x28] sm:$0xff]
      %v1125 = vld [vmem:[%s1118 + $0x30] sm:$0xff]
      %v1126 = vld [vmem:[%s1118 + $0x38] sm:$0xff]
      %v1127 = vld [vmem:[%s1118 + $0x40] sm:$0xff]
      %v1128 = vld [vmem:[%s1118 + $0x48] sm:$0xff]
      %v1129 = vld [vmem:[%s1118 + $0x50] sm:$0xff]
      %v1130 = vld [vmem:[%s1118 + $0x58] sm:$0xff]
      %v1131 = vld [vmem:[%s1118 + $0x60] sm:$0xff]
      %v1132 = vld [vmem:[%s1118 + $0x68] sm:$0xff]
      %v1133 = vld [vmem:[%s1118 + $0x70] sm:$0xff]
      %v1134 = vld [vmem:[%s1118 + $0x78] sm:$0xff]
      %v1135 = vld [vmem:[%s1118 + $0x80] sm:$0xff]
      %v1136 = vld [vmem:[%s1118 + $0x88] sm:$0xff]
      %v1137 = vlaneseq
      %v1138 = vshrl.u32 %v1137, 7
      %v1139 = vsub.s32 0, %v1138
      %v1140 = vrot.slane %v1116, %v1139
      %v1141 = vmul.f32 %v1119, %v1140
      %v1142 = vmul.f32 %v1120, %v1140
      %v1143 = vmul.f32 %v1121, %v1140
      %v1144 = vmul.f32 %v1122, %v1140
      %v1145 = vmul.f32 %v1123, %v1140
      %v1146 = vmul.f32 %v1124, %v1140
      %v1147 = vmul.f32 %v1125, %v1140
      %v1148 = vmul.f32 %v1126, %v1140
      %v1149 = vmul.f32 %v1127, %v1140
      %v1150 = vmul.f32 %v1128, %v1140
      %v1151 = vmul.f32 %v1129, %v1140
      %v1152 = vmul.f32 %v1130, %v1140
      %v1153 = vmul.f32 %v1131, %v1140
      %v1154 = vmul.f32 %v1132, %v1140
      %v1155 = vmul.f32 %v1133, %v1140
      %v1156 = vmul.f32 %v1134, %v1140
      %v1157 = vmul.f32 %v1135, %v1140
      %v1158 = vmul.f32 %v1136, %v1140
      %v1159 = vadd.f32 %v1098, %v1141
      %v1160 = vadd.f32 %v1099, %v1142
      %v1161 = vadd.f32 %v1100, %v1143
      %v1162 = vadd.f32 %v1101, %v1144
      %v1163 = vadd.f32 %v1102, %v1145
      %v1164 = vadd.f32 %v1103, %v1146
      %v1165 = vadd.f32 %v1104, %v1147
      %v1166 = vadd.f32 %v1105, %v1148
      %v1167 = vadd.f32 %v1106, %v1149
      %v1168 = vadd.f32 %v1107, %v1150
      %v1169 = vadd.f32 %v1108, %v1151
      %v1170 = vadd.f32 %v1109, %v1152
      %v1171 = vadd.f32 %v1110, %v1153
      %v1172 = vadd.f32 %v1111, %v1154
      %v1173 = vadd.f32 %v1112, %v1155
      %v1174 = vadd.f32 %v1113, %v1156
      %v1175 = vadd.f32 %v1114, %v1157
      %v1176 = vadd.f32 %v1115, %v1158
      %v1177 = vld [vmem:[%s311 + $0x12] sm:$0x1]
      %s1178 = sadd.s32 %s323, 34
      %s1179 = scalar_lea.vmem %s306, %s1178
      %v1180 = vld [vmem:[%s1179] sm:$0xff]
      %v1181 = vld [vmem:[%s1179 + $0x8] sm:$0xff]
      %v1182 = vld [vmem:[%s1179 + $0x10] sm:$0xff]
      %v1183 = vld [vmem:[%s1179 + $0x18] sm:$0xff]
      %v1184 = vld [vmem:[%s1179 + $0x20] sm:$0xff]
      %v1185 = vld [vmem:[%s1179 + $0x28] sm:$0xff]
      %v1186 = vld [vmem:[%s1179 + $0x30] sm:$0xff]
      %v1187 = vld [vmem:[%s1179 + $0x38] sm:$0xff]
      %v1188 = vld [vmem:[%s1179 + $0x40] sm:$0xff]
      %v1189 = vld [vmem:[%s1179 + $0x48] sm:$0xff]
      %v1190 = vld [vmem:[%s1179 + $0x50] sm:$0xff]
      %v1191 = vld [vmem:[%s1179 + $0x58] sm:$0xff]
      %v1192 = vld [vmem:[%s1179 + $0x60] sm:$0xff]
      %v1193 = vld [vmem:[%s1179 + $0x68] sm:$0xff]
      %v1194 = vld [vmem:[%s1179 + $0x70] sm:$0xff]
      %v1195 = vld [vmem:[%s1179 + $0x78] sm:$0xff]
      %v1196 = vld [vmem:[%s1179 + $0x80] sm:$0xff]
      %v1197 = vld [vmem:[%s1179 + $0x88] sm:$0xff]
      %v1198 = vlaneseq
      %v1199 = vshrl.u32 %v1198, 7
      %v1200 = vsub.s32 0, %v1199
      %v1201 = vrot.slane %v1177, %v1200
      %v1202 = vmul.f32 %v1180, %v1201
      %v1203 = vmul.f32 %v1181, %v1201
      %v1204 = vmul.f32 %v1182, %v1201
      %v1205 = vmul.f32 %v1183, %v1201
      %v1206 = vmul.f32 %v1184, %v1201
      %v1207 = vmul.f32 %v1185, %v1201
      %v1208 = vmul.f32 %v1186, %v1201
      %v1209 = vmul.f32 %v1187, %v1201
      %v1210 = vmul.f32 %v1188, %v1201
      %v1211 = vmul.f32 %v1189, %v1201
      %v1212 = vmul.f32 %v1190, %v1201
      %v1213 = vmul.f32 %v1191, %v1201
      %v1214 = vmul.f32 %v1192, %v1201
      %v1215 = vmul.f32 %v1193, %v1201
      %v1216 = vmul.f32 %v1194, %v1201
      %v1217 = vmul.f32 %v1195, %v1201
      %v1218 = vmul.f32 %v1196, %v1201
      %v1219 = vmul.f32 %v1197, %v1201
      %v1220 = vadd.f32 %v1159, %v1202
      %v1221 = vadd.f32 %v1160, %v1203
      %v1222 = vadd.f32 %v1161, %v1204
      %v1223 = vadd.f32 %v1162, %v1205
      %v1224 = vadd.f32 %v1163, %v1206
      %v1225 = vadd.f32 %v1164, %v1207
      %v1226 = vadd.f32 %v1165, %v1208
      %v1227 = vadd.f32 %v1166, %v1209
      %v1228 = vadd.f32 %v1167, %v1210
      %v1229 = vadd.f32 %v1168, %v1211
      %v1230 = vadd.f32 %v1169, %v1212
      %v1231 = vadd.f32 %v1170, %v1213
      %v1232 = vadd.f32 %v1171, %v1214
      %v1233 = vadd.f32 %v1172, %v1215
      %v1234 = vadd.f32 %v1173, %v1216
      %v1235 = vadd.f32 %v1174, %v1217
      %v1236 = vadd.f32 %v1175, %v1218
      %v1237 = vadd.f32 %v1176, %v1219
      %v1238 = vld [vmem:[%s311 + $0x15] sm:$0x1]
      %s1239 = sadd.s32 %s323, 45
      %s1240 = scalar_lea.vmem %s306, %s1239
      %v1241 = vld [vmem:[%s1240] sm:$0xff]
      %v1242 = vld [vmem:[%s1240 + $0x8] sm:$0xff]
      %v1243 = vld [vmem:[%s1240 + $0x10] sm:$0xff]
      %v1244 = vld [vmem:[%s1240 + $0x18] sm:$0xff]
      %v1245 = vld [vmem:[%s1240 + $0x20] sm:$0xff]
      %v1246 = vld [vmem:[%s1240 + $0x28] sm:$0xff]
      %v1247 = vld [vmem:[%s1240 + $0x30] sm:$0xff]
      %v1248 = vld [vmem:[%s1240 + $0x38] sm:$0xff]
      %v1249 = vld [vmem:[%s1240 + $0x40] sm:$0xff]
      %v1250 = vld [vmem:[%s1240 + $0x48] sm:$0xff]
      %v1251 = vld [vmem:[%s1240 + $0x50] sm:$0xff]
      %v1252 = vld [vmem:[%s1240 + $0x58] sm:$0xff]
      %v1253 = vld [vmem:[%s1240 + $0x60] sm:$0xff]
      %v1254 = vld [vmem:[%s1240 + $0x68] sm:$0xff]
      %v1255 = vld [vmem:[%s1240 + $0x70] sm:$0xff]
      %v1256 = vld [vmem:[%s1240 + $0x78] sm:$0xff]
      %v1257 = vld [vmem:[%s1240 + $0x80] sm:$0xff]
      %v1258 = vld [vmem:[%s1240 + $0x88] sm:$0xff]
      %v1259 = vlaneseq
      %v1260 = vshrl.u32 %v1259, 7
      %v1261 = vsub.s32 0, %v1260
      %v1262 = vrot.slane %v1238, %v1261
      %v1263 = vmul.f32 %v1241, %v1262
      %v1264 = vmul.f32 %v1242, %v1262
      %v1265 = vmul.f32 %v1243, %v1262
      %v1266 = vmul.f32 %v1244, %v1262
      %v1267 = vmul.f32 %v1245, %v1262
      %v1268 = vmul.f32 %v1246, %v1262
      %v1269 = vmul.f32 %v1247, %v1262
      %v1270 = vmul.f32 %v1248, %v1262
      %v1271 = vmul.f32 %v1249, %v1262
      %v1272 = vmul.f32 %v1250, %v1262
      %v1273 = vmul.f32 %v1251, %v1262
      %v1274 = vmul.f32 %v1252, %v1262
      %v1275 = vmul.f32 %v1253, %v1262
      %v1276 = vmul.f32 %v1254, %v1262
      %v1277 = vmul.f32 %v1255, %v1262
      %v1278 = vmul.f32 %v1256, %v1262
      %v1279 = vmul.f32 %v1257, %v1262
      %v1280 = vmul.f32 %v1258, %v1262
      %v1281 = vadd.f32 %v1220, %v1263
      %v1282 = vadd.f32 %v1221, %v1264
      %v1283 = vadd.f32 %v1222, %v1265
      %v1284 = vadd.f32 %v1223, %v1266
      %v1285 = vadd.f32 %v1224, %v1267
      %v1286 = vadd.f32 %v1225, %v1268
      %v1287 = vadd.f32 %v1226, %v1269
      %v1288 = vadd.f32 %v1227, %v1270
      %v1289 = vadd.f32 %v1228, %v1271
      %v1290 = vadd.f32 %v1229, %v1272
      %v1291 = vadd.f32 %v1230, %v1273
      %v1292 = vadd.f32 %v1231, %v1274
      %v1293 = vadd.f32 %v1232, %v1275
      %v1294 = vadd.f32 %v1233, %v1276
      %v1295 = vadd.f32 %v1234, %v1277
      %v1296 = vadd.f32 %v1235, %v1278
      %v1297 = vadd.f32 %v1236, %v1279
      %v1298 = vadd.f32 %v1237, %v1280
      %v1299 = vld [vmem:[%s311 + $0x16] sm:$0x1]
      %s1300 = sadd.s32 %s323, 46
      %s1301 = scalar_lea.vmem %s306, %s1300
      %v1302 = vld [vmem:[%s1301] sm:$0xff]
      %v1303 = vld [vmem:[%s1301 + $0x8] sm:$0xff]
      %v1304 = vld [vmem:[%s1301 + $0x10] sm:$0xff]
      %v1305 = vld [vmem:[%s1301 + $0x18] sm:$0xff]
      %v1306 = vld [vmem:[%s1301 + $0x20] sm:$0xff]
      %v1307 = vld [vmem:[%s1301 + $0x28] sm:$0xff]
      %v1308 = vld [vmem:[%s1301 + $0x30] sm:$0xff]
      %v1309 = vld [vmem:[%s1301 + $0x38] sm:$0xff]
      %v1310 = vld [vmem:[%s1301 + $0x40] sm:$0xff]
      %v1311 = vld [vmem:[%s1301 + $0x48] sm:$0xff]
      %v1312 = vld [vmem:[%s1301 + $0x50] sm:$0xff]
      %v1313 = vld [vmem:[%s1301 + $0x58] sm:$0xff]
      %v1314 = vld [vmem:[%s1301 + $0x60] sm:$0xff]
      %v1315 = vld [vmem:[%s1301 + $0x68] sm:$0xff]
      %v1316 = vld [vmem:[%s1301 + $0x70] sm:$0xff]
      %v1317 = vld [vmem:[%s1301 + $0x78] sm:$0xff]
      %v1318 = vld [vmem:[%s1301 + $0x80] sm:$0xff]
      %v1319 = vld [vmem:[%s1301 + $0x88] sm:$0xff]
      %v1320 = vlaneseq
      %v1321 = vshrl.u32 %v1320, 7
      %v1322 = vsub.s32 0, %v1321
      %v1323 = vrot.slane %v1299, %v1322
      %v1324 = vmul.f32 %v1302, %v1323
      %v1325 = vmul.f32 %v1303, %v1323
      %v1326 = vmul.f32 %v1304, %v1323
      %v1327 = vmul.f32 %v1305, %v1323
      %v1328 = vmul.f32 %v1306, %v1323
      %v1329 = vmul.f32 %v1307, %v1323
      %v1330 = vmul.f32 %v1308, %v1323
      %v1331 = vmul.f32 %v1309, %v1323
      %v1332 = vmul.f32 %v1310, %v1323
      %v1333 = vmul.f32 %v1311, %v1323
      %v1334 = vmul.f32 %v1312, %v1323
      %v1335 = vmul.f32 %v1313, %v1323
      %v1336 = vmul.f32 %v1314, %v1323
      %v1337 = vmul.f32 %v1315, %v1323
      %v1338 = vmul.f32 %v1316, %v1323
      %v1339 = vmul.f32 %v1317, %v1323
      %v1340 = vmul.f32 %v1318, %v1323
      %v1341 = vmul.f32 %v1319, %v1323
      %v1342 = vadd.f32 %v1281, %v1324
      %v1343 = vadd.f32 %v1282, %v1325
      %v1344 = vadd.f32 %v1283, %v1326
      %v1345 = vadd.f32 %v1284, %v1327
      %v1346 = vadd.f32 %v1285, %v1328
      %v1347 = vadd.f32 %v1286, %v1329
      %v1348 = vadd.f32 %v1287, %v1330
      %v1349 = vadd.f32 %v1288, %v1331
      %v1350 = vadd.f32 %v1289, %v1332
      %v1351 = vadd.f32 %v1290, %v1333
      %v1352 = vadd.f32 %v1291, %v1334
      %v1353 = vadd.f32 %v1292, %v1335
      %v1354 = vadd.f32 %v1293, %v1336
      %v1355 = vadd.f32 %v1294, %v1337
      %v1356 = vadd.f32 %v1295, %v1338
      %v1357 = vadd.f32 %v1296, %v1339
      %v1358 = vadd.f32 %v1297, %v1340
      %v1359 = vadd.f32 %v1298, %v1341
      %v1360 = vld [vmem:[%s311 + $0x17] sm:$0x1]
      %s1361 = sadd.s32 %s323, 47
      %s1362 = scalar_lea.vmem %s306, %s1361
      %v1363 = vld [vmem:[%s1362] sm:$0xff]
      %v1364 = vld [vmem:[%s1362 + $0x8] sm:$0xff]
      %v1365 = vld [vmem:[%s1362 + $0x10] sm:$0xff]
      %v1366 = vld [vmem:[%s1362 + $0x18] sm:$0xff]
      %v1367 = vld [vmem:[%s1362 + $0x20] sm:$0xff]
      %v1368 = vld [vmem:[%s1362 + $0x28] sm:$0xff]
      %v1369 = vld [vmem:[%s1362 + $0x30] sm:$0xff]
      %v1370 = vld [vmem:[%s1362 + $0x38] sm:$0xff]
      %v1371 = vld [vmem:[%s1362 + $0x40] sm:$0xff]
      %v1372 = vld [vmem:[%s1362 + $0x48] sm:$0xff]
      %v1373 = vld [vmem:[%s1362 + $0x50] sm:$0xff]
      %v1374 = vld [vmem:[%s1362 + $0x58] sm:$0xff]
      %v1375 = vld [vmem:[%s1362 + $0x60] sm:$0xff]
      %v1376 = vld [vmem:[%s1362 + $0x68] sm:$0xff]
      %v1377 = vld [vmem:[%s1362 + $0x70] sm:$0xff]
      %v1378 = vld [vmem:[%s1362 + $0x78] sm:$0xff]
      %v1379 = vld [vmem:[%s1362 + $0x80] sm:$0xff]
      %v1380 = vld [vmem:[%s1362 + $0x88] sm:$0xff]
      %v1381 = vlaneseq
      %v1382 = vshrl.u32 %v1381, 7
      %v1383 = vsub.s32 0, %v1382
      %v1384 = vrot.slane %v1360, %v1383
      %v1385 = vmul.f32 %v1363, %v1384
      %v1386 = vmul.f32 %v1364, %v1384
      %v1387 = vmul.f32 %v1365, %v1384
      %v1388 = vmul.f32 %v1366, %v1384
      %v1389 = vmul.f32 %v1367, %v1384
      %v1390 = vmul.f32 %v1368, %v1384
      %v1391 = vmul.f32 %v1369, %v1384
      %v1392 = vmul.f32 %v1370, %v1384
      %v1393 = vmul.f32 %v1371, %v1384
      %v1394 = vmul.f32 %v1372, %v1384
      %v1395 = vmul.f32 %v1373, %v1384
      %v1396 = vmul.f32 %v1374, %v1384
      %v1397 = vmul.f32 %v1375, %v1384
      %v1398 = vmul.f32 %v1376, %v1384
      %v1399 = vmul.f32 %v1377, %v1384
      %v1400 = vmul.f32 %v1378, %v1384
      %v1401 = vmul.f32 %v1379, %v1384
      %v1402 = vmul.f32 %v1380, %v1384
      %v1403 = vadd.f32 %v1342, %v1385
      %v1404 = vadd.f32 %v1343, %v1386
      %v1405 = vadd.f32 %v1344, %v1387
      %v1406 = vadd.f32 %v1345, %v1388
      %v1407 = vadd.f32 %v1346, %v1389
      %v1408 = vadd.f32 %v1347, %v1390
      %v1409 = vadd.f32 %v1348, %v1391
      %v1410 = vadd.f32 %v1349, %v1392
      %v1411 = vadd.f32 %v1350, %v1393
      %v1412 = vadd.f32 %v1351, %v1394
      %v1413 = vadd.f32 %v1352, %v1395
      %v1414 = vadd.f32 %v1353, %v1396
      %v1415 = vadd.f32 %v1354, %v1397
      %v1416 = vadd.f32 %v1355, %v1398
      %v1417 = vadd.f32 %v1356, %v1399
      %v1418 = vadd.f32 %v1357, %v1400
      %v1419 = vadd.f32 %v1358, %v1401
      %v1420 = vadd.f32 %v1359, %v1402
      %v1421 = vld [vmem:[%s311 + $0x18] sm:$0x1]
      %s1422 = sadd.s32 %s323, 48
      %s1423 = scalar_lea.vmem %s306, %s1422
      %v1424 = vld [vmem:[%s1423] sm:$0xff]
      %v1425 = vld [vmem:[%s1423 + $0x8] sm:$0xff]
      %v1426 = vld [vmem:[%s1423 + $0x10] sm:$0xff]
      %v1427 = vld [vmem:[%s1423 + $0x18] sm:$0xff]
      %v1428 = vld [vmem:[%s1423 + $0x20] sm:$0xff]
      %v1429 = vld [vmem:[%s1423 + $0x28] sm:$0xff]
      %v1430 = vld [vmem:[%s1423 + $0x30] sm:$0xff]
      %v1431 = vld [vmem:[%s1423 + $0x38] sm:$0xff]
      %v1432 = vld [vmem:[%s1423 + $0x40] sm:$0xff]
      %v1433 = vld [vmem:[%s1423 + $0x48] sm:$0xff]
      %v1434 = vld [vmem:[%s1423 + $0x50] sm:$0xff]
      %v1435 = vld [vmem:[%s1423 + $0x58] sm:$0xff]
      %v1436 = vld [vmem:[%s1423 + $0x60] sm:$0xff]
      %v1437 = vld [vmem:[%s1423 + $0x68] sm:$0xff]
      %v1438 = vld [vmem:[%s1423 + $0x70] sm:$0xff]
      %v1439 = vld [vmem:[%s1423 + $0x78] sm:$0xff]
      %v1440 = vld [vmem:[%s1423 + $0x80] sm:$0xff]
      %v1441 = vld [vmem:[%s1423 + $0x88] sm:$0xff]
      %v1442 = vlaneseq
      %v1443 = vshrl.u32 %v1442, 7
      %v1444 = vsub.s32 0, %v1443
      %v1445 = vrot.slane %v1421, %v1444
      %v1446 = vmul.f32 %v1424, %v1445
      %v1447 = vmul.f32 %v1425, %v1445
      %v1448 = vmul.f32 %v1426, %v1445
      %v1449 = vmul.f32 %v1427, %v1445
      %v1450 = vmul.f32 %v1428, %v1445
      %v1451 = vmul.f32 %v1429, %v1445
      %v1452 = vmul.f32 %v1430, %v1445
      %v1453 = vmul.f32 %v1431, %v1445
      %v1454 = vmul.f32 %v1432, %v1445
      %v1455 = vmul.f32 %v1433, %v1445
      %v1456 = vmul.f32 %v1434, %v1445
      %v1457 = vmul.f32 %v1435, %v1445
      %v1458 = vmul.f32 %v1436, %v1445
      %v1459 = vmul.f32 %v1437, %v1445
      %v1460 = vmul.f32 %v1438, %v1445
      %v1461 = vmul.f32 %v1439, %v1445
      %v1462 = vmul.f32 %v1440, %v1445
      %v1463 = vmul.f32 %v1441, %v1445
      %v1464 = vadd.f32 %v1403, %v1446
      %v1465 = vadd.f32 %v1404, %v1447
      %v1466 = vadd.f32 %v1405, %v1448
      %v1467 = vadd.f32 %v1406, %v1449
      %v1468 = vadd.f32 %v1407, %v1450
      %v1469 = vadd.f32 %v1408, %v1451
      %v1470 = vadd.f32 %v1409, %v1452
      %v1471 = vadd.f32 %v1410, %v1453
      %v1472 = vadd.f32 %v1411, %v1454
      %v1473 = vadd.f32 %v1412, %v1455
      %v1474 = vadd.f32 %v1413, %v1456
      %v1475 = vadd.f32 %v1414, %v1457
      %v1476 = vadd.f32 %v1415, %v1458
      %v1477 = vadd.f32 %v1416, %v1459
      %v1478 = vadd.f32 %v1417, %v1460
      %v1479 = vadd.f32 %v1418, %v1461
      %v1480 = vadd.f32 %v1419, %v1462
      %v1481 = vadd.f32 %v1420, %v1463
      %v1482 = vld [vmem:[%s311 + $0x19] sm:$0x1]
      %s1483 = sadd.s32 %s323, 49
      %s1484 = scalar_lea.vmem %s306, %s1483
      %v1485 = vld [vmem:[%s1484] sm:$0xff]
      %v1486 = vld [vmem:[%s1484 + $0x8] sm:$0xff]
      %v1487 = vld [vmem:[%s1484 + $0x10] sm:$0xff]
      %v1488 = vld [vmem:[%s1484 + $0x18] sm:$0xff]
      %v1489 = vld [vmem:[%s1484 + $0x20] sm:$0xff]
      %v1490 = vld [vmem:[%s1484 + $0x28] sm:$0xff]
      %v1491 = vld [vmem:[%s1484 + $0x30] sm:$0xff]
      %v1492 = vld [vmem:[%s1484 + $0x38] sm:$0xff]
      %v1493 = vld [vmem:[%s1484 + $0x40] sm:$0xff]
      %v1494 = vld [vmem:[%s1484 + $0x48] sm:$0xff]
      %v1495 = vld [vmem:[%s1484 + $0x50] sm:$0xff]
      %v1496 = vld [vmem:[%s1484 + $0x58] sm:$0xff]
      %v1497 = vld [vmem:[%s1484 + $0x60] sm:$0xff]
      %v1498 = vld [vmem:[%s1484 + $0x68] sm:$0xff]
      %v1499 = vld [vmem:[%s1484 + $0x70] sm:$0xff]
      %v1500 = vld [vmem:[%s1484 + $0x78] sm:$0xff]
      %v1501 = vld [vmem:[%s1484 + $0x80] sm:$0xff]
      %v1502 = vld [vmem:[%s1484 + $0x88] sm:$0xff]
      %v1503 = vlaneseq
      %v1504 = vshrl.u32 %v1503, 7
      %v1505 = vsub.s32 0, %v1504
      %v1506 = vrot.slane %v1482, %v1505
      %v1507 = vmul.f32 %v1485, %v1506
      %v1508 = vmul.f32 %v1486, %v1506
      %v1509 = vmul.f32 %v1487, %v1506
      %v1510 = vmul.f32 %v1488, %v1506
      %v1511 = vmul.f32 %v1489, %v1506
      %v1512 = vmul.f32 %v1490, %v1506
      %v1513 = vmul.f32 %v1491, %v1506
      %v1514 = vmul.f32 %v1492, %v1506
      %v1515 = vmul.f32 %v1493, %v1506
      %v1516 = vmul.f32 %v1494, %v1506
      %v1517 = vmul.f32 %v1495, %v1506
      %v1518 = vmul.f32 %v1496, %v1506
      %v1519 = vmul.f32 %v1497, %v1506
      %v1520 = vmul.f32 %v1498, %v1506
      %v1521 = vmul.f32 %v1499, %v1506
      %v1522 = vmul.f32 %v1500, %v1506
      %v1523 = vmul.f32 %v1501, %v1506
      %v1524 = vmul.f32 %v1502, %v1506
      %v1525 = vadd.f32 %v1464, %v1507
      %v1526 = vadd.f32 %v1465, %v1508
      %v1527 = vadd.f32 %v1466, %v1509
      %v1528 = vadd.f32 %v1467, %v1510
      %v1529 = vadd.f32 %v1468, %v1511
      %v1530 = vadd.f32 %v1469, %v1512
      %v1531 = vadd.f32 %v1470, %v1513
      %v1532 = vadd.f32 %v1471, %v1514
      %v1533 = vadd.f32 %v1472, %v1515
      %v1534 = vadd.f32 %v1473, %v1516
      %v1535 = vadd.f32 %v1474, %v1517
      %v1536 = vadd.f32 %v1475, %v1518
      %v1537 = vadd.f32 %v1476, %v1519
      %v1538 = vadd.f32 %v1477, %v1520
      %v1539 = vadd.f32 %v1478, %v1521
      %v1540 = vadd.f32 %v1479, %v1522
      %v1541 = vadd.f32 %v1480, %v1523
      %v1542 = vadd.f32 %v1481, %v1524
      %v1543 = vld [vmem:[%s311 + $0x1c] sm:$0x1]
      %s1544 = sadd.s32 %s323, 60
      %s1545 = scalar_lea.vmem %s306, %s1544
      %v1546 = vld [vmem:[%s1545] sm:$0xff]
      %v1547 = vld [vmem:[%s1545 + $0x8] sm:$0xff]
      %v1548 = vld [vmem:[%s1545 + $0x10] sm:$0xff]
      %v1549 = vld [vmem:[%s1545 + $0x18] sm:$0xff]
      %v1550 = vld [vmem:[%s1545 + $0x20] sm:$0xff]
      %v1551 = vld [vmem:[%s1545 + $0x28] sm:$0xff]
      %v1552 = vld [vmem:[%s1545 + $0x30] sm:$0xff]
      %v1553 = vld [vmem:[%s1545 + $0x38] sm:$0xff]
      %v1554 = vld [vmem:[%s1545 + $0x40] sm:$0xff]
      %v1555 = vld [vmem:[%s1545 + $0x48] sm:$0xff]
      %v1556 = vld [vmem:[%s1545 + $0x50] sm:$0xff]
      %v1557 = vld [vmem:[%s1545 + $0x58] sm:$0xff]
      %v1558 = vld [vmem:[%s1545 + $0x60] sm:$0xff]
      %v1559 = vld [vmem:[%s1545 + $0x68] sm:$0xff]
      %v1560 = vld [vmem:[%s1545 + $0x70] sm:$0xff]
      %v1561 = vld [vmem:[%s1545 + $0x78] sm:$0xff]
      %v1562 = vld [vmem:[%s1545 + $0x80] sm:$0xff]
      %v1563 = vld [vmem:[%s1545 + $0x88] sm:$0xff]
      %v1564 = vlaneseq
      %v1565 = vshrl.u32 %v1564, 7
      %v1566 = vsub.s32 0, %v1565
      %v1567 = vrot.slane %v1543, %v1566
      %v1568 = vmul.f32 %v1546, %v1567
      %v1569 = vmul.f32 %v1547, %v1567
      %v1570 = vmul.f32 %v1548, %v1567
      %v1571 = vmul.f32 %v1549, %v1567
      %v1572 = vmul.f32 %v1550, %v1567
      %v1573 = vmul.f32 %v1551, %v1567
      %v1574 = vmul.f32 %v1552, %v1567
      %v1575 = vmul.f32 %v1553, %v1567
      %v1576 = vmul.f32 %v1554, %v1567
      %v1577 = vmul.f32 %v1555, %v1567
      %v1578 = vmul.f32 %v1556, %v1567
      %v1579 = vmul.f32 %v1557, %v1567
      %v1580 = vmul.f32 %v1558, %v1567
      %v1581 = vmul.f32 %v1559, %v1567
      %v1582 = vmul.f32 %v1560, %v1567
      %v1583 = vmul.f32 %v1561, %v1567
      %v1584 = vmul.f32 %v1562, %v1567
      %v1585 = vmul.f32 %v1563, %v1567
      %v1586 = vadd.f32 %v1525, %v1568
      %v1587 = vadd.f32 %v1526, %v1569
      %v1588 = vadd.f32 %v1527, %v1570
      %v1589 = vadd.f32 %v1528, %v1571
      %v1590 = vadd.f32 %v1529, %v1572
      %v1591 = vadd.f32 %v1530, %v1573
      %v1592 = vadd.f32 %v1531, %v1574
      %v1593 = vadd.f32 %v1532, %v1575
      %v1594 = vadd.f32 %v1533, %v1576
      %v1595 = vadd.f32 %v1534, %v1577
      %v1596 = vadd.f32 %v1535, %v1578
      %v1597 = vadd.f32 %v1536, %v1579
      %v1598 = vadd.f32 %v1537, %v1580
      %v1599 = vadd.f32 %v1538, %v1581
      %v1600 = vadd.f32 %v1539, %v1582
      %v1601 = vadd.f32 %v1540, %v1583
      %v1602 = vadd.f32 %v1541, %v1584
      %v1603 = vadd.f32 %v1542, %v1585
      %v1604 = vld [vmem:[%s311 + $0x1d] sm:$0x1]
      %s1605 = sadd.s32 %s323, 61
      %s1606 = scalar_lea.vmem %s306, %s1605
      %v1607 = vld [vmem:[%s1606] sm:$0xff]
      %v1608 = vld [vmem:[%s1606 + $0x8] sm:$0xff]
      %v1609 = vld [vmem:[%s1606 + $0x10] sm:$0xff]
      %v1610 = vld [vmem:[%s1606 + $0x18] sm:$0xff]
      %v1611 = vld [vmem:[%s1606 + $0x20] sm:$0xff]
      %v1612 = vld [vmem:[%s1606 + $0x28] sm:$0xff]
      %v1613 = vld [vmem:[%s1606 + $0x30] sm:$0xff]
      %v1614 = vld [vmem:[%s1606 + $0x38] sm:$0xff]
      %v1615 = vld [vmem:[%s1606 + $0x40] sm:$0xff]
      %v1616 = vld [vmem:[%s1606 + $0x48] sm:$0xff]
      %v1617 = vld [vmem:[%s1606 + $0x50] sm:$0xff]
      %v1618 = vld [vmem:[%s1606 + $0x58] sm:$0xff]
      %v1619 = vld [vmem:[%s1606 + $0x60] sm:$0xff]
      %v1620 = vld [vmem:[%s1606 + $0x68] sm:$0xff]
      %v1621 = vld [vmem:[%s1606 + $0x70] sm:$0xff]
      %v1622 = vld [vmem:[%s1606 + $0x78] sm:$0xff]
      %v1623 = vld [vmem:[%s1606 + $0x80] sm:$0xff]
      %v1624 = vld [vmem:[%s1606 + $0x88] sm:$0xff]
      %v1625 = vlaneseq
      %v1626 = vshrl.u32 %v1625, 7
      %v1627 = vsub.s32 0, %v1626
      %v1628 = vrot.slane %v1604, %v1627
      %v1629 = vmul.f32 %v1607, %v1628
      %v1630 = vmul.f32 %v1608, %v1628
      %v1631 = vmul.f32 %v1609, %v1628
      %v1632 = vmul.f32 %v1610, %v1628
      %v1633 = vmul.f32 %v1611, %v1628
      %v1634 = vmul.f32 %v1612, %v1628
      %v1635 = vmul.f32 %v1613, %v1628
      %v1636 = vmul.f32 %v1614, %v1628
      %v1637 = vmul.f32 %v1615, %v1628
      %v1638 = vmul.f32 %v1616, %v1628
      %v1639 = vmul.f32 %v1617, %v1628
      %v1640 = vmul.f32 %v1618, %v1628
      %v1641 = vmul.f32 %v1619, %v1628
      %v1642 = vmul.f32 %v1620, %v1628
      %v1643 = vmul.f32 %v1621, %v1628
      %v1644 = vmul.f32 %v1622, %v1628
      %v1645 = vmul.f32 %v1623, %v1628
      %v1646 = vmul.f32 %v1624, %v1628
      %v1647 = vadd.f32 %v1586, %v1629
      %v1648 = vadd.f32 %v1587, %v1630
      %v1649 = vadd.f32 %v1588, %v1631
      %v1650 = vadd.f32 %v1589, %v1632
      %v1651 = vadd.f32 %v1590, %v1633
      %v1652 = vadd.f32 %v1591, %v1634
      %v1653 = vadd.f32 %v1592, %v1635
      %v1654 = vadd.f32 %v1593, %v1636
      %v1655 = vadd.f32 %v1594, %v1637
      %v1656 = vadd.f32 %v1595, %v1638
      %v1657 = vadd.f32 %v1596, %v1639
      %v1658 = vadd.f32 %v1597, %v1640
      %v1659 = vadd.f32 %v1598, %v1641
      %v1660 = vadd.f32 %v1599, %v1642
      %v1661 = vadd.f32 %v1600, %v1643
      %v1662 = vadd.f32 %v1601, %v1644
      %v1663 = vadd.f32 %v1602, %v1645
      %v1664 = vadd.f32 %v1603, %v1646
      %v1665 = vld [vmem:[%s311 + $0x1e] sm:$0x1]
      %s1666 = sadd.s32 %s323, 62
      %s1667 = scalar_lea.vmem %s306, %s1666
      %v1668 = vld [vmem:[%s1667] sm:$0xff]
      %v1669 = vld [vmem:[%s1667 + $0x8] sm:$0xff]
      %v1670 = vld [vmem:[%s1667 + $0x10] sm:$0xff]
      %v1671 = vld [vmem:[%s1667 + $0x18] sm:$0xff]
      %v1672 = vld [vmem:[%s1667 + $0x20] sm:$0xff]
      %v1673 = vld [vmem:[%s1667 + $0x28] sm:$0xff]
      %v1674 = vld [vmem:[%s1667 + $0x30] sm:$0xff]
      %v1675 = vld [vmem:[%s1667 + $0x38] sm:$0xff]
      %v1676 = vld [vmem:[%s1667 + $0x40] sm:$0xff]
      %v1677 = vld [vmem:[%s1667 + $0x48] sm:$0xff]
      %v1678 = vld [vmem:[%s1667 + $0x50] sm:$0xff]
      %v1679 = vld [vmem:[%s1667 + $0x58] sm:$0xff]
      %v1680 = vld [vmem:[%s1667 + $0x60] sm:$0xff]
      %v1681 = vld [vmem:[%s1667 + $0x68] sm:$0xff]
      %v1682 = vld [vmem:[%s1667 + $0x70] sm:$0xff]
      %v1683 = vld [vmem:[%s1667 + $0x78] sm:$0xff]
      %v1684 = vld [vmem:[%s1667 + $0x80] sm:$0xff]
      %v1685 = vld [vmem:[%s1667 + $0x88] sm:$0xff]
      %v1686 = vlaneseq
      %v1687 = vshrl.u32 %v1686, 7
      %v1688 = vsub.s32 0, %v1687
      %v1689 = vrot.slane %v1665, %v1688
      %v1690 = vmul.f32 %v1668, %v1689
      %v1691 = vmul.f32 %v1669, %v1689
      %v1692 = vmul.f32 %v1670, %v1689
      %v1693 = vmul.f32 %v1671, %v1689
      %v1694 = vmul.f32 %v1672, %v1689
      %v1695 = vmul.f32 %v1673, %v1689
      %v1696 = vmul.f32 %v1674, %v1689
      %v1697 = vmul.f32 %v1675, %v1689
      %v1698 = vmul.f32 %v1676, %v1689
      %v1699 = vmul.f32 %v1677, %v1689
      %v1700 = vmul.f32 %v1678, %v1689
      %v1701 = vmul.f32 %v1679, %v1689
      %v1702 = vmul.f32 %v1680, %v1689
      %v1703 = vmul.f32 %v1681, %v1689
      %v1704 = vmul.f32 %v1682, %v1689
      %v1705 = vmul.f32 %v1683, %v1689
      %v1706 = vmul.f32 %v1684, %v1689
      %v1707 = vmul.f32 %v1685, %v1689
      %v1708 = vadd.f32 %v1647, %v1690
      %v1709 = vadd.f32 %v1648, %v1691
      %v1710 = vadd.f32 %v1649, %v1692
      %v1711 = vadd.f32 %v1650, %v1693
      %v1712 = vadd.f32 %v1651, %v1694
      %v1713 = vadd.f32 %v1652, %v1695
      %v1714 = vadd.f32 %v1653, %v1696
      %v1715 = vadd.f32 %v1654, %v1697
      %v1716 = vadd.f32 %v1655, %v1698
      %v1717 = vadd.f32 %v1656, %v1699
      %v1718 = vadd.f32 %v1657, %v1700
      %v1719 = vadd.f32 %v1658, %v1701
      %v1720 = vadd.f32 %v1659, %v1702
      %v1721 = vadd.f32 %v1660, %v1703
      %v1722 = vadd.f32 %v1661, %v1704
      %v1723 = vadd.f32 %v1662, %v1705
      %v1724 = vadd.f32 %v1663, %v1706
      %v1725 = vadd.f32 %v1664, %v1707
      %v1726 = vld [vmem:[%s311 + $0x1f] sm:$0x1]
      %s1727 = sadd.s32 %s323, 63
      %s1728 = scalar_lea.vmem %s306, %s1727
      %v1729 = vld [vmem:[%s1728] sm:$0xff]
      %v1730 = vld [vmem:[%s1728 + $0x8] sm:$0xff]
      %v1731 = vld [vmem:[%s1728 + $0x10] sm:$0xff]
      %v1732 = vld [vmem:[%s1728 + $0x18] sm:$0xff]
      %v1733 = vld [vmem:[%s1728 + $0x20] sm:$0xff]
      %v1734 = vld [vmem:[%s1728 + $0x28] sm:$0xff]
      %v1735 = vld [vmem:[%s1728 + $0x30] sm:$0xff]
      %v1736 = vld [vmem:[%s1728 + $0x38] sm:$0xff]
      %v1737 = vld [vmem:[%s1728 + $0x40] sm:$0xff]
      %v1738 = vld [vmem:[%s1728 + $0x48] sm:$0xff]
      %v1739 = vld [vmem:[%s1728 + $0x50] sm:$0xff]
      %v1740 = vld [vmem:[%s1728 + $0x58] sm:$0xff]
      %v1741 = vld [vmem:[%s1728 + $0x60] sm:$0xff]
      %v1742 = vld [vmem:[%s1728 + $0x68] sm:$0xff]
      %v1743 = vld [vmem:[%s1728 + $0x70] sm:$0xff]
      %v1744 = vld [vmem:[%s1728 + $0x78] sm:$0xff]
      %v1745 = vld [vmem:[%s1728 + $0x80] sm:$0xff]
      %v1746 = vld [vmem:[%s1728 + $0x88] sm:$0xff]
      %v1747 = vlaneseq
      %v1748 = vshrl.u32 %v1747, 7
      %v1749 = vsub.s32 0, %v1748
      %v1750 = vrot.slane %v1726, %v1749
      %v1751 = vmul.f32 %v1729, %v1750
      %v1752 = vmul.f32 %v1730, %v1750
      %v1753 = vmul.f32 %v1731, %v1750
      %v1754 = vmul.f32 %v1732, %v1750
      %v1755 = vmul.f32 %v1733, %v1750
      %v1756 = vmul.f32 %v1734, %v1750
      %v1757 = vmul.f32 %v1735, %v1750
      %v1758 = vmul.f32 %v1736, %v1750
      %v1759 = vmul.f32 %v1737, %v1750
      %v1760 = vmul.f32 %v1738, %v1750
      %v1761 = vmul.f32 %v1739, %v1750
      %v1762 = vmul.f32 %v1740, %v1750
      %v1763 = vmul.f32 %v1741, %v1750
      %v1764 = vmul.f32 %v1742, %v1750
      %v1765 = vmul.f32 %v1743, %v1750
      %v1766 = vmul.f32 %v1744, %v1750
      %v1767 = vmul.f32 %v1745, %v1750
      %v1768 = vmul.f32 %v1746, %v1750
      %v1769 = vadd.f32 %v1708, %v1751
      %v1770 = vadd.f32 %v1709, %v1752
      %v1771 = vadd.f32 %v1710, %v1753
      %v1772 = vadd.f32 %v1711, %v1754
      %v1773 = vadd.f32 %v1712, %v1755
      %v1774 = vadd.f32 %v1713, %v1756
      %v1775 = vadd.f32 %v1714, %v1757
      %v1776 = vadd.f32 %v1715, %v1758
      %v1777 = vadd.f32 %v1716, %v1759
      %v1778 = vadd.f32 %v1717, %v1760
      %v1779 = vadd.f32 %v1718, %v1761
      %v1780 = vadd.f32 %v1719, %v1762
      %v1781 = vadd.f32 %v1720, %v1763
      %v1782 = vadd.f32 %v1721, %v1764
      %v1783 = vadd.f32 %v1722, %v1765
      %v1784 = vadd.f32 %v1723, %v1766
      %v1785 = vadd.f32 %v1724, %v1767
      %v1786 = vadd.f32 %v1725, %v1768
      %v1787 = vld [vmem:[%s311 + $0x20] sm:$0x1]
      %s1788 = sadd.s32 %s323, 64
      %s1789 = scalar_lea.vmem %s306, %s1788
      %v1790 = vld [vmem:[%s1789] sm:$0xff]
      %v1791 = vld [vmem:[%s1789 + $0x8] sm:$0xff]
      %v1792 = vld [vmem:[%s1789 + $0x10] sm:$0xff]
      %v1793 = vld [vmem:[%s1789 + $0x18] sm:$0xff]
      %v1794 = vld [vmem:[%s1789 + $0x20] sm:$0xff]
      %v1795 = vld [vmem:[%s1789 + $0x28] sm:$0xff]
      %v1796 = vld [vmem:[%s1789 + $0x30] sm:$0xff]
      %v1797 = vld [vmem:[%s1789 + $0x38] sm:$0xff]
      %v1798 = vld [vmem:[%s1789 + $0x40] sm:$0xff]
      %v1799 = vld [vmem:[%s1789 + $0x48] sm:$0xff]
      %v1800 = vld [vmem:[%s1789 + $0x50] sm:$0xff]
      %v1801 = vld [vmem:[%s1789 + $0x58] sm:$0xff]
      %v1802 = vld [vmem:[%s1789 + $0x60] sm:$0xff]
      %v1803 = vld [vmem:[%s1789 + $0x68] sm:$0xff]
      %v1804 = vld [vmem:[%s1789 + $0x70] sm:$0xff]
      %v1805 = vld [vmem:[%s1789 + $0x78] sm:$0xff]
      %v1806 = vld [vmem:[%s1789 + $0x80] sm:$0xff]
      %v1807 = vld [vmem:[%s1789 + $0x88] sm:$0xff]
      %v1808 = vlaneseq
      %v1809 = vshrl.u32 %v1808, 7
      %v1810 = vsub.s32 0, %v1809
      %v1811 = vrot.slane %v1787, %v1810
      %v1812 = vmul.f32 %v1790, %v1811
      %v1813 = vmul.f32 %v1791, %v1811
      %v1814 = vmul.f32 %v1792, %v1811
      %v1815 = vmul.f32 %v1793, %v1811
      %v1816 = vmul.f32 %v1794, %v1811
      %v1817 = vmul.f32 %v1795, %v1811
      %v1818 = vmul.f32 %v1796, %v1811
      %v1819 = vmul.f32 %v1797, %v1811
      %v1820 = vmul.f32 %v1798, %v1811
      %v1821 = vmul.f32 %v1799, %v1811
      %v1822 = vmul.f32 %v1800, %v1811
      %v1823 = vmul.f32 %v1801, %v1811
      %v1824 = vmul.f32 %v1802, %v1811
      %v1825 = vmul.f32 %v1803, %v1811
      %v1826 = vmul.f32 %v1804, %v1811
      %v1827 = vmul.f32 %v1805, %v1811
      %v1828 = vmul.f32 %v1806, %v1811
      %v1829 = vmul.f32 %v1807, %v1811
      %v1830 = vadd.f32 %v1769, %v1812
      %v1831 = vadd.f32 %v1770, %v1813
      %v1832 = vadd.f32 %v1771, %v1814
      %v1833 = vadd.f32 %v1772, %v1815
      %v1834 = vadd.f32 %v1773, %v1816
      %v1835 = vadd.f32 %v1774, %v1817
      %v1836 = vadd.f32 %v1775, %v1818
      %v1837 = vadd.f32 %v1776, %v1819
      %v1838 = vadd.f32 %v1777, %v1820
      %v1839 = vadd.f32 %v1778, %v1821
      %v1840 = vadd.f32 %v1779, %v1822
      %v1841 = vadd.f32 %v1780, %v1823
      %v1842 = vadd.f32 %v1781, %v1824
      %v1843 = vadd.f32 %v1782, %v1825
      %v1844 = vadd.f32 %v1783, %v1826
      %v1845 = vadd.f32 %v1784, %v1827
      %v1846 = vadd.f32 %v1785, %v1828
      %v1847 = vadd.f32 %v1786, %v1829
      %v1848 = vpack.c.bf16 %v1831, %v1830
      %v1849 = vpack.c.bf16 %v1833, %v1832
      %v1850 = vpack.c.bf16 %v1835, %v1834
      %v1851 = vpack.c.bf16 %v1837, %v1836
      %v1852 = vpack.c.bf16 %v1839, %v1838
      %v1853 = vpack.c.bf16 %v1841, %v1840
      %v1854 = vpack.c.bf16 %v1843, %v1842
      %v1855 = vpack.c.bf16 %v1845, %v1844
      %v1856 = vpack.c.bf16 %v1847, %v1846
      %v1857 = vld [vmem:[%s2] sm:$0xf]
      %v1858 = vld [vmem:[%s2 + $0x4] sm:$0xf]
      %v1859 = vld [vmem:[%s2 + $0x8] sm:$0xf]
      %v1860 = vld [vmem:[%s2 + $0xc] sm:$0xf]
      %v1861 = vld [vmem:[%s2 + $0x10] sm:$0xf]
      %v1862 = vld [vmem:[%s2 + $0x14] sm:$0xf]
      %v1863 = vld [vmem:[%s2 + $0x18] sm:$0xf]
      %v1864 = vld [vmem:[%s2 + $0x1c] sm:$0xf]
      %v1865 = vld [vmem:[%s2 + $0x20] sm:$0xf]
      %v1866 = vld [vmem:[%s2 + $0x24] sm:$0xf]
      %v1867 = vld [vmem:[%s2 + $0x28] sm:$0xf]
      %v1868 = vld [vmem:[%s2 + $0x2c] sm:$0xf]
      %v1869 = vld [vmem:[%s2 + $0x30] sm:$0xf]
      %v1870 = vld [vmem:[%s2 + $0x34] sm:$0xf]
      %v1871 = vld [vmem:[%s2 + $0x38] sm:$0xf]
      %v1872 = vld [vmem:[%s2 + $0x3c] sm:$0xf]
      %v1889 = vunpack.c.l.b16 %v1857
      %v1890 = vunpack.c.l.b16 %v1858
      %v1891 = vunpack.c.l.b16 %v1859
      %v1892 = vunpack.c.l.b16 %v1860
      %v1893 = vunpack.c.l.b16 %v1861
      %v1894 = vunpack.c.l.b16 %v1862
      %v1895 = vunpack.c.l.b16 %v1863
      %v1896 = vunpack.c.l.b16 %v1864
      %v1897 = vunpack.c.l.b16 %v1865
      %v1898 = vunpack.c.l.b16 %v1866
      %v1899 = vunpack.c.l.b16 %v1867
      %v1900 = vunpack.c.l.b16 %v1868
      %v1901 = vunpack.c.l.b16 %v1869
      %v1902 = vunpack.c.l.b16 %v1870
      %v1903 = vunpack.c.l.b16 %v1871
      %v1904 = vunpack.c.l.b16 %v1872
      %v1905 = vpack.c.b16 %v1890, %v1889
      %v1906 = vpack.c.b16 %v1892, %v1891
      %v1907 = vpack.c.b16 %v1894, %v1893
      %v1908 = vpack.c.b16 %v1896, %v1895
      %v1909 = vpack.c.b16 %v1898, %v1897
      %v1910 = vpack.c.b16 %v1900, %v1899
      %v1911 = vpack.c.b16 %v1902, %v1901
      %v1912 = vpack.c.b16 %v1904, %v1903
      %1921 = vmatprep.subr.bf16.mxu0 0
      %1922 = vmatpush1.bf16.msra.mxu0 %v1905
      %1923 = vmatprep.subr.bf16.mxu0 0
      %1924 = vmatpush1.bf16.msra.mxu0 %v1906
      %1925 = vmatprep.subr.bf16.mxu0 0
      %1926 = vmatpush1.bf16.msra.mxu0 %v1907
      %1927 = vmatprep.subr.bf16.mxu0 0
      %1928 = vmatpush1.bf16.msra.mxu0 %v1908
      %1929 = vmatprep.subr.bf16.mxu0 0
      %1930 = vmatpush1.bf16.msra.mxu0 %v1909
      %1931 = vmatprep.subr.bf16.mxu0 0
      %1932 = vmatpush1.bf16.msra.mxu0 %v1910
      %1933 = vmatprep.subr.bf16.mxu0 0
      %1934 = vmatpush1.bf16.msra.mxu0 %v1911
      %1935 = vmatprep.subr.bf16.mxu0 0
      %1936 = vmatpush1.bf16.msra.mxu0 %v1912
      %1937 = vmatprep.subr.bf16.mxu0 0
      %1938 = vmatpush1.bf16.msra.mxu0 0
      %1939 = vmatprep.subr.bf16.mxu0 0
      %1940 = vmatpush1.bf16.msra.mxu0 0
      %1941 = vmatprep.subr.bf16.mxu0 0
      %1942 = vmatpush1.bf16.msra.mxu0 0
      %1943 = vmatprep.subr.bf16.mxu0 0
      %1944 = vmatpush1.bf16.msra.mxu0 0
      %1945 = vmatprep.subr.bf16.mxu0 0
      %1946 = vmatpush1.bf16.msra.mxu0 0
      %1947 = vmatprep.subr.bf16.mxu0 0
      %1948 = vmatpush1.bf16.msra.mxu0 0
      %1949 = vmatprep.subr.bf16.mxu0 0
      %1950 = vmatpush1.bf16.msra.mxu0 0
      %1951 = vmatprep.subr.bf16.mxu0 0
      %1952 = vmatpush1.bf16.msra.mxu0 0
      %1953 = vmatprep.mubr.bf16.mxu0 0
      %1954 = vmatmul.mubr.bf16.gmra.mrb[0].mxu0 %v1848
      %v1955 = vpop.f32.mrb[0].mxu0
      %v1956 = vadd.f32 0.0, %v1955
      %v1957 = vpop.f32.mrb[0].mxu0
      %v1958 = vpop.f32.mrb[0].mxu0
      %v1959 = vadd.f32 0.0, %v1958
      %v1960 = vpop.f32.mrb[0].mxu0
      %1961 = vmatprep.mubr.bf16.mxu0 0
      %1962 = vmatmul.mubr.bf16.gmra.mrb[0].mxu0 %v1849
      %v1963 = vpop.f32.mrb[0].mxu0
      %v1964 = vadd.f32 0.0, %v1963
      %v1965 = vpop.f32.mrb[0].mxu0
      %v1966 = vpop.f32.mrb[0].mxu0
      %v1967 = vadd.f32 0.0, %v1966
      %v1968 = vpop.f32.mrb[0].mxu0
      %1969 = vmatprep.mubr.bf16.mxu0 0
      %1970 = vmatmul.mubr.bf16.gmra.mrb[0].mxu0 %v1850
      %v1971 = vpop.f32.mrb[0].mxu0
      %v1972 = vadd.f32 0.0, %v1971
      %v1973 = vpop.f32.mrb[0].mxu0
      %v1974 = vpop.f32.mrb[0].mxu0
      %v1975 = vadd.f32 0.0, %v1974
      %v1976 = vpop.f32.mrb[0].mxu0
      %1977 = vmatprep.mubr.bf16.mxu0 0
      %1978 = vmatmul.mubr.bf16.gmra.mrb[0].mxu0 %v1851
      %v1979 = vpop.f32.mrb[0].mxu0
      %v1980 = vadd.f32 0.0, %v1979
      %v1981 = vpop.f32.mrb[0].mxu0
      %v1982 = vpop.f32.mrb[0].mxu0
      %v1983 = vadd.f32 0.0, %v1982
      %v1984 = vpop.f32.mrb[0].mxu0
      %1985 = vmatprep.mubr.bf16.mxu0 0
      %1986 = vmatmul.mubr.bf16.gmra.mrb[0].mxu0 %v1852
      %v1987 = vpop.f32.mrb[0].mxu0
      %v1988 = vadd.f32 0.0, %v1987
      %v1989 = vpop.f32.mrb[0].mxu0
      %v1990 = vpop.f32.mrb[0].mxu0
      %v1991 = vadd.f32 0.0, %v1990
      %v1992 = vpop.f32.mrb[0].mxu0
      %1993 = vmatprep.mubr.bf16.mxu0 0
      %1994 = vmatmul.mubr.bf16.gmra.mrb[0].mxu0 %v1853
      %v1995 = vpop.f32.mrb[0].mxu0
      %v1996 = vadd.f32 0.0, %v1995
      %v1997 = vpop.f32.mrb[0].mxu0
      %v1998 = vpop.f32.mrb[0].mxu0
      %v1999 = vadd.f32 0.0, %v1998
      %v2000 = vpop.f32.mrb[0].mxu0
      %2001 = vmatprep.mubr.bf16.mxu0 0
      %2002 = vmatmul.mubr.bf16.gmra.mrb[0].mxu0 %v1854
      %v2003 = vpop.f32.mrb[0].mxu0
      %v2004 = vadd.f32 0.0, %v2003
      %v2005 = vpop.f32.mrb[0].mxu0
      %v2006 = vpop.f32.mrb[0].mxu0
      %v2007 = vadd.f32 0.0, %v2006
      %v2008 = vpop.f32.mrb[0].mxu0
      %2009 = vmatprep.mubr.bf16.mxu0 0
      %2010 = vmatmul.mubr.bf16.gmra.mrb[0].mxu0 %v1855
      %v2011 = vpop.f32.mrb[0].mxu0
      %v2012 = vadd.f32 0.0, %v2011
      %v2013 = vpop.f32.mrb[0].mxu0
      %v2014 = vpop.f32.mrb[0].mxu0
      %v2015 = vadd.f32 0.0, %v2014
      %v2016 = vpop.f32.mrb[0].mxu0
      %2017 = vmatprep.mubr.bf16.mxu0 0
      %2018 = vmatmul.mubr.bf16.gmra.mrb[0].mxu0 %v1856
      %v2019 = vpop.f32.mrb[0].mxu0
      %v2020 = vadd.f32 0.0, %v2019
      %v2021 = vpop.f32.mrb[0].mxu0
      %v2022 = vpop.f32.mrb[0].mxu0
      %v2023 = vadd.f32 0.0, %v2022
      %v2024 = vpop.f32.mrb[0].mxu0
      %2025 = vdwg.mxu0
      %v2026 = vld [vmem:[%s3] sm:$0x1]
      %v2028 = vlaneseq
      %v2029 = vshrl.u32 %v2028, 7
      %v2030 = vsub.s32 0, %v2029
      %v2031 = vrot.slane %v2026, %v2030
      %v2033 = vmul.f32 %v1956, %v2031
      %v2034 = vmul.f32 %v1959, %v2031
      %v2035 = vmul.f32 %v1964, %v2031
      %v2036 = vmul.f32 %v1967, %v2031
      %v2037 = vmul.f32 %v1972, %v2031
      %v2038 = vmul.f32 %v1975, %v2031
      %v2039 = vmul.f32 %v1980, %v2031
      %v2040 = vmul.f32 %v1983, %v2031
      %v2041 = vmul.f32 %v1988, %v2031
      %v2042 = vmul.f32 %v1991, %v2031
      %v2043 = vmul.f32 %v1996, %v2031
      %v2044 = vmul.f32 %v1999, %v2031
      %v2045 = vmul.f32 %v2004, %v2031
      %v2046 = vmul.f32 %v2007, %v2031
      %v2047 = vmul.f32 %v2012, %v2031
      %v2048 = vmul.f32 %v2015, %v2031
      %v2049 = vmul.f32 %v2020, %v2031
      %v2050 = vmul.f32 %v2023, %v2031
      %v2051 = vld [vmem:[%s4] sm:$0x1]
      %v2053 = vlaneseq
      %v2054 = vshrl.u32 %v2053, 7
      %v2055 = vsub.s32 0, %v2054
      %v2056 = vrot.slane %v2051, %v2055
      %v2058 = vadd.f32 %v2033, %v2056
      %v2059 = vadd.f32 %v2034, %v2056
      %v2060 = vadd.f32 %v2035, %v2056
      %v2061 = vadd.f32 %v2036, %v2056
      %v2062 = vadd.f32 %v2037, %v2056
      %v2063 = vadd.f32 %v2038, %v2056
      %v2064 = vadd.f32 %v2039, %v2056
      %v2065 = vadd.f32 %v2040, %v2056
      %v2066 = vadd.f32 %v2041, %v2056
      %v2067 = vadd.f32 %v2042, %v2056
      %v2068 = vadd.f32 %v2043, %v2056
      %v2069 = vadd.f32 %v2044, %v2056
      %v2070 = vadd.f32 %v2045, %v2056
      %v2071 = vadd.f32 %v2046, %v2056
      %v2072 = vadd.f32 %v2047, %v2056
      %v2073 = vadd.f32 %v2048, %v2056
      %v2074 = vadd.f32 %v2049, %v2056
      %v2075 = vadd.f32 %v2050, %v2056
      %v2076 = vmax.f32 %v2058, 0.0
      %v2077 = vmax.f32 %v2059, 0.0
      %v2078 = vmax.f32 %v2060, 0.0
      %v2079 = vmax.f32 %v2061, 0.0
      %v2080 = vmax.f32 %v2062, 0.0
      %v2081 = vmax.f32 %v2063, 0.0
      %v2082 = vmax.f32 %v2064, 0.0
      %v2083 = vmax.f32 %v2065, 0.0
      %v2084 = vmax.f32 %v2066, 0.0
      %v2085 = vmax.f32 %v2067, 0.0
      %v2086 = vmax.f32 %v2068, 0.0
      %v2087 = vmax.f32 %v2069, 0.0
      %v2088 = vmax.f32 %v2070, 0.0
      %v2089 = vmax.f32 %v2071, 0.0
      %v2090 = vmax.f32 %v2072, 0.0
      %v2091 = vmax.f32 %v2073, 0.0
      %v2092 = vmax.f32 %v2074, 0.0
      %v2093 = vmax.f32 %v2075, 0.0
      %v2094 = vpack.c.bf16 %v2077, %v2076
      %v2095 = vpack.c.bf16 %v2079, %v2078
      %v2096 = vpack.c.bf16 %v2081, %v2080
      %v2097 = vpack.c.bf16 %v2083, %v2082
      %v2098 = vpack.c.bf16 %v2085, %v2084
      %v2099 = vpack.c.bf16 %v2087, %v2086
      %v2100 = vpack.c.bf16 %v2089, %v2088
      %v2101 = vpack.c.bf16 %v2091, %v2090
      %v2102 = vpack.c.bf16 %v2093, %v2092
      %v2103 = vld [vmem:[%s5] sm:$0xf]
      %v2104 = vld [vmem:[%s5 + $0x4] sm:$0xf]
      %v2105 = vld [vmem:[%s5 + $0x8] sm:$0xf]
      %v2106 = vld [vmem:[%s5 + $0xc] sm:$0xf]
      %v2107 = vld [vmem:[%s5 + $0x10] sm:$0xf]
      %v2108 = vld [vmem:[%s5 + $0x14] sm:$0xf]
      %v2109 = vld [vmem:[%s5 + $0x18] sm:$0xf]
      %v2110 = vld [vmem:[%s5 + $0x1c] sm:$0xf]
      %v2111 = vld [vmem:[%s5 + $0x20] sm:$0xf]
      %v2112 = vld [vmem:[%s5 + $0x24] sm:$0xf]
      %v2113 = vld [vmem:[%s5 + $0x28] sm:$0xf]
      %v2114 = vld [vmem:[%s5 + $0x2c] sm:$0xf]
      %v2115 = vld [vmem:[%s5 + $0x30] sm:$0xf]
      %v2116 = vld [vmem:[%s5 + $0x34] sm:$0xf]
      %v2117 = vld [vmem:[%s5 + $0x38] sm:$0xf]
      %v2118 = vld [vmem:[%s5 + $0x3c] sm:$0xf]
      %v2119 = vld [vmem:[%s6] sm:$0x1]
      %v2121 = vlaneseq
      %v2122 = vshrl.u32 %v2121, 7
      %v2123 = vsub.s32 0, %v2122
      %v2124 = vrot.slane %v2119, %v2123
      %v2142 = vunpack.c.l.b16 %v2103
      %v2143 = vunpack.c.l.b16 %v2104
      %v2144 = vunpack.c.l.b16 %v2105
      %v2145 = vunpack.c.l.b16 %v2106
      %v2146 = vunpack.c.l.b16 %v2107
      %v2147 = vunpack.c.l.b16 %v2108
      %v2148 = vunpack.c.l.b16 %v2109
      %v2149 = vunpack.c.l.b16 %v2110
      %v2150 = vunpack.c.l.b16 %v2111
      %v2151 = vunpack.c.l.b16 %v2112
      %v2152 = vunpack.c.l.b16 %v2113
      %v2153 = vunpack.c.l.b16 %v2114
      %v2154 = vunpack.c.l.b16 %v2115
      %v2155 = vunpack.c.l.b16 %v2116
      %v2156 = vunpack.c.l.b16 %v2117
      %v2157 = vunpack.c.l.b16 %v2118
      %v2158 = vpack.c.b16 %v2143, %v2142
      %v2159 = vpack.c.b16 %v2145, %v2144
      %v2160 = vpack.c.b16 %v2147, %v2146
      %v2161 = vpack.c.b16 %v2149, %v2148
      %v2162 = vpack.c.b16 %v2151, %v2150
      %v2163 = vpack.c.b16 %v2153, %v2152
      %v2164 = vpack.c.b16 %v2155, %v2154
      %v2165 = vpack.c.b16 %v2157, %v2156
      %2174 = vmatprep.subr.bf16.mxu0 0
      %2175 = vmatpush1.bf16.msra.mxu0 %v2158
      %2176 = vmatprep.subr.bf16.mxu0 0
      %2177 = vmatpush1.bf16.msra.mxu0 %v2159
      %2178 = vmatprep.subr.bf16.mxu0 0
      %2179 = vmatpush1.bf16.msra.mxu0 %v2160
      %2180 = vmatprep.subr.bf16.mxu0 0
      %2181 = vmatpush1.bf16.msra.mxu0 %v2161
      %2182 = vmatprep.subr.bf16.mxu0 0
      %2183 = vmatpush1.bf16.msra.mxu0 %v2162
      %2184 = vmatprep.subr.bf16.mxu0 0
      %2185 = vmatpush1.bf16.msra.mxu0 %v2163
      %2186 = vmatprep.subr.bf16.mxu0 0
      %2187 = vmatpush1.bf16.msra.mxu0 %v2164
      %2188 = vmatprep.subr.bf16.mxu0 0
      %2189 = vmatpush1.bf16.msra.mxu0 %v2165
      %2190 = vmatprep.subr.bf16.mxu0 0
      %2191 = vmatpush1.bf16.msra.mxu0 0
      %2192 = vmatprep.subr.bf16.mxu0 0
      %2193 = vmatpush1.bf16.msra.mxu0 0
      %2194 = vmatprep.subr.bf16.mxu0 0
      %2195 = vmatpush1.bf16.msra.mxu0 0
      %2196 = vmatprep.subr.bf16.mxu0 0
      %2197 = vmatpush1.bf16.msra.mxu0 0
      %2198 = vmatprep.subr.bf16.mxu0 0
      %2199 = vmatpush1.bf16.msra.mxu0 0
      %2200 = vmatprep.subr.bf16.mxu0 0
      %2201 = vmatpush1.bf16.msra.mxu0 0
      %2202 = vmatprep.subr.bf16.mxu0 0
      %2203 = vmatpush1.bf16.msra.mxu0 0
      %2204 = vmatprep.subr.bf16.mxu0 0
      %2205 = vmatpush1.bf16.msra.mxu0 0
      %2206 = vmatprep.mubr.bf16.mxu0 0
      %2207 = vmatmul.mubr.bf16.gmra.mrb[0].mxu0 %v2094
      %v2208 = vpop.f32.mrb[0].mxu0
      %v2209 = vadd.f32 %v2124, %v2208
      %v2210 = vpop.f32.mrb[0].mxu0
      %v2211 = vpop.f32.mrb[0].mxu0
      %v2212 = vadd.f32 %v2124, %v2211
      %v2213 = vpop.f32.mrb[0].mxu0
      %2214 = vmatprep.mubr.bf16.mxu0 0
      %2215 = vmatmul.mubr.bf16.gmra.mrb[0].mxu0 %v2095
      %v2216 = vpop.f32.mrb[0].mxu0
      %v2217 = vadd.f32 %v2124, %v2216
      %v2218 = vpop.f32.mrb[0].mxu0
      %v2219 = vpop.f32.mrb[0].mxu0
      %v2220 = vadd.f32 %v2124, %v2219
      %v2221 = vpop.f32.mrb[0].mxu0
      %2222 = vmatprep.mubr.bf16.mxu0 0
      %2223 = vmatmul.mubr.bf16.gmra.mrb[0].mxu0 %v2096
      %v2224 = vpop.f32.mrb[0].mxu0
      %v2225 = vadd.f32 %v2124, %v2224
      %v2226 = vpop.f32.mrb[0].mxu0
      %v2227 = vpop.f32.mrb[0].mxu0
      %v2228 = vadd.f32 %v2124, %v2227
      %v2229 = vpop.f32.mrb[0].mxu0
      %2230 = vmatprep.mubr.bf16.mxu0 0
      %2231 = vmatmul.mubr.bf16.gmra.mrb[0].mxu0 %v2097
      %v2232 = vpop.f32.mrb[0].mxu0
      %v2233 = vadd.f32 %v2124, %v2232
      %v2234 = vpop.f32.mrb[0].mxu0
      %v2235 = vpop.f32.mrb[0].mxu0
      %v2236 = vadd.f32 %v2124, %v2235
      %v2237 = vpop.f32.mrb[0].mxu0
      %2238 = vmatprep.mubr.bf16.mxu0 0
      %2239 = vmatmul.mubr.bf16.gmra.mrb[0].mxu0 %v2098
      %v2240 = vpop.f32.mrb[0].mxu0
      %v2241 = vadd.f32 %v2124, %v2240
      %v2242 = vpop.f32.mrb[0].mxu0
      %v2243 = vpop.f32.mrb[0].mxu0
      %v2244 = vadd.f32 %v2124, %v2243
      %v2245 = vpop.f32.mrb[0].mxu0
      %2246 = vmatprep.mubr.bf16.mxu0 0
      %2247 = vmatmul.mubr.bf16.gmra.mrb[0].mxu0 %v2099
      %v2248 = vpop.f32.mrb[0].mxu0
      %v2249 = vadd.f32 %v2124, %v2248
      %v2250 = vpop.f32.mrb[0].mxu0
      %v2251 = vpop.f32.mrb[0].mxu0
      %v2252 = vadd.f32 %v2124, %v2251
      %v2253 = vpop.f32.mrb[0].mxu0
      %2254 = vmatprep.mubr.bf16.mxu0 0
      %2255 = vmatmul.mubr.bf16.gmra.mrb[0].mxu0 %v2100
      %v2256 = vpop.f32.mrb[0].mxu0
      %v2257 = vadd.f32 %v2124, %v2256
      %v2258 = vpop.f32.mrb[0].mxu0
      %v2259 = vpop.f32.mrb[0].mxu0
      %v2260 = vadd.f32 %v2124, %v2259
      %v2261 = vpop.f32.mrb[0].mxu0
      %2262 = vmatprep.mubr.bf16.mxu0 0
      %2263 = vmatmul.mubr.bf16.gmra.mrb[0].mxu0 %v2101
      %v2264 = vpop.f32.mrb[0].mxu0
      %v2265 = vadd.f32 %v2124, %v2264
      %v2266 = vpop.f32.mrb[0].mxu0
      %v2267 = vpop.f32.mrb[0].mxu0
      %v2268 = vadd.f32 %v2124, %v2267
      %v2269 = vpop.f32.mrb[0].mxu0
      %2270 = vmatprep.mubr.bf16.mxu0 0
      %2271 = vmatmul.mubr.bf16.gmra.mrb[0].mxu0 %v2102
      %v2272 = vpop.f32.mrb[0].mxu0
      %v2273 = vadd.f32 %v2124, %v2272
      %v2274 = vpop.f32.mrb[0].mxu0
      %v2275 = vpop.f32.mrb[0].mxu0
      %v2276 = vadd.f32 %v2124, %v2275
      %v2277 = vpop.f32.mrb[0].mxu0
      %2278 = vdwg.mxu0
      %2279 = vst [vmem:[%s320] sm:$0xff] %v2209
      %2280 = vst [vmem:[%s320 + $0x8] sm:$0xff] %v2212
      %2281 = vst [vmem:[%s320 + $0x10] sm:$0xff] %v2217
      %2282 = vst [vmem:[%s320 + $0x18] sm:$0xff] %v2220
      %2283 = vst [vmem:[%s320 + $0x20] sm:$0xff] %v2225
      %2284 = vst [vmem:[%s320 + $0x28] sm:$0xff] %v2228
      %2285 = vst [vmem:[%s320 + $0x30] sm:$0xff] %v2233
      %2286 = vst [vmem:[%s320 + $0x38] sm:$0xff] %v2236
      %2287 = vst [vmem:[%s320 + $0x40] sm:$0xff] %v2241
      %2288 = vst [vmem:[%s320 + $0x48] sm:$0xff] %v2244
      %2289 = vst [vmem:[%s320 + $0x50] sm:$0xff] %v2249
      %2290 = vst [vmem:[%s320 + $0x58] sm:$0xff] %v2252
      %2291 = vst [vmem:[%s320 + $0x60] sm:$0xff] %v2257
      %2292 = vst [vmem:[%s320 + $0x68] sm:$0xff] %v2260
      %2293 = vst [vmem:[%s320 + $0x70] sm:$0xff] %v2265
      %2294 = vst [vmem:[%s320 + $0x78] sm:$0xff] %v2268
      %2295 = vst [vmem:[%s320 + $0x80] sm:$0xff] %v2273
      %2296 = vst [vmem:[%s320 + $0x88] sm:$0xff] %v2276
      %s2297 = smul.u32 18, %s23
      %p2298 = scmp.lt.s32.totalorder %s22, 1
      %s2299 = scalar_select %p2298, %s22, 1
      %p2300 = scmp.lt.s32.totalorder %s2297, 17
      %s2301 = scalar_select %p2300, %s2297, 17
      %s2302 = smul.addr %s2299, 18
      %s2303 = sadd.s32 %s2301, %s2302
      %s2304 = smul.addr %s2303, 8
      %s2305 = scalar_lea.vmem %s7, %s2304
      // Predicated region
      $region49: #{depthwise_xcorr_forward.5} parent=47 // pred_check
        %p2306 = pneg %p207
      $region50: #{depthwise_xcorr_forward.5} parent=47 // pred_check_branch
        %2308 = sbr.rel (%p2306) target = $region52
      $region51: #{depthwise_xcorr_forward.5} parent=47 // pred_region
        %s2309 = smul.u32 18, %s23
      $region52: #{depthwise_xcorr_forward.5} parent=47 // pred_fallthru
        _
    $region48: #{depthwise_xcorr_forward.5} parent=5 // pred_fallthru
      _
    %p2310 = scmp.le.s32.totalorder 2, %s13
    // Predicated region
    $region53: #{depthwise_xcorr_forward.5} parent=5 // pred_check
      %p2311 = pneg %p2310
    $region54: #{depthwise_xcorr_forward.5} parent=5 // pred_check_branch
      %2313 = sbr.rel (%p2311) target = $region56
    $region55: #{depthwise_xcorr_forward.5} parent=5 // pred_region
      %s2314 = ssub.s32 %s13, 2
      // Predicated region
      $region57: #{depthwise_xcorr_forward.5} parent=55 // pred_check
        %p2315 = pneg %p213
      $region58: #{depthwise_xcorr_forward.5} parent=55 // pred_check_branch
        %2317 = sbr.rel (%p2315) target = $region60
      $region59: #{depthwise_xcorr_forward.5} parent=55 // pred_region
        %s2318 = smul.u32 18, %s25
        %p2319 = scmp.lt.s32.totalorder %s24, 1
        %s2320 = scalar_select %p2319, %s24, 1
        %p2321 = scmp.lt.s32.totalorder %s2318, 17
        %s2322 = scalar_select %p2321, %s2318, 17
        %s2323 = smul.addr %s2320, 18
        %s2324 = sadd.s32 %s2322, %s2323
        %s2325 = smul.addr %s2324, 8
        %s2326 = scalar_lea.vmem %s7, %s2325
      $region60: #{depthwise_xcorr_forward.5} parent=55 // pred_fallthru
        _
    $region56: #{depthwise_xcorr_forward.5} parent=5 // pred_fallthru
      _
  $region6: #{depthwise_xcorr_forward.5} parent=0 // loop_footer
    %s17 = sadd.s32 1, %s13
  $region7: #{depthwise_xcorr_forward.5} parent=0 // loop_footer_branch
    %12 = sbr.rel target = $region3
  $region8: #{depthwise_xcorr_forward.5} parent=0 // loop_exit
    _

</llo_original>
